<compile_context>
chip_gen: v7x
topology: tpu7x:2x2x1
jax: 0.10.0
libtpu: 0.0.40
codegen_flags: <defaults>
</compile_context>

<pallas_src>
import functools

import jax
import jax.numpy as jnp
from jax.experimental import pallas as pl
from jax.experimental.pallas import tpu as pltpu

LEAK = 0.1
BN_EPS = 1e-5
EXPANSION = 4

# Sized so double-buffered tiles comfortably fit v7x's 64 MiB physical VMEM.
VMEM_LIMIT_BYTES = 32 * 1024 * 1024


# ----------------------------- in-kernel helpers --------------------------- #

def _leaky_relu(x):
    return jnp.where(x > 0, x, LEAK * x)


def _bn_scale_shift(stats, gamma, beta, count):
    """stats: (2, C) rows [sum, sum_sq] over the whole batch -> per-channel scale/shift."""
    inv_n = 1.0 / count
    mean = stats[0:1, :] * inv_n
    var = stats[1:2, :] * inv_n - mean * mean
    var = jnp.maximum(var, 0.0)                       # guard tiny negative from cancellation
    scale = gamma * jax.lax.rsqrt(var + BN_EPS)
    shift = beta - mean * scale
    return scale, shift


# ----------------------------- Pallas kernels ------------------------------ #

def _conv1_stats_kernel(x_ref, w1_ref, y1_ref, s1_ref):
    """Stage 1: 1x1 conv (matmul) + accumulate BN1 batch statistics."""
    @pl.when(pl.program_id(0) == 0)
    def _init():
        s1_ref[...] = jnp.zeros_like(s1_ref)

    y = jnp.dot(x_ref[...].astype(jnp.bfloat16), w1_ref[...],
                preferred_element_type=jnp.float32)
    y1_ref[...] = y
    s1_ref[...] += jnp.concatenate(
        [jnp.sum(y, axis=0, keepdims=True),
         jnp.sum(y * y, axis=0, keepdims=True)], axis=0)


def _conv3x3_stats_kernel(ymid_ref, yup_ref, ydn_ref, w2_ref, s1_ref, g1_ref,
                          b1_ref, y2_ref, s2_ref, *, H, W, TB, count):
    """Stage 2: BN1-apply + LeakyReLU + 3x3 conv (im2col built in VMEM) + BN2 stats."""
    b = pl.program_id(0)

    @pl.when(b == 0)
    def _init():
        s2_ref[...] = jnp.zeros_like(s2_ref)

    # Finalize BN1 from global batch stats, apply + LeakyReLU to the haloed window.
    scale1, shift1 = _bn_scale_shift(s1_ref[...], g1_ref[...], b1_ref[...], count)
    win = jnp.concatenate([yup_ref[...], ymid_ref[...], ydn_ref[...]], axis=0)  # (TB+2, W, P)
    a = win * scale1.reshape(1, 1, -1) + shift1.reshape(1, 1, -1)
    a = _leaky_relu(a)

    # Zero halo rows that fall outside the current image (conv2's zero padding).
    h0 = (b % (H // TB)) * TB
    ridx = jax.lax.broadcasted_iota(jnp.int32, (TB + 2, 1, 1), 0)
    valid = jnp.logical_and(jnp.logical_or(ridx != 0, h0 != 0),
                            jnp.logical_or(ridx != TB + 1, h0 != H - TB))
    a = jnp.where(valid, a, 0.0)

    # W-direction zero padding + 9-tap patch matrix, built entirely in VMEM/vregs.
    P = a.shape[-1]
    zc = jnp.zeros((TB + 2, 1, P), a.dtype)
    aw = jnp.concatenate([zc, a, zc], axis=1)                                   # (TB+2, W+2, P)
    taps = [aw[dh:dh + TB, dw:dw + W, :] for dh in range(3) for dw in range(3)]
    patches = jnp.concatenate(taps, axis=-1).reshape(TB * W, 9 * P)             # (TB*W, 9P)

    y2 = jnp.dot(patches.astype(jnp.bfloat16), w2_ref[...],
                 preferred_element_type=jnp.float32)                            # (TB*W, P)
    y2_ref[...] = y2
    s2_ref[...] += jnp.concatenate(
        [jnp.sum(y2, axis=0, keepdims=True),
         jnp.sum(y2 * y2, axis=0, keepdims=True)], axis=0)


def _conv3_bn_res_kernel(y2_ref, w3_ref, s2_ref, g2_ref, b2_ref, g3_ref, b3_ref,
                         x_ref, o_ref, s3_ref, *, count):
    """Stage 3: BN2-apply + LeakyReLU + 1x1 conv3, two-phase BN3, residual, LeakyReLU."""
    p = pl.program_id(0)      # phase 0: accumulate BN3 stats; phase 1: normalize + store
    i = pl.program_id(1)

    scale2, shift2 = _bn_scale_shift(s2_ref[...], g2_ref[...], b2_ref[...], count)
    a2 = _leaky_relu(y2_ref[...] * scale2 + shift2)
    y3 = jnp.dot(a2.astype(jnp.bfloat16), w3_ref[...],
                 preferred_element_type=jnp.float32)

    @pl.when(jnp.logical_and(p == 0, i == 0))
    def _init():
        s3_ref[...] = jnp.zeros_like(s3_ref)

    @pl.when(p == 0)
    def _phase0():
        s3_ref[...] += jnp.concatenate(
            [jnp.sum(y3, axis=0, keepdims=True),
             jnp.sum(y3 * y3, axis=0, keepdims=True)], axis=0)
        o_ref[...] = jnp.zeros_like(o_ref)      # placeholder; block is rewritten in phase 1

    @pl.when(p == 1)
    def _phase1():
        scale3, shift3 = _bn_scale_shift(s3_ref[...], g3_ref[...], b3_ref[...], count)
        z = y3 * scale3 + shift3 + x_ref[...]
        o_ref[...] = _leaky_relu(z)


# ----------------------------- pallas_call wrappers ------------------------ #

def _compiler_params(n_axes):
    # Accumulator blocks are revisited along these axes, so they must be "arbitrary".
    return pltpu.CompilerParams(
        dimension_semantics=("arbitrary",) * n_axes,
        vmem_limit_bytes=VMEM_LIMIT_BYTES)


def _pick_row_tile(n_rows, target, multiple=8):
    t = min(n_rows, max(multiple, target))
    for cand in range(t, 0, -1):
        if n_rows % cand == 0 and (cand % multiple == 0 or cand == n_rows):
            return cand
    return n_rows


def _pick_row_block(H, W, target_rows):
    tb = max(1, min(H, target_rows // max(W, 1)))
    while H % tb != 0:
        tb -= 1
    return tb


def _stage1(x2d, w1, row_tile):
    R, Cin = x2d.shape
    P = w1.shape[1]
    return pl.pallas_call(
        _conv1_stats_kernel,
        out_shape=(jax.ShapeDtypeStruct((R, P), jnp.float32),
                   jax.ShapeDtypeStruct((2, P), jnp.float32)),
        grid=(R // row_tile,),
        in_specs=[pl.BlockSpec((row_tile, Cin), lambda i: (i, 0)),
                  pl.BlockSpec((Cin, P), lambda i: (0, 0))],
        out_specs=(pl.BlockSpec((row_tile, P), lambda i: (i, 0)),
                   pl.BlockSpec((2, P), lambda i: (0, 0))),          # resident accumulator
        compiler_params=_compiler_params(1),
    )(x2d, w1)


def _stage2(y1_3d, w2, s1, g1, b1, H, W, TB):
    NH, _, P = y1_3d.shape
    R = NH * W
    kern = functools.partial(_conv3x3_stats_kernel, H=H, W=W, TB=TB, count=float(R))
    return pl.pallas_call(
        kern,
        out_shape=(jax.ShapeDtypeStruct((R, P), jnp.float32),
                   jax.ShapeDtypeStruct((2, P), jnp.float32)),
        grid=(NH // TB,),
        in_specs=[
            pl.BlockSpec((TB, W, P), lambda b: (b, 0, 0)),                                # rows of block
            pl.BlockSpec((1, W, P), lambda b: (jnp.maximum(b * TB - 1, 0), 0, 0)),        # halo row above
            pl.BlockSpec((1, W, P), lambda b: (jnp.minimum(b * TB + TB, NH - 1), 0, 0)),  # halo row below
            pl.BlockSpec((9 * P, P), lambda b: (0, 0)),   # w2
            pl.BlockSpec((2, P), lambda b: (0, 0)),       # BN1 stats (global)
            pl.BlockSpec((1, P), lambda b: (0, 0)),       # gamma1
            pl.BlockSpec((1, P), lambda b: (0, 0)),       # beta1
        ],
        out_specs=(pl.BlockSpec((TB * W, P), lambda b: (b, 0)),
                   pl.BlockSpec((2, P), lambda b: (0, 0))),          # resident accumulator
        compiler_params=_compiler_params(1),
    )(y1_3d, y1_3d, y1_3d, w2, s1, g1, b1)


def _stage3(y2, w3, s2, g2, b2, g3, b3, x2d, row_tile):
    R, P = y2.shape
    C4 = w3.shape[1]
    kern = functools.partial(_conv3_bn_res_kernel, count=float(R))
    return pl.pallas_call(
        kern,
        out_shape=jax.ShapeDtypeStruct((R, C4), jnp.float32),
        grid=(2, R // row_tile),                                      # (phase, row-tile)
        in_specs=[
            pl.BlockSpec((row_tile, P), lambda p, i: (i, 0)),         # y2 (both phases)
            pl.BlockSpec((P, C4), lambda p, i: (0, 0)),               # w3
            pl.BlockSpec((2, P), lambda p, i: (0, 0)),                # BN2 stats (global)
            pl.BlockSpec((1, P), lambda p, i: (0, 0)),                # gamma2
            pl.BlockSpec((1, P), lambda p, i: (0, 0)),                # beta2
            pl.BlockSpec((1, C4), lambda p, i: (0, 0)),               # gamma3
            pl.BlockSpec((1, C4), lambda p, i: (0, 0)),               # beta3
            pl.BlockSpec((row_tile, C4), lambda p, i: (p * i, 0)),    # identity (walks in phase 1 only)
        ],
        out_specs=pl.BlockSpec((row_tile, C4), lambda p, i: (p * i, 0)),
        scratch_shapes=[pltpu.VMEM((2, C4), jnp.float32)],            # BN3 sum / sum-sq
        compiler_params=_compiler_params(2),
    )(y2, w3, s2, g2, b2, g3, b3, x2d)


# ----------------------------- public forward ------------------------------ #

ROW_TILE_TARGET = 512        # rows per tile for the 1x1 stages (halved if R is small)
CONV2_ROWS_TARGET = 512      # ~pixels per block for the 3x3 stage


@jax.jit
def bottleneck_forward(x_nchw, params):
    """x_nchw: (N, C, H, W) f32, C == planes*4, stride=1, downsample=None."""
    N, Cin, H, W = x_nchw.shape
    P = Cin // EXPANSION
    R = N * H * W

    # NCHW -> NHWC (rows = pixels, lanes = channels).
    # TODO(synk): accept NHWC directly to drop these two edge transposes from the hot path.
    x = jnp.transpose(x_nchw, (0, 2, 3, 1)).astype(jnp.float32)
    x2d = x.reshape(R, Cin)

    t13 = _pick_row_tile(R, min(ROW_TILE_TARGET, max(8, R // 2)))     # prefer >= 2 tiles
    tb = _pick_row_block(H, W, CONV2_ROWS_TARGET)

    # stage 1: conv1 (1x1) + BN1 batch statistics
    y1, s1 = _stage1(x2d, params["w1"], t13)

    # stage 2: BN1-apply + LeakyReLU + conv2 (3x3) + BN2 batch statistics
    y1_3d = y1.reshape(N * H, W, P)
    y2, s2 = _stage2(y1_3d, params["w2"], s1, params["g1"], params["b1"], H, W, tb)

    # stage 3: BN2-apply + LeakyReLU + conv3 (1x1) + BN3 (two-phase) + residual + LeakyReLU
    out2d = _stage3(y2, params["w3"], s2, params["g2"], params["b2"],
                    params["g3"], params["b3"], x2d, t13)

    out = out2d.reshape(N, H, W, Cin)
    return jnp.transpose(out, (0, 3, 1, 2))


# ----------------------------- params & reference -------------------------- #

def init_bottleneck_params(key, inplanes, planes):
    """Deterministic synthetic init. Conv weights stored bf16 in matmul layout."""
    assert inplanes == planes * EXPANSION, "downsample=None requires inplanes == planes*4"
    k1, k2, k3, k4, k5 = jax.random.split(key, 5)
    # torch layouts: (Cout, Cin, kh, kw)
    w1_t = jax.random.normal(k1, (planes, inplanes, 1, 1), jnp.float32) * 0.1
    w2_t = jax.random.normal(k2, (planes, planes, 3, 3), jnp.float32) * 0.1
    w3_t = jax.random.normal(k3, (planes * EXPANSION, planes, 1, 1), jnp.float32) * 0.1
    w1 = jnp.transpose(w1_t[:, :, 0, 0], (1, 0)).astype(jnp.bfloat16)                         # (Cin, P)
    w2 = jnp.transpose(w2_t, (2, 3, 1, 0)).reshape(9 * planes, planes).astype(jnp.bfloat16)   # (9P, P)
    w3 = jnp.transpose(w3_t[:, :, 0, 0], (1, 0)).astype(jnp.bfloat16)                         # (P, 4P)
    g1 = 1.0 + 0.05 * jax.random.normal(k4, (1, planes), jnp.float32)
    b1 = 0.05 * jax.random.normal(k5, (1, planes), jnp.float32)
    g2 = jnp.ones((1, planes), jnp.float32)
    b2 = jnp.zeros((1, planes), jnp.float32)
    g3 = jnp.ones((1, planes * EXPANSION), jnp.float32)
    b3 = jnp.zeros((1, planes * EXPANSION), jnp.float32)
    return dict(w1=w1, w2=w2, w3=w3, g1=g1, b1=b1, g2=g2, b2=b2, g3=g3, b3=b3)


def _bn_lrelu_ref(y, gamma, beta):
    mean = jnp.mean(y, axis=0, keepdims=True)
    var = jnp.mean(jnp.square(y - mean), axis=0, keepdims=True)
    z = (y - mean) * jax.lax.rsqrt(var + BN_EPS) * gamma + beta
    return jnp.where(z > 0, z, LEAK * z)


def _reference_forward(x_nchw, params):
    """Plain-JAX reference (mirrors the kernels' bf16-matmul precision) for validation."""
    N, Cin, H, W = x_nchw.shape
    P = Cin // EXPANSION
    x = jnp.transpose(x_nchw, (0, 2, 3, 1)).astype(jnp.float32)
    x2d = x.reshape(N * H * W, Cin)

    y1 = jnp.dot(x2d.astype(jnp.bfloat16), params["w1"], preferred_element_type=jnp.float32)
    a1 = _bn_lrelu_ref(y1, params["g1"], params["b1"])

    a1_im = a1.reshape(N, H, W, P)
    a1_pad = jnp.pad(a1_im, ((0, 0), (1, 1), (1, 1), (0, 0)))
    cols = [a1_pad[:, kh:kh + H, kw:kw + W, :] for kh in range(3) for kw in range(3)]
    patches = jnp.concatenate(cols, axis=-1).reshape(N * H * W, 9 * P)
    y2 = jnp.dot(patches.astype(jnp.bfloat16), params["w2"], preferred_element_type=jnp.float32)
    a2 = _bn_lrelu_ref(y2, params["g2"], params["b2"])

    y3 = jnp.dot(a2.astype(jnp.bfloat16), params["w3"], preferred_element_type=jnp.float32)
    mean = jnp.mean(y3, axis=0, keepdims=True)
    var = jnp.mean(jnp.square(y3 - mean), axis=0, keepdims=True)
    z = (y3 - mean) * jax.lax.rsqrt(var + BN_EPS) * params["g3"] + params["b3"] + x2d
    out = jnp.where(z > 0, z, LEAK * z)
    return jnp.transpose(out.reshape(N, H, W, Cin), (0, 3, 1, 2))


if __name__ == "__main__":
    key = jax.random.PRNGKey(0)
    kx, kp = jax.random.split(key)

    inplanes, planes = 16, 4                 # inplanes == planes * expansion (identity residual)
    N, H, W = 2, 16, 16
    x = jax.random.normal(kx, (N, inplanes, H, W), jnp.float32)
    params = init_bottleneck_params(kp, inplanes, planes)

    y = bottleneck_forward(x, params)
    y = jax.block_until_ready(y)
    assert y.shape == (N, planes * EXPANSION, H, W)
    assert bool(jnp.all(jnp.isfinite(y)))

    y_ref = _reference_forward(x, params)
    max_err = float(jnp.max(jnp.abs(y - y_ref)))
    assert max_err < 2e-2, f"mismatch vs reference: max abs err = {max_err}"

    print("KERNEL_OK")
</pallas_src>

<mosaic_0001>
module attributes {stable_mosaic.version = 11 : i64} {
  func.func @_conv1_stats_kernel(%arg0: i32, %arg1: memref<256x16xf32, #tpu.memory_space<vmem>>, %arg2: memref<16x4xbf16, #tpu.memory_space<vmem>>, %arg3: memref<256x4xf32, #tpu.memory_space<vmem>>, %arg4: memref<2x4xf32, #tpu.memory_space<vmem>>) attributes {dimension_semantics = [#tpu.dimension_semantics<arbitrary>], iteration_bounds = array<i64: 2>, scalar_prefetch = 0 : i64, scratch_operands = 0 : i64, tpu.core_type = #tpu.core_type<tc>, window_params = [{transform_indices = @transform_0, window_bounds = array<i64: 256, 16>}, {pipeline_mode = #tpu.pipeline_mode<synchronous>, transform_indices = @transform_1, window_bounds = array<i64: 16, 4>}, {transform_indices = @transform_2, window_bounds = array<i64: 256, 4>}, {pipeline_mode = #tpu.pipeline_mode<synchronous>, transform_indices = @transform_3, window_bounds = array<i64: 2, 4>}]} {
    %c0_i32 = arith.constant 0 : i32
    %0 = arith.cmpi eq, %arg0, %c0_i32 : i32
    %1 = arith.extui %0 : i1 to i32
    %c0_i32_0 = arith.constant 0 : i32
    %2 = arith.cmpi ne, %1, %c0_i32_0 : i32
    scf.if %2 {
      %cst_12 = arith.constant 0.000000e+00 : f32
      %17 = vector.broadcast %cst_12 : f32 to vector<2x4xf32>
      %c0_13 = arith.constant 0 : index
      %c0_14 = arith.constant 0 : index
      %18 = vector.load %arg4[%c0_13, %c0_14] : memref<2x4xf32, #tpu.memory_space<vmem>>, vector<2x4xf32>
      tpu.vector_store %arg4[%c0_13, %c0_14], %17 {strides = array<i32>} : memref<2x4xf32, #tpu.memory_space<vmem>>, vector<2x4xf32>,
    } else {
    }
    %c0 = arith.constant 0 : index
    %c0_1 = arith.constant 0 : index
    %3 = vector.load %arg1[%c0, %c0_1] : memref<256x16xf32, #tpu.memory_space<vmem>>, vector<256x16xf32>
    %4 = arith.truncf %3 : vector<256x16xf32> to vector<256x16xbf16>
    %c0_2 = arith.constant 0 : index
    %c0_3 = arith.constant 0 : index
    %5 = vector.load %arg2[%c0_2, %c0_3] : memref<16x4xbf16, #tpu.memory_space<vmem>>, vector<16x4xbf16>
    %cst = arith.constant dense<0.000000e+00> : vector<256x4xf32>
    %6 = tpu.matmul %4, %5, %cst {dimension_numbers = #tpu.dot_dimension_numbers<[1], [0], [0], [1], [0, 0, 1, 1], [], []>} : vector<256x16xbf16>, vector<16x4xbf16>, vector<256x4xf32> -> vector<256x4xf32>
    %c0_4 = arith.constant 0 : index
    %c0_5 = arith.constant 0 : index
    %7 = vector.load %arg3[%c0_4, %c0_5] : memref<256x4xf32, #tpu.memory_space<vmem>>, vector<256x4xf32>
    tpu.vector_store %arg3[%c0_4, %c0_5], %6 {strides = array<i32>} : memref<256x4xf32, #tpu.memory_space<vmem>>, vector<256x4xf32>,
    %c0_6 = arith.constant 0 : index
    %c0_7 = arith.constant 0 : index
    %8 = vector.load %arg4[%c0_6, %c0_7] : memref<2x4xf32, #tpu.memory_space<vmem>>, vector<2x4xf32>
    %cst_8 = arith.constant dense<0.000000e+00> : vector<4xf32>
    %9 = vector.multi_reduction <add>, %6, %cst_8 [0] : vector<256x4xf32> to vector<4xf32>
    %10 = vector.shape_cast %9 : vector<4xf32> to vector<1x4xf32>
    %11 = arith.mulf %6, %6 : vector<256x4xf32>
    %cst_9 = arith.constant dense<0.000000e+00> : vector<4xf32>
    %12 = vector.multi_reduction <add>, %11, %cst_9 [0] : vector<256x4xf32> to vector<4xf32>
    %13 = vector.shape_cast %12 : vector<4xf32> to vector<1x4xf32>
    %14 = tpu.concatenate %10, %13 in 0 : vector<1x4xf32>, vector<1x4xf32> -> vector<2x4xf32>
    %15 = arith.addf %8, %14 : vector<2x4xf32>
    %c0_10 = arith.constant 0 : index
    %c0_11 = arith.constant 0 : index
    %16 = vector.load %arg4[%c0_10, %c0_11] : memref<2x4xf32, #tpu.memory_space<vmem>>, vector<2x4xf32>
    tpu.vector_store %arg4[%c0_10, %c0_11], %15 {strides = array<i32>} : memref<2x4xf32, #tpu.memory_space<vmem>>, vector<2x4xf32>,
    return
  }
  func.func @transform_0(%arg0: i32) -> (i32, i32) {
    %c0_i32 = arith.constant 0 : i32
    %c0_i32_0 = arith.constant 0 : i32
    return %arg0, %c0_i32 : i32, i32
  }
  func.func @transform_1(%arg0: i32) -> (i32, i32) {
    %c0_i32 = arith.constant 0 : i32
    %c0_i32_0 = arith.constant 0 : i32
    %c0_i32_1 = arith.constant 0 : i32
    return %c0_i32, %c0_i32_0 : i32, i32
  }
  func.func @transform_2(%arg0: i32) -> (i32, i32) {
    %c0_i32 = arith.constant 0 : i32
    %c0_i32_0 = arith.constant 0 : i32
    return %arg0, %c0_i32 : i32, i32
  }
  func.func @transform_3(%arg0: i32) -> (i32, i32) {
    %c0_i32 = arith.constant 0 : i32
    %c0_i32_0 = arith.constant 0 : i32
    %c0_i32_1 = arith.constant 0 : i32
    return %c0_i32, %c0_i32_0 : i32, i32
  }
}

module attributes {stable_mosaic.version = 11 : i64} {
  func.func @_conv3_bn_res_kernel(%arg0: i32, %arg1: i32, %arg2: memref<256x4xf32, #tpu.memory_space<vmem>>, %arg3: memref<4x16xbf16, #tpu.memory_space<vmem>>, %arg4: memref<2x4xf32, #tpu.memory_space<vmem>>, %arg5: memref<1x4xf32, #tpu.memory_space<vmem>>, %arg6: memref<1x4xf32, #tpu.memory_space<vmem>>, %arg7: memref<1x16xf32, #tpu.memory_space<vmem>>, %arg8: memref<1x16xf32, #tpu.memory_space<vmem>>, %arg9: memref<256x16xf32, #tpu.memory_space<vmem>>, %arg10: memref<256x16xf32, #tpu.memory_space<vmem>>, %arg11: memref<2x16xf32, #tpu.memory_space<vmem>>) attributes {dimension_semantics = [#tpu.dimension_semantics<arbitrary>, #tpu.dimension_semantics<arbitrary>], iteration_bounds = array<i64: 2, 2>, scalar_prefetch = 0 : i64, scratch_operands = 1 : i64, tpu.core_type = #tpu.core_type<tc>, window_params = [{transform_indices = @transform_0, window_bounds = array<i64: 256, 4>}, {pipeline_mode = #tpu.pipeline_mode<synchronous>, transform_indices = @transform_1, window_bounds = array<i64: 4, 16>}, {pipeline_mode = #tpu.pipeline_mode<synchronous>, transform_indices = @transform_2, window_bounds = array<i64: 2, 4>}, {pipeline_mode = #tpu.pipeline_mode<synchronous>, transform_indices = @transform_3, window_bounds = array<i64: 1, 4>}, {pipeline_mode = #tpu.pipeline_mode<synchronous>, transform_indices = @transform_4, window_bounds = array<i64: 1, 4>}, {pipeline_mode = #tpu.pipeline_mode<synchronous>, transform_indices = @transform_5, window_bounds = array<i64: 1, 16>}, {pipeline_mode = #tpu.pipeline_mode<synchronous>, transform_indices = @transform_6, window_bounds = array<i64: 1, 16>}, {transform_indices = @transform_7, window_bounds = array<i64: 256, 16>}, {transform_indices = @transform_8, window_bounds = array<i64: 256, 16>}]} {
    %c0 = arith.constant 0 : index
    %c0_0 = arith.constant 0 : index
    %0 = vector.load %arg4[%c0, %c0_0] : memref<2x4xf32, #tpu.memory_space<vmem>>, vector<2x4xf32>
    %c0_1 = arith.constant 0 : index
    %c0_2 = arith.constant 0 : index
    %1 = vector.load %arg5[%c0_1, %c0_2] : memref<1x4xf32, #tpu.memory_space<vmem>>, vector<1x4xf32>
    %c0_3 = arith.constant 0 : index
    %c0_4 = arith.constant 0 : index
    %2 = vector.load %arg6[%c0_3, %c0_4] : memref<1x4xf32, #tpu.memory_space<vmem>>, vector<1x4xf32>
    %3 = vector.extract_strided_slice %0 {offsets = [0, 0], sizes = [1, 4], strides = [1, 1]} : vector<2x4xf32> to vector<1x4xf32>
    %cst = arith.constant 0.001953125 : f32
    %4 = vector.broadcast %cst : f32 to vector<1x4xf32>
    %5 = arith.mulf %3, %4 : vector<1x4xf32>
    %6 = vector.extract_strided_slice %0 {offsets = [1, 0], sizes = [1, 4], strides = [1, 1]} : vector<2x4xf32> to vector<1x4xf32>
    %cst_5 = arith.constant 0.001953125 : f32
    %7 = vector.broadcast %cst_5 : f32 to vector<1x4xf32>
    %8 = arith.mulf %6, %7 : vector<1x4xf32>
    %9 = arith.mulf %5, %5 : vector<1x4xf32>
    %10 = arith.subf %8, %9 : vector<1x4xf32>
    %cst_6 = arith.constant 0.000000e+00 : f32
    %11 = vector.broadcast %cst_6 : f32 to vector<1x4xf32>
    %12 = arith.maximumf %10, %11 : vector<1x4xf32>
    %cst_7 = arith.constant 9.99999974E-6 : f32
    %13 = vector.broadcast %cst_7 : f32 to vector<1x4xf32>
    %14 = arith.addf %12, %13 : vector<1x4xf32>
    %15 = math.rsqrt %14 : vector<1x4xf32>
    %16 = arith.mulf %1, %15 : vector<1x4xf32>
    %17 = arith.mulf %5, %16 : vector<1x4xf32>
    %18 = arith.subf %2, %17 : vector<1x4xf32>
    %c0_8 = arith.constant 0 : index
    %c0_9 = arith.constant 0 : index
    %19 = vector.load %arg2[%c0_8, %c0_9] : memref<256x4xf32, #tpu.memory_space<vmem>>, vector<256x4xf32>
    %20 = vector.broadcast %16 : vector<1x4xf32> to vector<256x4xf32>
    %21 = arith.mulf %19, %20 : vector<256x4xf32>
    %22 = vector.broadcast %18 : vector<1x4xf32> to vector<256x4xf32>
    %23 = arith.addf %21, %22 : vector<256x4xf32>
    %cst_10 = arith.constant 0.000000e+00 : f32
    %24 = vector.broadcast %cst_10 : f32 to vector<256x4xf32>
    %25 = arith.cmpf ogt, %23, %24 : vector<256x4xf32>
    %cst_11 = arith.constant 1.000000e-01 : f32
    %26 = vector.broadcast %cst_11 : f32 to vector<256x4xf32>
    %27 = arith.mulf %26, %23 : vector<256x4xf32>
    %28 = arith.select %25, %23, %27 : vector<256x4xi1>, vector<256x4xf32>
    %29 = arith.truncf %28 : vector<256x4xf32> to vector<256x4xbf16>
    %c0_12 = arith.constant 0 : index
    %c0_13 = arith.constant 0 : index
    %30 = vector.load %arg3[%c0_12, %c0_13] : memref<4x16xbf16, #tpu.memory_space<vmem>>, vector<4x16xbf16>
    %cst_14 = arith.constant dense<0.000000e+00> : vector<256x16xf32>
    %31 = tpu.matmul %29, %30, %cst_14 {dimension_numbers = #tpu.dot_dimension_numbers<[1], [0], [0], [1], [0, 0, 1, 1], [], []>} : vector<256x4xbf16>, vector<4x16xbf16>, vector<256x16xf32> -> vector<256x16xf32>
    %c0_i32 = arith.constant 0 : i32
    %32 = arith.cmpi eq, %arg0, %c0_i32 : i32
    %c0_i32_15 = arith.constant 0 : i32
    %33 = arith.cmpi eq, %arg1, %c0_i32_15 : i32
    %34 = arith.andi %32, %33 : i1
    %35 = arith.extui %34 : i1 to i32
    %c0_i32_16 = arith.constant 0 : i32
    %36 = arith.cmpi ne, %35, %c0_i32_16 : i32
    scf.if %36 {
      %cst_20 = arith.constant 0.000000e+00 : f32
      %43 = vector.broadcast %cst_20 : f32 to vector<2x16xf32>
      %c0_21 = arith.constant 0 : index
      %c0_22 = arith.constant 0 : index
      %44 = vector.load %arg11[%c0_21, %c0_22] : memref<2x16xf32, #tpu.memory_space<vmem>>, vector<2x16xf32>
      tpu.vector_store %arg11[%c0_21, %c0_22], %43 {strides = array<i32>} : memref<2x16xf32, #tpu.memory_space<vmem>>, vector<2x16xf32>,
    } else {
    }
    %c0_i32_17 = arith.constant 0 : i32
    %37 = arith.cmpi eq, %arg0, %c0_i32_17 : i32
    %38 = arith.extui %37 : i1 to i32
    %c0_i32_18 = arith.constant 0 : i32
    %39 = arith.cmpi ne, %38, %c0_i32_18 : i32
    scf.if %39 {
      %c0_20 = arith.constant 0 : index
      %c0_21 = arith.constant 0 : index
      %43 = vector.load %arg11[%c0_20, %c0_21] : memref<2x16xf32, #tpu.memory_space<vmem>>, vector<2x16xf32>
      %cst_22 = arith.constant dense<0.000000e+00> : vector<16xf32>
      %44 = vector.multi_reduction <add>, %31, %cst_22 [0] : vector<256x16xf32> to vector<16xf32>
      %45 = vector.shape_cast %44 : vector<16xf32> to vector<1x16xf32>
      %46 = arith.mulf %31, %31 : vector<256x16xf32>
      %cst_23 = arith.constant dense<0.000000e+00> : vector<16xf32>
      %47 = vector.multi_reduction <add>, %46, %cst_23 [0] : vector<256x16xf32> to vector<16xf32>
      %48 = vector.shape_cast %47 : vector<16xf32> to vector<1x16xf32>
      %49 = tpu.concatenate %45, %48 in 0 : vector<1x16xf32>, vector<1x16xf32> -> vector<2x16xf32>
      %50 = arith.addf %43, %49 : vector<2x16xf32>
      %c0_24 = arith.constant 0 : index
      %c0_25 = arith.constant 0 : index
      %51 = vector.load %arg11[%c0_24, %c0_25] : memref<2x16xf32, #tpu.memory_space<vmem>>, vector<2x16xf32>
      tpu.vector_store %arg11[%c0_24, %c0_25], %50 {strides = array<i32>} : memref<2x16xf32, #tpu.memory_space<vmem>>, vector<2x16xf32>,
      %cst_26 = arith.constant 0.000000e+00 : f32
      %52 = vector.broadcast %cst_26 : f32 to vector<256x16xf32>
      %c0_27 = arith.constant 0 : index
      %c0_28 = arith.constant 0 : index
      %53 = vector.load %arg10[%c0_27, %c0_28] : memref<256x16xf32, #tpu.memory_space<vmem>>, vector<256x16xf32>
      tpu.vector_store %arg10[%c0_27, %c0_28], %52 {strides = array<i32>} : memref<256x16xf32, #tpu.memory_space<vmem>>, vector<256x16xf32>,
    } else {
    }
    %c1_i32 = arith.constant 1 : i32
    %40 = arith.cmpi eq, %arg0, %c1_i32 : i32
    %41 = arith.extui %40 : i1 to i32
    %c0_i32_19 = arith.constant 0 : i32
    %42 = arith.cmpi ne, %41, %c0_i32_19 : i32
    scf.if %42 {
      %c0_20 = arith.constant 0 : index
      %c0_21 = arith.constant 0 : index
      %43 = vector.load %arg11[%c0_20, %c0_21] : memref<2x16xf32, #tpu.memory_space<vmem>>, vector<2x16xf32>
      %c0_22 = arith.constant 0 : index
      %c0_23 = arith.constant 0 : index
      %44 = vector.load %arg7[%c0_22, %c0_23] : memref<1x16xf32, #tpu.memory_space<vmem>>, vector<1x16xf32>
      %c0_24 = arith.constant 0 : index
      %c0_25 = arith.constant 0 : index
      %45 = vector.load %arg8[%c0_24, %c0_25] : memref<1x16xf32, #tpu.memory_space<vmem>>, vector<1x16xf32>
      %46 = vector.extract_strided_slice %43 {offsets = [0, 0], sizes = [1, 16], strides = [1, 1]} : vector<2x16xf32> to vector<1x16xf32>
      %cst_26 = arith.constant 0.001953125 : f32
      %47 = vector.broadcast %cst_26 : f32 to vector<1x16xf32>
      %48 = arith.mulf %46, %47 : vector<1x16xf32>
      %49 = vector.extract_strided_slice %43 {offsets = [1, 0], sizes = [1, 16], strides = [1, 1]} : vector<2x16xf32> to vector<1x16xf32>
      %cst_27 = arith.constant 0.001953125 : f32
      %50 = vector.broadcast %cst_27 : f32 to vector<1x16xf32>
      %51 = arith.mulf %49, %50 : vector<1x16xf32>
      %52 = arith.mulf %48, %48 : vector<1x16xf32>
      %53 = arith.subf %51, %52 : vector<1x16xf32>
      %cst_28 = arith.constant 0.000000e+00 : f32
      %54 = vector.broadcast %cst_28 : f32 to vector<1x16xf32>
      %55 = arith.maximumf %53, %54 : vector<1x16xf32>
      %cst_29 = arith.constant 9.99999974E-6 : f32
      %56 = vector.broadcast %cst_29 : f32 to vector<1x16xf32>
      %57 = arith.addf %55, %56 : vector<1x16xf32>
      %58 = math.rsqrt %57 : vector<1x16xf32>
      %59 = arith.mulf %44, %58 : vector<1x16xf32>
      %60 = arith.mulf %48, %59 : vector<1x16xf32>
      %61 = arith.subf %45, %60 : vector<1x16xf32>
      %62 = vector.broadcast %59 : vector<1x16xf32> to vector<256x16xf32>
      %63 = arith.mulf %31, %62 : vector<256x16xf32>
      %64 = vector.broadcast %61 : vector<1x16xf32> to vector<256x16xf32>
      %65 = arith.addf %63, %64 : vector<256x16xf32>
      %c0_30 = arith.constant 0 : index
      %c0_31 = arith.constant 0 : index
      %66 = vector.load %arg9[%c0_30, %c0_31] : memref<256x16xf32, #tpu.memory_space<vmem>>, vector<256x16xf32>
      %67 = arith.addf %65, %66 : vector<256x16xf32>
      %cst_32 = arith.constant 0.000000e+00 : f32
      %68 = vector.broadcast %cst_32 : f32 to vector<256x16xf32>
      %69 = arith.cmpf ogt, %67, %68 : vector<256x16xf32>
      %cst_33 = arith.constant 1.000000e-01 : f32
      %70 = vector.broadcast %cst_33 : f32 to vector<256x16xf32>
      %71 = arith.mulf %70, %67 : vector<256x16xf32>
      %72 = arith.select %69, %67, %71 : vector<256x16xi1>, vector<256x16xf32>
      %c0_34 = arith.constant 0 : index
      %c0_35 = arith.constant 0 : index
      %73 = vector.load %arg10[%c0_34, %c0_35] : memref<256x16xf32, #tpu.memory_space<vmem>>, vector<256x16xf32>
      tpu.vector_store %arg10[%c0_34, %c0_35], %72 {strides = array<i32>} : memref<256x16xf32, #tpu.memory_space<vmem>>, vector<256x16xf32>,
    } else {
    }
    return
  }
  func.func @transform_0(%arg0: i32, %arg1: i32) -> (i32, i32) {
    %c0_i32 = arith.constant 0 : i32
    %c0_i32_0 = arith.constant 0 : i32
    return %arg1, %c0_i32 : i32, i32
  }
  func.func @transform_1(%arg0: i32, %arg1: i32) -> (i32, i32) {
    %c0_i32 = arith.constant 0 : i32
    %c0_i32_0 = arith.constant 0 : i32
    %c0_i32_1 = arith.constant 0 : i32
    return %c0_i32, %c0_i32_0 : i32, i32
  }
  func.func @transform_2(%arg0: i32, %arg1: i32) -> (i32, i32) {
    %c0_i32 = arith.constant 0 : i32
    %c0_i32_0 = arith.constant 0 : i32
    %c0_i32_1 = arith.constant 0 : i32
    return %c0_i32, %c0_i32_0 : i32, i32
  }
  func.func @transform_3(%arg0: i32, %arg1: i32) -> (i32, i32) {
    %c0_i32 = arith.constant 0 : i32
    %c0_i32_0 = arith.constant 0 : i32
    %c0_i32_1 = arith.constant 0 : i32
    return %c0_i32, %c0_i32_0 : i32, i32
  }
  func.func @transform_4(%arg0: i32, %arg1: i32) -> (i32, i32) {
    %c0_i32 = arith.constant 0 : i32
    %c0_i32_0 = arith.constant 0 : i32
    %c0_i32_1 = arith.constant 0 : i32
    return %c0_i32, %c0_i32_0 : i32, i32
  }
  func.func @transform_5(%arg0: i32, %arg1: i32) -> (i32, i32) {
    %c0_i32 = arith.constant 0 : i32
    %c0_i32_0 = arith.constant 0 : i32
    %c0_i32_1 = arith.constant 0 : i32
    return %c0_i32, %c0_i32_0 : i32, i32
  }
  func.func @transform_6(%arg0: i32, %arg1: i32) -> (i32, i32) {
    %c0_i32 = arith.constant 0 : i32
    %c0_i32_0 = arith.constant 0 : i32
    %c0_i32_1 = arith.constant 0 : i32
    return %c0_i32, %c0_i32_0 : i32, i32
  }
  func.func @transform_7(%arg0: i32, %arg1: i32) -> (i32, i32) {
    %0 = arith.muli %arg0, %arg1 : i32
    %c0_i32 = arith.constant 0 : i32
    %c0_i32_0 = arith.constant 0 : i32
    return %0, %c0_i32 : i32, i32
  }
  func.func @transform_8(%arg0: i32, %arg1: i32) -> (i32, i32) {
    %0 = arith.muli %arg0, %arg1 : i32
    %c0_i32 = arith.constant 0 : i32
    %c0_i32_0 = arith.constant 0 : i32
    return %0, %c0_i32 : i32, i32
  }
}

module attributes {stable_mosaic.version = 11 : i64} {
  func.func @_conv3x3_stats_kernel(%arg0: i32, %arg1: memref<16x16x4xf32, #tpu.memory_space<vmem>>, %arg2: memref<1x16x4xf32, #tpu.memory_space<vmem>>, %arg3: memref<1x16x4xf32, #tpu.memory_space<vmem>>, %arg4: memref<36x4xbf16, #tpu.memory_space<vmem>>, %arg5: memref<2x4xf32, #tpu.memory_space<vmem>>, %arg6: memref<1x4xf32, #tpu.memory_space<vmem>>, %arg7: memref<1x4xf32, #tpu.memory_space<vmem>>, %arg8: memref<256x4xf32, #tpu.memory_space<vmem>>, %arg9: memref<2x4xf32, #tpu.memory_space<vmem>>) attributes {dimension_semantics = [#tpu.dimension_semantics<arbitrary>], iteration_bounds = array<i64: 2>, scalar_prefetch = 0 : i64, scratch_operands = 0 : i64, tpu.core_type = #tpu.core_type<tc>, window_params = [{transform_indices = @transform_0, window_bounds = array<i64: 16, 16, 4>}, {transform_indices = @transform_1, window_bounds = array<i64: 1, 16, 4>}, {transform_indices = @transform_2, window_bounds = array<i64: 1, 16, 4>}, {pipeline_mode = #tpu.pipeline_mode<synchronous>, transform_indices = @transform_3, window_bounds = array<i64: 36, 4>}, {pipeline_mode = #tpu.pipeline_mode<synchronous>, transform_indices = @transform_4, window_bounds = array<i64: 2, 4>}, {pipeline_mode = #tpu.pipeline_mode<synchronous>, transform_indices = @transform_5, window_bounds = array<i64: 1, 4>}, {pipeline_mode = #tpu.pipeline_mode<synchronous>, transform_indices = @transform_6, window_bounds = array<i64: 1, 4>}, {transform_indices = @transform_7, window_bounds = array<i64: 256, 4>}, {pipeline_mode = #tpu.pipeline_mode<synchronous>, transform_indices = @transform_8, window_bounds = array<i64: 2, 4>}]} {
    %c0_i32 = arith.constant 0 : i32
    %0 = arith.cmpi eq, %arg0, %c0_i32 : i32
    %1 = arith.extui %0 : i1 to i32
    %c0_i32_0 = arith.constant 0 : i32
    %2 = arith.cmpi ne, %1, %c0_i32_0 : i32
    scf.if %2 {
      %cst_41 = arith.constant 0.000000e+00 : f32
      %90 = vector.broadcast %cst_41 : f32 to vector<2x4xf32>
      %c0_42 = arith.constant 0 : index
      %c0_43 = arith.constant 0 : index
      %91 = vector.load %arg9[%c0_42, %c0_43] : memref<2x4xf32, #tpu.memory_space<vmem>>, vector<2x4xf32>
      tpu.vector_store %arg9[%c0_42, %c0_43], %90 {strides = array<i32>} : memref<2x4xf32, #tpu.memory_space<vmem>>, vector<2x4xf32>,
    } else {
    }
    %c0 = arith.constant 0 : index
    %c0_1 = arith.constant 0 : index
    %3 = vector.load %arg5[%c0, %c0_1] : memref<2x4xf32, #tpu.memory_space<vmem>>, vector<2x4xf32>
    %c0_2 = arith.constant 0 : index
    %c0_3 = arith.constant 0 : index
    %4 = vector.load %arg6[%c0_2, %c0_3] : memref<1x4xf32, #tpu.memory_space<vmem>>, vector<1x4xf32>
    %c0_4 = arith.constant 0 : index
    %c0_5 = arith.constant 0 : index
    %5 = vector.load %arg7[%c0_4, %c0_5] : memref<1x4xf32, #tpu.memory_space<vmem>>, vector<1x4xf32>
    %6 = vector.extract_strided_slice %3 {offsets = [0, 0], sizes = [1, 4], strides = [1, 1]} : vector<2x4xf32> to vector<1x4xf32>
    %cst = arith.constant 0.001953125 : f32
    %7 = vector.broadcast %cst : f32 to vector<1x4xf32>
    %8 = arith.mulf %6, %7 : vector<1x4xf32>
    %9 = vector.extract_strided_slice %3 {offsets = [1, 0], sizes = [1, 4], strides = [1, 1]} : vector<2x4xf32> to vector<1x4xf32>
    %cst_6 = arith.constant 0.001953125 : f32
    %10 = vector.broadcast %cst_6 : f32 to vector<1x4xf32>
    %11 = arith.mulf %9, %10 : vector<1x4xf32>
    %12 = arith.mulf %8, %8 : vector<1x4xf32>
    %13 = arith.subf %11, %12 : vector<1x4xf32>
    %cst_7 = arith.constant 0.000000e+00 : f32
    %14 = vector.broadcast %cst_7 : f32 to vector<1x4xf32>
    %15 = arith.maximumf %13, %14 : vector<1x4xf32>
    %cst_8 = arith.constant 9.99999974E-6 : f32
    %16 = vector.broadcast %cst_8 : f32 to vector<1x4xf32>
    %17 = arith.addf %15, %16 : vector<1x4xf32>
    %18 = math.rsqrt %17 : vector<1x4xf32>
    %19 = arith.mulf %4, %18 : vector<1x4xf32>
    %20 = arith.mulf %8, %19 : vector<1x4xf32>
    %21 = arith.subf %5, %20 : vector<1x4xf32>
    %c0_9 = arith.constant 0 : index
    %c0_10 = arith.constant 0 : index
    %c0_11 = arith.constant 0 : index
    %22 = vector.load %arg2[%c0_9, %c0_10, %c0_11] : memref<1x16x4xf32, #tpu.memory_space<vmem>>, vector<1x16x4xf32>
    %c0_12 = arith.constant 0 : index
    %c0_13 = arith.constant 0 : index
    %c0_14 = arith.constant 0 : index
    %23 = vector.load %arg1[%c0_12, %c0_13, %c0_14] : memref<16x16x4xf32, #tpu.memory_space<vmem>>, vector<16x16x4xf32>
    %c0_15 = arith.constant 0 : index
    %c0_16 = arith.constant 0 : index
    %c0_17 = arith.constant 0 : index
    %24 = vector.load %arg3[%c0_15, %c0_16, %c0_17] : memref<1x16x4xf32, #tpu.memory_space<vmem>>, vector<1x16x4xf32>
    %25 = tpu.concatenate %22, %23, %24 in 0 : vector<1x16x4xf32>, vector<16x16x4xf32>, vector<1x16x4xf32> -> vector<18x16x4xf32>
    %26 = vector.shape_cast %19 : vector<1x4xf32> to vector<1x1x4xf32>
    %27 = vector.broadcast %26 : vector<1x1x4xf32> to vector<18x16x4xf32>
    %28 = arith.mulf %25, %27 : vector<18x16x4xf32>
    %29 = vector.shape_cast %21 : vector<1x4xf32> to vector<1x1x4xf32>
    %30 = vector.broadcast %29 : vector<1x1x4xf32> to vector<18x16x4xf32>
    %31 = arith.addf %28, %30 : vector<18x16x4xf32>
    %cst_18 = arith.constant 0.000000e+00 : f32
    %32 = vector.broadcast %cst_18 : f32 to vector<18x16x4xf32>
    %33 = arith.cmpf ogt, %31, %32 : vector<18x16x4xf32>
    %cst_19 = arith.constant 1.000000e-01 : f32
    %34 = vector.broadcast %cst_19 : f32 to vector<18x16x4xf32>
    %35 = arith.mulf %34, %31 : vector<18x16x4xf32>
    %36 = arith.select %33, %31, %35 : vector<18x16x4xi1>, vector<18x16x4xf32>
    %c1_i32 = arith.constant 1 : i32
    %c0_i32_20 = arith.constant 0 : i32
    %37 = arith.cmpi eq, %c1_i32, %c0_i32_20 : i32
    %c1_i32_21 = arith.constant 1 : i32
    %38 = arith.select %37, %c1_i32_21, %c1_i32 : i32
    %39 = arith.remsi %arg0, %38 : i32
    %c0_i32_22 = arith.constant 0 : i32
    %40 = arith.cmpi ne, %39, %c0_i32_22 : i32
    %c0_i32_23 = arith.constant 0 : i32
    %41 = arith.cmpi slt, %39, %c0_i32_23 : i32
    %c0_i32_24 = arith.constant 0 : i32
    %42 = arith.cmpi slt, %38, %c0_i32_24 : i32
    %43 = arith.xori %41, %42 : i1
    %44 = arith.andi %43, %40 : i1
    %45 = arith.addi %39, %38 : i32
    %46 = arith.select %44, %45, %39 : i32
    %c16_i32 = arith.constant 16 : i32
    %47 = arith.muli %46, %c16_i32 : i32
    %48 = tpu.iota {dimensions = array<i32: 0>} : vector<18x1x1xi32>
    %c0_i32_25 = arith.constant 0 : i32
    %49 = vector.broadcast %c0_i32_25 : i32 to vector<18x1x1xi32>
    %50 = arith.cmpi ne, %48, %49 : vector<18x1x1xi32>
    %c0_i32_26 = arith.constant 0 : i32
    %51 = arith.cmpi ne, %47, %c0_i32_26 : i32
    %52 = vector.broadcast %51 : i1 to vector<18x1x1xi1>
    %53 = arith.ori %50, %52 : vector<18x1x1xi1>
    %c17_i32 = arith.constant 17 : i32
    %54 = vector.broadcast %c17_i32 : i32 to vector<18x1x1xi32>
    %55 = arith.cmpi ne, %48, %54 : vector<18x1x1xi32>
    %c0_i32_27 = arith.constant 0 : i32
    %56 = arith.cmpi ne, %47, %c0_i32_27 : i32
    %57 = vector.broadcast %56 : i1 to vector<18x1x1xi1>
    %58 = arith.ori %55, %57 : vector<18x1x1xi1>
    %59 = arith.andi %53, %58 : vector<18x1x1xi1>
    %cst_28 = arith.constant 0.000000e+00 : f32
    %60 = vector.shape_cast %59 : vector<18x1x1xi1> to vector<18x1x1xi1>
    %61 = vector.broadcast %60 : vector<18x1x1xi1> to vector<18x16x4xi1>
    %62 = vector.broadcast %cst_28 : f32 to vector<18x16x4xf32>
    %63 = arith.select %61, %36, %62 : vector<18x16x4xi1>, vector<18x16x4xf32>
    %cst_29 = arith.constant 0.000000e+00 : f32
    %64 = vector.broadcast %cst_29 : f32 to vector<18x1x4xf32>
    %65 = tpu.concatenate %64, %63, %64 in 1 : vector<18x1x4xf32>, vector<18x16x4xf32>, vector<18x1x4xf32> -> vector<18x18x4xf32>
    %66 = vector.extract_strided_slice %65 {offsets = [0, 0, 0], sizes = [16, 16, 4], strides = [1, 1, 1]} : vector<18x18x4xf32> to vector<16x16x4xf32>
    %67 = vector.extract_strided_slice %65 {offsets = [0, 1, 0], sizes = [16, 16, 4], strides = [1, 1, 1]} : vector<18x18x4xf32> to vector<16x16x4xf32>
    %68 = vector.extract_strided_slice %65 {offsets = [0, 2, 0], sizes = [16, 16, 4], strides = [1, 1, 1]} : vector<18x18x4xf32> to vector<16x16x4xf32>
    %69 = vector.extract_strided_slice %65 {offsets = [1, 0, 0], sizes = [16, 16, 4], strides = [1, 1, 1]} : vector<18x18x4xf32> to vector<16x16x4xf32>
    %70 = vector.extract_strided_slice %65 {offsets = [1, 1, 0], sizes = [16, 16, 4], strides = [1, 1, 1]} : vector<18x18x4xf32> to vector<16x16x4xf32>
    %71 = vector.extract_strided_slice %65 {offsets = [1, 2, 0], sizes = [16, 16, 4], strides = [1, 1, 1]} : vector<18x18x4xf32> to vector<16x16x4xf32>
    %72 = vector.extract_strided_slice %65 {offsets = [2, 0, 0], sizes = [16, 16, 4], strides = [1, 1, 1]} : vector<18x18x4xf32> to vector<16x16x4xf32>
    %73 = vector.extract_strided_slice %65 {offsets = [2, 1, 0], sizes = [16, 16, 4], strides = [1, 1, 1]} : vector<18x18x4xf32> to vector<16x16x4xf32>
    %74 = vector.extract_strided_slice %65 {offsets = [2, 2, 0], sizes = [16, 16, 4], strides = [1, 1, 1]} : vector<18x18x4xf32> to vector<16x16x4xf32>
    %75 = tpu.concatenate %66, %67, %68, %69, %70, %71, %72, %73, %74 in 2 : vector<16x16x4xf32>, vector<16x16x4xf32>, vector<16x16x4xf32>, vector<16x16x4xf32>, vector<16x16x4xf32>, vector<16x16x4xf32>, vector<16x16x4xf32>, vector<16x16x4xf32>, vector<16x16x4xf32> -> vector<16x16x36xf32>
    %76 = vector.shape_cast %75 : vector<16x16x36xf32> to vector<256x36xf32>
    %77 = arith.truncf %76 : vector<256x36xf32> to vector<256x36xbf16>
    %c0_30 = arith.constant 0 : index
    %c0_31 = arith.constant 0 : index
    %78 = vector.load %arg4[%c0_30, %c0_31] : memref<36x4xbf16, #tpu.memory_space<vmem>>, vector<36x4xbf16>
    %cst_32 = arith.constant dense<0.000000e+00> : vector<256x4xf32>
    %79 = tpu.matmul %77, %78, %cst_32 {dimension_numbers = #tpu.dot_dimension_numbers<[1], [0], [0], [1], [0, 0, 1, 1], [], []>} : vector<256x36xbf16>, vector<36x4xbf16>, vector<256x4xf32> -> vector<256x4xf32>
    %c0_33 = arith.constant 0 : index
    %c0_34 = arith.constant 0 : index
    %80 = vector.load %arg8[%c0_33, %c0_34] : memref<256x4xf32, #tpu.memory_space<vmem>>, vector<256x4xf32>
    tpu.vector_store %arg8[%c0_33, %c0_34], %79 {strides = array<i32>} : memref<256x4xf32, #tpu.memory_space<vmem>>, vector<256x4xf32>,
    %c0_35 = arith.constant 0 : index
    %c0_36 = arith.constant 0 : index
    %81 = vector.load %arg9[%c0_35, %c0_36] : memref<2x4xf32, #tpu.memory_space<vmem>>, vector<2x4xf32>
    %cst_37 = arith.constant dense<0.000000e+00> : vector<4xf32>
    %82 = vector.multi_reduction <add>, %79, %cst_37 [0] : vector<256x4xf32> to vector<4xf32>
    %83 = vector.shape_cast %82 : vector<4xf32> to vector<1x4xf32>
    %84 = arith.mulf %79, %79 : vector<256x4xf32>
    %cst_38 = arith.constant dense<0.000000e+00> : vector<4xf32>
    %85 = vector.multi_reduction <add>, %84, %cst_38 [0] : vector<256x4xf32> to vector<4xf32>
    %86 = vector.shape_cast %85 : vector<4xf32> to vector<1x4xf32>
    %87 = tpu.concatenate %83, %86 in 0 : vector<1x4xf32>, vector<1x4xf32> -> vector<2x4xf32>
    %88 = arith.addf %81, %87 : vector<2x4xf32>
    %c0_39 = arith.constant 0 : index
    %c0_40 = arith.constant 0 : index
    %89 = vector.load %arg9[%c0_39, %c0_40] : memref<2x4xf32, #tpu.memory_space<vmem>>, vector<2x4xf32>
    tpu.vector_store %arg9[%c0_39, %c0_40], %88 {strides = array<i32>} : memref<2x4xf32, #tpu.memory_space<vmem>>, vector<2x4xf32>,
    return
  }
  func.func @transform_0(%arg0: i32) -> (i32, i32, i32) {
    %c0_i32 = arith.constant 0 : i32
    %c0_i32_0 = arith.constant 0 : i32
    %c0_i32_1 = arith.constant 0 : i32
    return %arg0, %c0_i32, %c0_i32_0 : i32, i32, i32
  }
  func.func @transform_1(%arg0: i32) -> (i32, i32, i32) {
    %c16_i32 = arith.constant 16 : i32
    %0 = arith.muli %arg0, %c16_i32 : i32
    %c1_i32 = arith.constant 1 : i32
    %1 = arith.subi %0, %c1_i32 : i32
    %c0_i32 = arith.constant 0 : i32
    %2 = arith.maxsi %1, %c0_i32 : i32
    %c0_i32_0 = arith.constant 0 : i32
    %c0_i32_1 = arith.constant 0 : i32
    %c0_i32_2 = arith.constant 0 : i32
    return %2, %c0_i32_0, %c0_i32_1 : i32, i32, i32
  }
  func.func @transform_2(%arg0: i32) -> (i32, i32, i32) {
    %c16_i32 = arith.constant 16 : i32
    %0 = arith.muli %arg0, %c16_i32 : i32
    %c16_i32_0 = arith.constant 16 : i32
    %1 = arith.addi %0, %c16_i32_0 : i32
    %c31_i32 = arith.constant 31 : i32
    %2 = arith.minsi %1, %c31_i32 : i32
    %c0_i32 = arith.constant 0 : i32
    %c0_i32_1 = arith.constant 0 : i32
    %c0_i32_2 = arith.constant 0 : i32
    return %2, %c0_i32, %c0_i32_1 : i32, i32, i32
  }
  func.func @transform_3(%arg0: i32) -> (i32, i32) {
    %c0_i32 = arith.constant 0 : i32
    %c0_i32_0 = arith.constant 0 : i32
    %c0_i32_1 = arith.constant 0 : i32
    return %c0_i32, %c0_i32_0 : i32, i32
  }
  func.func @transform_4(%arg0: i32) -> (i32, i32) {
    %c0_i32 = arith.constant 0 : i32
    %c0_i32_0 = arith.constant 0 : i32
    %c0_i32_1 = arith.constant 0 : i32
    return %c0_i32, %c0_i32_0 : i32, i32
  }
  func.func @transform_5(%arg0: i32) -> (i32, i32) {
    %c0_i32 = arith.constant 0 : i32
    %c0_i32_0 = arith.constant 0 : i32
    %c0_i32_1 = arith.constant 0 : i32
    return %c0_i32, %c0_i32_0 : i32, i32
  }
  func.func @transform_6(%arg0: i32) -> (i32, i32) {
    %c0_i32 = arith.constant 0 : i32
    %c0_i32_0 = arith.constant 0 : i32
    %c0_i32_1 = arith.constant 0 : i32
    return %c0_i32, %c0_i32_0 : i32, i32
  }
  func.func @transform_7(%arg0: i32) -> (i32, i32) {
    %c0_i32 = arith.constant 0 : i32
    %c0_i32_0 = arith.constant 0 : i32
    return %arg0, %c0_i32 : i32, i32
  }
  func.func @transform_8(%arg0: i32) -> (i32, i32) {
    %c0_i32 = arith.constant 0 : i32
    %c0_i32_0 = arith.constant 0 : i32
    %c0_i32_1 = arith.constant 0 : i32
    return %c0_i32, %c0_i32_0 : i32, i32
  }
}

</mosaic_0001>

<llo_original>
// kernel: bottleneck_forward.3
$region0: #{bottleneck_forward.3}
  #allocation0 [shape = 'u32[]', space=smem, size = 0x4, offset = 0x4, fixed_abs, tag = 'smem constant byte address 0x4 - core index']
  #allocation1 [shape = 'u32[144,128]{1,0:T(1,128)}', space=vmem, size = 0x12000, scoped, tag = 'internal scratch']
  %s0 = inlined_call_operand.vmem [shape: f32[512,16], index: 0, kind: input, shape index: {}]
  %s1 = inlined_call_operand.vmem [shape: bf16[16,4], index: 1, kind: input, shape index: {}]
  %s2 = inlined_call_operand.vmem [shape: f32[512,4], index: 2, kind: output, shape index: {0}]
  %s3 = inlined_call_operand.vmem [shape: f32[2,4], index: 3, kind: output, shape index: {1}]
  %4 = xla_tuple %s2, %s3
  %s5 = sld [smem:[#allocation0]]
  $region53: #{bottleneck_forward.3} parent=0
    _
  %s7 = ssub.s32 1, %s5
  %s8 = scalar_select 0, %s7, %s5
  loop: start=0, step=1, limit=4
  $region2: #{bottleneck_forward.3} parent=0 // loop_pre_header
    _
  $region3: #{bottleneck_forward.3} parent=0 // loop_header
    %s10 = sphi 0, %s14
    %p11 = scmp.ge.s32.totalorder %s10, 4
    %s20 = sphi 0, %s22
    %s23 = sphi 0, %s20
    %s24 = sphi 0, %s23
    %s40 = sphi 0, %s24
    %s44 = sphi 0, %s44
    %s46 = sphi 0, %s44
    %s47 = sphi 0, %s46
    %s61 = sphi 0, %s47
    %s67 = sphi 0, %s69
    %s70 = sphi 0, %s67
    %s71 = sphi 0, %s70
    %s87 = sphi 0, %s71
    %s91 = sphi 0, %s91
    %s93 = sphi 0, %s91
    %s94 = sphi 0, %s93
    %s108 = sphi 0, %s94
  $region4: #{bottleneck_forward.3} parent=0 // loop_header_branch
    %13 = sbr.rel (%p11) target = $region8
  $region5: #{bottleneck_forward.3} parent=0 // loop_body
    %s15 = ssub.s32 %s10, 1
    %s16 = ssub.s32 %s10, 2
    %s17 = sadd.s32 %s10, 1
    %s18 = ssub.s32 %s10, %s17
    %p19 = scmp.eq.s32.totalorder %s18, 0
    %s21 = sadd.s32 %s20, 1
    %s22 = scalar_select %p19, %s20, %s21
    %p25 = pneg %p19
    %p26 = scmp.eq.s32.totalorder %s10, 1
    %p27 = por %p25, %p26
    %p28 = scmp.ne.s32.totalorder %s20, %s23
    %p29 = scmp.eq.s32.totalorder %s10, 0
    %p30 = por %p28, %p29
    %p31 = scmp.ne.s32.totalorder %s20, %s23
    %p32 = scmp.eq.s32.totalorder %s15, 1
    %p33 = por %p31, %p32
    %p34 = scmp.ne.s32.totalorder %s23, %s24
    %p35 = scmp.eq.s32.totalorder %s15, 0
    %p36 = por %p34, %p35
    %p37 = scmp.ne.s32.totalorder %s23, %s24
    %p38 = scmp.eq.s32.totalorder %s16, 1
    %p39 = por %p37, %p38
    %p41 = scmp.ne.s32.totalorder %s24, %s40
    %p42 = scmp.eq.s32.totalorder %s16, 0
    %p43 = por %p41, %p42
    %s45 = sadd.s32 %s44, 1
    %p48 = scmp.eq.s32.totalorder %s10, 1
    %p49 = scmp.ne.s32.totalorder %s44, %s46
    %p50 = scmp.eq.s32.totalorder %s10, 0
    %p51 = por %p49, %p50
    %p52 = scmp.ne.s32.totalorder %s44, %s46
    %p53 = scmp.eq.s32.totalorder %s15, 1
    %p54 = por %p52, %p53
    %p55 = scmp.ne.s32.totalorder %s46, %s47
    %p56 = scmp.eq.s32.totalorder %s15, 0
    %p57 = por %p55, %p56
    %p58 = scmp.ne.s32.totalorder %s46, %s47
    %p59 = scmp.eq.s32.totalorder %s16, 1
    %p60 = por %p58, %p59
    %p62 = scmp.ne.s32.totalorder %s47, %s61
    %p63 = scmp.eq.s32.totalorder %s16, 0
    %p64 = por %p62, %p63
    %s65 = ssub.s32 %s10, %s17
    %p66 = scmp.eq.s32.totalorder %s65, 0
    %s68 = sadd.s32 %s67, 1
    %s69 = scalar_select %p66, %s67, %s68
    %p72 = pneg %p66
    %p73 = scmp.eq.s32.totalorder %s10, 1
    %p74 = por %p72, %p73
    %p75 = scmp.ne.s32.totalorder %s67, %s70
    %p76 = scmp.eq.s32.totalorder %s10, 0
    %p77 = por %p75, %p76
    %p78 = scmp.ne.s32.totalorder %s67, %s70
    %p79 = scmp.eq.s32.totalorder %s15, 1
    %p80 = por %p78, %p79
    %p81 = scmp.ne.s32.totalorder %s70, %s71
    %p82 = scmp.eq.s32.totalorder %s15, 0
    %p83 = por %p81, %p82
    %p84 = scmp.ne.s32.totalorder %s70, %s71
    %p85 = scmp.eq.s32.totalorder %s16, 1
    %p86 = por %p84, %p85
    %p88 = scmp.ne.s32.totalorder %s71, %s87
    %p89 = scmp.eq.s32.totalorder %s16, 0
    %p90 = por %p88, %p89
    %s92 = sadd.s32 %s91, 1
    %p95 = scmp.eq.s32.totalorder %s10, 1
    %p96 = scmp.ne.s32.totalorder %s91, %s93
    %p97 = scmp.eq.s32.totalorder %s10, 0
    %p98 = por %p96, %p97
    %p99 = scmp.ne.s32.totalorder %s91, %s93
    %p100 = scmp.eq.s32.totalorder %s15, 1
    %p101 = por %p99, %p100
    %p102 = scmp.ne.s32.totalorder %s93, %s94
    %p103 = scmp.eq.s32.totalorder %s15, 0
    %p104 = por %p102, %p103
    %p105 = scmp.ne.s32.totalorder %s93, %s94
    %p106 = scmp.eq.s32.totalorder %s16, 1
    %p107 = por %p105, %p106
    %p109 = scmp.ne.s32.totalorder %s94, %s108
    %p110 = scmp.eq.s32.totalorder %s16, 0
    %p111 = por %p109, %p110
    %p112 = scmp.le.s32.totalorder 1, %s10
    %p113 = scmp.lt.s32.totalorder %s10, 3
    %p114 = pnand %p112, %p113
    %p115 = pneg %p114
    // Predicated region
    $region9: #{bottleneck_forward.3} parent=5 // pred_check
      _
    $region10: #{bottleneck_forward.3} parent=5 // pred_check_branch
      %117 = sbr.rel (%p114) target = $region12
    $region11: #{bottleneck_forward.3} parent=5 // pred_region
      %s118 = ssub.s32 %s10, 1
      // Predicated region
      $region13: #{bottleneck_forward.3} parent=11 // pred_check
        %p119 = pneg %p57
      $region14: #{bottleneck_forward.3} parent=11 // pred_check_branch
        %121 = sbr.rel (%p119) target = $region16
      $region15: #{bottleneck_forward.3} parent=11 // pred_region
        _
      $region16: #{bottleneck_forward.3} parent=11 // pred_fallthru
        _
    $region12: #{bottleneck_forward.3} parent=5 // pred_fallthru
      _
    %p122 = scmp.lt.s32.totalorder %s10, 2
    // Predicated region
    $region17: #{bottleneck_forward.3} parent=5 // pred_check
      %p123 = pneg %p122
    $region18: #{bottleneck_forward.3} parent=5 // pred_check_branch
      %125 = sbr.rel (%p123) target = $region20
    $region19: #{bottleneck_forward.3} parent=5 // pred_region
      // Predicated region
      $region21: #{bottleneck_forward.3} parent=19 // pred_check
        %p126 = pneg %p30
      $region22: #{bottleneck_forward.3} parent=19 // pred_check_branch
        %128 = sbr.rel (%p126) target = $region24
      $region23: #{bottleneck_forward.3} parent=19 // pred_region
        %s129 = smul.u32 32, %s10
        %p130 = scmp.lt.s32.totalorder %s129, 63
        %s131 = scalar_select %p130, %s129, 63
        %s132 = smul.addr %s131, 8
        %s133 = scalar_lea.vmem %s0, %s132
        %s134 = smul.u32 32, %s10
      $region24: #{bottleneck_forward.3} parent=19 // pred_fallthru
        _
    $region20: #{bottleneck_forward.3} parent=5 // pred_fallthru
      _
    %p135 = scmp.le.s32.totalorder 1, %s10
    %p136 = scmp.lt.s32.totalorder %s10, 3
    %p137 = pnand %p135, %p136
    %p138 = pneg %p137
    // Predicated region
    $region25: #{bottleneck_forward.3} parent=5 // pred_check
      _
    $region26: #{bottleneck_forward.3} parent=5 // pred_check_branch
      %140 = sbr.rel (%p137) target = $region28
    $region27: #{bottleneck_forward.3} parent=5 // pred_region
      %s141 = ssub.s32 %s10, 1
      %s142 = smul.u32 32, %s15
      %p143 = scmp.lt.s32.totalorder %s142, 63
      %s144 = scalar_select %p143, %s142, 63
      %s145 = smul.addr %s144, 8
      %s146 = scalar_lea.vmem %s0, %s145
      %p147 = pneg %p36
      %p148 = pneg %p33
      %p149 = pneg %p57
      %p150 = pneg %p54
      %p151 = pneg %p83
      %p152 = pneg %p80
      %s153 = smul.u32 32, %s15
      %p154 = scmp.lt.s32.totalorder %s153, 63
      %s155 = scalar_select %p154, %s153, 63
      %s156 = smul.addr %s155, 8
      %s157 = scalar_lea.vmem %s2, %s156
      %p158 = pneg %p104
      %p159 = pneg %p101
      %s160 = smul.u32 32, %s15
      %p161 = scmp.lt.s32.totalorder %s160, 63
      %s162 = scalar_select %p161, %s160, 63
      %s163 = smul.addr %s162, 8
      %s164 = scalar_lea.vmem %s0, %s163
      %s165 = smul.u32 32, %s15
      %s166 = smul.u32 32, %s15
      %p167 = scmp.lt.s32.totalorder %s166, 63
      %s168 = scalar_select %p167, %s166, 63
      %s169 = smul.addr %s168, 8
      %s170 = scalar_lea.vmem %s2, %s169
      %s171 = smul.u32 32, %s15
      %p173 = scmp.eq.s32.totalorder %s15, 0
      // Predicated region
      $region29: #{bottleneck_forward.3} parent=27 // pred_check
        %p174 = pneg %p173
      $region30: #{bottleneck_forward.3} parent=27 // pred_check_branch
        %176 = sbr.rel (%p174) target = $region32
      $region31: #{bottleneck_forward.3} parent=27 // pred_region
        %vm177 = vcmask 25600
        %178 = vst.msk [vmem:[%s3] sm:$0x3] %vm177, 0.0
      $region32: #{bottleneck_forward.3} parent=27 // pred_fallthru
        _
      %v179 = vld [vmem:[%s164] sm:$0xff]
      %v180 = vld [vmem:[%s164 + $0x8] sm:$0xff]
      %v181 = vld [vmem:[%s164 + $0x10] sm:$0xff]
      %v182 = vld [vmem:[%s164 + $0x18] sm:$0xff]
      %v183 = vld [vmem:[%s164 + $0x20] sm:$0xff]
      %v184 = vld [vmem:[%s164 + $0x28] sm:$0xff]
      %v185 = vld [vmem:[%s164 + $0x30] sm:$0xff]
      %v186 = vld [vmem:[%s164 + $0x38] sm:$0xff]
      %v187 = vld [vmem:[%s164 + $0x40] sm:$0xff]
      %v188 = vld [vmem:[%s164 + $0x48] sm:$0xff]
      %v189 = vld [vmem:[%s164 + $0x50] sm:$0xff]
      %v190 = vld [vmem:[%s164 + $0x58] sm:$0xff]
      %v191 = vld [vmem:[%s164 + $0x60] sm:$0xff]
      %v192 = vld [vmem:[%s164 + $0x68] sm:$0xff]
      %v193 = vld [vmem:[%s164 + $0x70] sm:$0xff]
      %v194 = vld [vmem:[%s164 + $0x78] sm:$0xff]
      %v195 = vld [vmem:[%s164 + $0x80] sm:$0xff]
      %v196 = vld [vmem:[%s164 + $0x88] sm:$0xff]
      %v197 = vld [vmem:[%s164 + $0x90] sm:$0xff]
      %v198 = vld [vmem:[%s164 + $0x98] sm:$0xff]
      %v199 = vld [vmem:[%s164 + $0xa0] sm:$0xff]
      %v200 = vld [vmem:[%s164 + $0xa8] sm:$0xff]
      %v201 = vld [vmem:[%s164 + $0xb0] sm:$0xff]
      %v202 = vld [vmem:[%s164 + $0xb8] sm:$0xff]
      %v203 = vld [vmem:[%s164 + $0xc0] sm:$0xff]
      %v204 = vld [vmem:[%s164 + $0xc8] sm:$0xff]
      %v205 = vld [vmem:[%s164 + $0xd0] sm:$0xff]
      %v206 = vld [vmem:[%s164 + $0xd8] sm:$0xff]
      %v207 = vld [vmem:[%s164 + $0xe0] sm:$0xff]
      %v208 = vld [vmem:[%s164 + $0xe8] sm:$0xff]
      %v209 = vld [vmem:[%s164 + $0xf0] sm:$0xff]
      %v210 = vld [vmem:[%s164 + $0xf8] sm:$0xff]
      %v211 = vpack.c.bf16 %v180, %v179
      %v212 = vpack.c.bf16 %v182, %v181
      %v213 = vpack.c.bf16 %v184, %v183
      %v214 = vpack.c.bf16 %v186, %v185
      %v215 = vpack.c.bf16 %v188, %v187
      %v216 = vpack.c.bf16 %v190, %v189
      %v217 = vpack.c.bf16 %v192, %v191
      %v218 = vpack.c.bf16 %v194, %v193
      %v219 = vpack.c.bf16 %v196, %v195
      %v220 = vpack.c.bf16 %v198, %v197
      %v221 = vpack.c.bf16 %v200, %v199
      %v222 = vpack.c.bf16 %v202, %v201
      %v223 = vpack.c.bf16 %v204, %v203
      %v224 = vpack.c.bf16 %v206, %v205
      %v225 = vpack.c.bf16 %v208, %v207
      %v226 = vpack.c.bf16 %v210, %v209
      %v227 = vld [vmem:[%s1] sm:$0xf]
      %v228 = vld [vmem:[%s1 + $0x4] sm:$0xf]
      %v231 = vunpack.c.l.b16 %v227
      %v232 = vunpack.c.l.b16 %v228
      %v233 = vpack.c.b16 %v232, %v231
      %vm235 = vcmask 130048
      %v237 = vsel %vm235, %v211, 0
      %v240 = vsel %vm235, %v212, 0
      %v243 = vsel %vm235, %v213, 0
      %v246 = vsel %vm235, %v214, 0
      %v249 = vsel %vm235, %v215, 0
      %v252 = vsel %vm235, %v216, 0
      %v255 = vsel %vm235, %v217, 0
      %v258 = vsel %vm235, %v218, 0
      %v261 = vsel %vm235, %v219, 0
      %v264 = vsel %vm235, %v220, 0
      %v267 = vsel %vm235, %v221, 0
      %v270 = vsel %vm235, %v222, 0
      %v273 = vsel %vm235, %v223, 0
      %v276 = vsel %vm235, %v224, 0
      %v279 = vsel %vm235, %v225, 0
      %v282 = vsel %vm235, %v226, 0
      %284 = vmatprep.subr.bf16.mxu0 0
      %285 = vmatpush1.bf16.msra.mxu0 %v233
      %286 = vmatprep.subr.bf16.mxu0 0
      %287 = vmatpush1.bf16.msra.mxu0 0
      %288 = vmatprep.subr.bf16.mxu0 0
      %289 = vmatpush1.bf16.msra.mxu0 0
      %290 = vmatprep.subr.bf16.mxu0 0
      %291 = vmatpush1.bf16.msra.mxu0 0
      %292 = vmatprep.subr.bf16.mxu0 0
      %293 = vmatpush1.bf16.msra.mxu0 0
      %294 = vmatprep.subr.bf16.mxu0 0
      %295 = vmatpush1.bf16.msra.mxu0 0
      %296 = vmatprep.subr.bf16.mxu0 0
      %297 = vmatpush1.bf16.msra.mxu0 0
      %298 = vmatprep.subr.bf16.mxu0 0
      %299 = vmatpush1.bf16.msra.mxu0 0
      %300 = vmatprep.subr.bf16.mxu0 0
      %301 = vmatpush1.bf16.msra.mxu0 0
      %302 = vmatprep.subr.bf16.mxu0 0
      %303 = vmatpush1.bf16.msra.mxu0 0
      %304 = vmatprep.subr.bf16.mxu0 0
      %305 = vmatpush1.bf16.msra.mxu0 0
      %306 = vmatprep.subr.bf16.mxu0 0
      %307 = vmatpush1.bf16.msra.mxu0 0
      %308 = vmatprep.subr.bf16.mxu0 0
      %309 = vmatpush1.bf16.msra.mxu0 0
      %310 = vmatprep.subr.bf16.mxu0 0
      %311 = vmatpush1.bf16.msra.mxu0 0
      %312 = vmatprep.subr.bf16.mxu0 0
      %313 = vmatpush1.bf16.msra.mxu0 0
      %314 = vmatprep.subr.bf16.mxu0 0
      %315 = vmatpush1.bf16.msra.mxu0 0
      %316 = vmatprep.mubr.bf16.mxu0 0
      %317 = vmatmul.mubr.bf16.gmra.mrb[0].mxu0 %v237
      %v318 = vpop.f32.mrb[0].mxu0
      %v319 = vadd.f32 0.0, %v318
      %v320 = vpop.f32.mrb[0].mxu0
      %v321 = vpop.f32.mrb[0].mxu0
      %v322 = vadd.f32 0.0, %v321
      %v323 = vpop.f32.mrb[0].mxu0
      %324 = vmatprep.mubr.bf16.mxu0 0
      %325 = vmatmul.mubr.bf16.gmra.mrb[0].mxu0 %v240
      %v326 = vpop.f32.mrb[0].mxu0
      %v327 = vadd.f32 0.0, %v326
      %v328 = vpop.f32.mrb[0].mxu0
      %v329 = vpop.f32.mrb[0].mxu0
      %v330 = vadd.f32 0.0, %v329
      %v331 = vpop.f32.mrb[0].mxu0
      %332 = vmatprep.mubr.bf16.mxu0 0
      %333 = vmatmul.mubr.bf16.gmra.mrb[0].mxu0 %v243
      %v334 = vpop.f32.mrb[0].mxu0
      %v335 = vadd.f32 0.0, %v334
      %v336 = vpop.f32.mrb[0].mxu0
      %v337 = vpop.f32.mrb[0].mxu0
      %v338 = vadd.f32 0.0, %v337
      %v339 = vpop.f32.mrb[0].mxu0
      %340 = vmatprep.mubr.bf16.mxu0 0
      %341 = vmatmul.mubr.bf16.gmra.mrb[0].mxu0 %v246
      %v342 = vpop.f32.mrb[0].mxu0
      %v343 = vadd.f32 0.0, %v342
      %v344 = vpop.f32.mrb[0].mxu0
      %v345 = vpop.f32.mrb[0].mxu0
      %v346 = vadd.f32 0.0, %v345
      %v347 = vpop.f32.mrb[0].mxu0
      %348 = vmatprep.mubr.bf16.mxu0 0
      %349 = vmatmul.mubr.bf16.gmra.mrb[0].mxu0 %v249
      %v350 = vpop.f32.mrb[0].mxu0
      %v351 = vadd.f32 0.0, %v350
      %v352 = vpop.f32.mrb[0].mxu0
      %v353 = vpop.f32.mrb[0].mxu0
      %v354 = vadd.f32 0.0, %v353
      %v355 = vpop.f32.mrb[0].mxu0
      %356 = vmatprep.mubr.bf16.mxu0 0
      %357 = vmatmul.mubr.bf16.gmra.mrb[0].mxu0 %v252
      %v358 = vpop.f32.mrb[0].mxu0
      %v359 = vadd.f32 0.0, %v358
      %v360 = vpop.f32.mrb[0].mxu0
      %v361 = vpop.f32.mrb[0].mxu0
      %v362 = vadd.f32 0.0, %v361
      %v363 = vpop.f32.mrb[0].mxu0
      %364 = vmatprep.mubr.bf16.mxu0 0
      %365 = vmatmul.mubr.bf16.gmra.mrb[0].mxu0 %v255
      %v366 = vpop.f32.mrb[0].mxu0
      %v367 = vadd.f32 0.0, %v366
      %v368 = vpop.f32.mrb[0].mxu0
      %v369 = vpop.f32.mrb[0].mxu0
      %v370 = vadd.f32 0.0, %v369
      %v371 = vpop.f32.mrb[0].mxu0
      %372 = vmatprep.mubr.bf16.mxu0 0
      %373 = vmatmul.mubr.bf16.gmra.mrb[0].mxu0 %v258
      %v374 = vpop.f32.mrb[0].mxu0
      %v375 = vadd.f32 0.0, %v374
      %v376 = vpop.f32.mrb[0].mxu0
      %v377 = vpop.f32.mrb[0].mxu0
      %v378 = vadd.f32 0.0, %v377
      %v379 = vpop.f32.mrb[0].mxu0
      %380 = vmatprep.mubr.bf16.mxu0 0
      %381 = vmatmul.mubr.bf16.gmra.mrb[0].mxu0 %v261
      %v382 = vpop.f32.mrb[0].mxu0
      %v383 = vadd.f32 0.0, %v382
      %v384 = vpop.f32.mrb[0].mxu0
      %v385 = vpop.f32.mrb[0].mxu0
      %v386 = vadd.f32 0.0, %v385
      %v387 = vpop.f32.mrb[0].mxu0
      %388 = vmatprep.mubr.bf16.mxu0 0
      %389 = vmatmul.mubr.bf16.gmra.mrb[0].mxu0 %v264
      %v390 = vpop.f32.mrb[0].mxu0
      %v391 = vadd.f32 0.0, %v390
      %v392 = vpop.f32.mrb[0].mxu0
      %v393 = vpop.f32.mrb[0].mxu0
      %v394 = vadd.f32 0.0, %v393
      %v395 = vpop.f32.mrb[0].mxu0
      %396 = vmatprep.mubr.bf16.mxu0 0
      %397 = vmatmul.mubr.bf16.gmra.mrb[0].mxu0 %v267
      %v398 = vpop.f32.mrb[0].mxu0
      %v399 = vadd.f32 0.0, %v398
      %v400 = vpop.f32.mrb[0].mxu0
      %v401 = vpop.f32.mrb[0].mxu0
      %v402 = vadd.f32 0.0, %v401
      %v403 = vpop.f32.mrb[0].mxu0
      %404 = vmatprep.mubr.bf16.mxu0 0
      %405 = vmatmul.mubr.bf16.gmra.mrb[0].mxu0 %v270
      %v406 = vpop.f32.mrb[0].mxu0
      %v407 = vadd.f32 0.0, %v406
      %v408 = vpop.f32.mrb[0].mxu0
      %v409 = vpop.f32.mrb[0].mxu0
      %v410 = vadd.f32 0.0, %v409
      %v411 = vpop.f32.mrb[0].mxu0
      %412 = vmatprep.mubr.bf16.mxu0 0
      %413 = vmatmul.mubr.bf16.gmra.mrb[0].mxu0 %v273
      %v414 = vpop.f32.mrb[0].mxu0
      %v415 = vadd.f32 0.0, %v414
      %v416 = vpop.f32.mrb[0].mxu0
      %v417 = vpop.f32.mrb[0].mxu0
      %v418 = vadd.f32 0.0, %v417
      %v419 = vpop.f32.mrb[0].mxu0
      %420 = vmatprep.mubr.bf16.mxu0 0
      %421 = vmatmul.mubr.bf16.gmra.mrb[0].mxu0 %v276
      %v422 = vpop.f32.mrb[0].mxu0
      %v423 = vadd.f32 0.0, %v422
      %v424 = vpop.f32.mrb[0].mxu0
      %v425 = vpop.f32.mrb[0].mxu0
      %v426 = vadd.f32 0.0, %v425
      %v427 = vpop.f32.mrb[0].mxu0
      %428 = vmatprep.mubr.bf16.mxu0 0
      %429 = vmatmul.mubr.bf16.gmra.mrb[0].mxu0 %v279
      %v430 = vpop.f32.mrb[0].mxu0
      %v431 = vadd.f32 0.0, %v430
      %v432 = vpop.f32.mrb[0].mxu0
      %v433 = vpop.f32.mrb[0].mxu0
      %v434 = vadd.f32 0.0, %v433
      %v435 = vpop.f32.mrb[0].mxu0
      %436 = vmatprep.mubr.bf16.mxu0 0
      %437 = vmatmul.mubr.bf16.gmra.mrb[0].mxu0 %v282
      %v438 = vpop.f32.mrb[0].mxu0
      %v439 = vadd.f32 0.0, %v438
      %v440 = vpop.f32.mrb[0].mxu0
      %v441 = vpop.f32.mrb[0].mxu0
      %v442 = vadd.f32 0.0, %v441
      %v443 = vpop.f32.mrb[0].mxu0
      %444 = vdwg.mxu0
      %vm445 = vcmask 31744
      %446 = vst.msk [vmem:[%s170] sm:$0xff] %vm445, %v319
      %447 = vst.msk [vmem:[%s170 + $0x8] sm:$0xff] %vm445, %v322
      %448 = vst.msk [vmem:[%s170 + $0x10] sm:$0xff] %vm445, %v327
      %449 = vst.msk [vmem:[%s170 + $0x18] sm:$0xff] %vm445, %v330
      %450 = vst.msk [vmem:[%s170 + $0x20] sm:$0xff] %vm445, %v335
      %451 = vst.msk [vmem:[%s170 + $0x28] sm:$0xff] %vm445, %v338
      %452 = vst.msk [vmem:[%s170 + $0x30] sm:$0xff] %vm445, %v343
      %453 = vst.msk [vmem:[%s170 + $0x38] sm:$0xff] %vm445, %v346
      %454 = vst.msk [vmem:[%s170 + $0x40] sm:$0xff] %vm445, %v351
      %455 = vst.msk [vmem:[%s170 + $0x48] sm:$0xff] %vm445, %v354
      %456 = vst.msk [vmem:[%s170 + $0x50] sm:$0xff] %vm445, %v359
      %457 = vst.msk [vmem:[%s170 + $0x58] sm:$0xff] %vm445, %v362
      %458 = vst.msk [vmem:[%s170 + $0x60] sm:$0xff] %vm445, %v367
      %459 = vst.msk [vmem:[%s170 + $0x68] sm:$0xff] %vm445, %v370
      %460 = vst.msk [vmem:[%s170 + $0x70] sm:$0xff] %vm445, %v375
      %461 = vst.msk [vmem:[%s170 + $0x78] sm:$0xff] %vm445, %v378
      %462 = vst.msk [vmem:[%s170 + $0x80] sm:$0xff] %vm445, %v383
      %463 = vst.msk [vmem:[%s170 + $0x88] sm:$0xff] %vm445, %v386
      %464 = vst.msk [vmem:[%s170 + $0x90] sm:$0xff] %vm445, %v391
      %465 = vst.msk [vmem:[%s170 + $0x98] sm:$0xff] %vm445, %v394
      %466 = vst.msk [vmem:[%s170 + $0xa0] sm:$0xff] %vm445, %v399
      %467 = vst.msk [vmem:[%s170 + $0xa8] sm:$0xff] %vm445, %v402
      %468 = vst.msk [vmem:[%s170 + $0xb0] sm:$0xff] %vm445, %v407
      %469 = vst.msk [vmem:[%s170 + $0xb8] sm:$0xff] %vm445, %v410
      %470 = vst.msk [vmem:[%s170 + $0xc0] sm:$0xff] %vm445, %v415
      %471 = vst.msk [vmem:[%s170 + $0xc8] sm:$0xff] %vm445, %v418
      %472 = vst.msk [vmem:[%s170 + $0xd0] sm:$0xff] %vm445, %v423
      %473 = vst.msk [vmem:[%s170 + $0xd8] sm:$0xff] %vm445, %v426
      %474 = vst.msk [vmem:[%s170 + $0xe0] sm:$0xff] %vm445, %v431
      %475 = vst.msk [vmem:[%s170 + $0xe8] sm:$0xff] %vm445, %v434
      %476 = vst.msk [vmem:[%s170 + $0xf0] sm:$0xff] %vm445, %v439
      %477 = vst.msk [vmem:[%s170 + $0xf8] sm:$0xff] %vm445, %v442
      %v478 = vld [vmem:[%s3] sm:$0x3]
      %v479 = vsel %vm445, %v319, 0.0
      %v480 = vsel %vm445, %v322, 0.0
      %v481 = vadd.f32 %v479, %v480
      %v482 = vsel %vm445, %v327, 0.0
      %v483 = vadd.f32 %v481, %v482
      %v484 = vsel %vm445, %v330, 0.0
      %v485 = vadd.f32 %v483, %v484
      %v486 = vsel %vm445, %v335, 0.0
      %v487 = vadd.f32 %v485, %v486
      %v488 = vsel %vm445, %v338, 0.0
      %v489 = vadd.f32 %v487, %v488
      %v490 = vsel %vm445, %v343, 0.0
      %v491 = vadd.f32 %v489, %v490
      %v492 = vsel %vm445, %v346, 0.0
      %v493 = vadd.f32 %v491, %v492
      %v494 = vsel %vm445, %v351, 0.0
      %v495 = vadd.f32 %v493, %v494
      %v496 = vsel %vm445, %v354, 0.0
      %v497 = vadd.f32 %v495, %v496
      %v498 = vsel %vm445, %v359, 0.0
      %v499 = vadd.f32 %v497, %v498
      %v500 = vsel %vm445, %v362, 0.0
      %v501 = vadd.f32 %v499, %v500
      %v502 = vsel %vm445, %v367, 0.0
      %v503 = vadd.f32 %v501, %v502
      %v504 = vsel %vm445, %v370, 0.0
      %v505 = vadd.f32 %v503, %v504
      %v506 = vsel %vm445, %v375, 0.0
      %v507 = vadd.f32 %v505, %v506
      %v508 = vsel %vm445, %v378, 0.0
      %v509 = vadd.f32 %v507, %v508
      %v510 = vsel %vm445, %v383, 0.0
      %v511 = vadd.f32 %v509, %v510
      %v512 = vsel %vm445, %v386, 0.0
      %v513 = vadd.f32 %v511, %v512
      %v514 = vsel %vm445, %v391, 0.0
      %v515 = vadd.f32 %v513, %v514
      %v516 = vsel %vm445, %v394, 0.0
      %v517 = vadd.f32 %v515, %v516
      %v518 = vsel %vm445, %v399, 0.0
      %v519 = vadd.f32 %v517, %v518
      %v520 = vsel %vm445, %v402, 0.0
      %v521 = vadd.f32 %v519, %v520
      %v522 = vsel %vm445, %v407, 0.0
      %v523 = vadd.f32 %v521, %v522
      %v524 = vsel %vm445, %v410, 0.0
      %v525 = vadd.f32 %v523, %v524
      %v526 = vsel %vm445, %v415, 0.0
      %v527 = vadd.f32 %v525, %v526
      %v528 = vsel %vm445, %v418, 0.0
      %v529 = vadd.f32 %v527, %v528
      %v530 = vsel %vm445, %v423, 0.0
      %v531 = vadd.f32 %v529, %v530
      %v532 = vsel %vm445, %v426, 0.0
      %v533 = vadd.f32 %v531, %v532
      %v534 = vsel %vm445, %v431, 0.0
      %v535 = vadd.f32 %v533, %v534
      %v536 = vsel %vm445, %v434, 0.0
      %v537 = vadd.f32 %v535, %v536
      %v538 = vsel %vm445, %v439, 0.0
      %v539 = vadd.f32 %v537, %v538
      %v540 = vsel %vm445, %v442, 0.0
      %v541 = vadd.f32 %v539, %v540
      %v542 = vrot.slane %v541, 4
      %v543 = vadd.f32 %v541, %v542
      %v544 = vrot.slane %v543, 2
      %v545 = vadd.f32 %v543, %v544
      %v546 = vrot.slane %v545, 1
      %v547 = vadd.f32 %v545, %v546
      %v548 = vmul.f32 %v319, %v319
      %v549 = vmul.f32 %v322, %v322
      %v550 = vmul.f32 %v327, %v327
      %v551 = vmul.f32 %v330, %v330
      %v552 = vmul.f32 %v335, %v335
      %v553 = vmul.f32 %v338, %v338
      %v554 = vmul.f32 %v343, %v343
      %v555 = vmul.f32 %v346, %v346
      %v556 = vmul.f32 %v351, %v351
      %v557 = vmul.f32 %v354, %v354
      %v558 = vmul.f32 %v359, %v359
      %v559 = vmul.f32 %v362, %v362
      %v560 = vmul.f32 %v367, %v367
      %v561 = vmul.f32 %v370, %v370
      %v562 = vmul.f32 %v375, %v375
      %v563 = vmul.f32 %v378, %v378
      %v564 = vmul.f32 %v383, %v383
      %v565 = vmul.f32 %v386, %v386
      %v566 = vmul.f32 %v391, %v391
      %v567 = vmul.f32 %v394, %v394
      %v568 = vmul.f32 %v399, %v399
      %v569 = vmul.f32 %v402, %v402
      %v570 = vmul.f32 %v407, %v407
      %v571 = vmul.f32 %v410, %v410
      %v572 = vmul.f32 %v415, %v415
      %v573 = vmul.f32 %v418, %v418
      %v574 = vmul.f32 %v423, %v423
      %v575 = vmul.f32 %v426, %v426
      %v576 = vmul.f32 %v431, %v431
      %v577 = vmul.f32 %v434, %v434
      %v578 = vmul.f32 %v439, %v439
      %v579 = vmul.f32 %v442, %v442
      %v580 = vsel %vm445, %v548, 0.0
      %v581 = vsel %vm445, %v549, 0.0
      %v582 = vadd.f32 %v580, %v581
      %v583 = vsel %vm445, %v550, 0.0
      %v584 = vadd.f32 %v582, %v583
      %v585 = vsel %vm445, %v551, 0.0
      %v586 = vadd.f32 %v584, %v585
      %v587 = vsel %vm445, %v552, 0.0
      %v588 = vadd.f32 %v586, %v587
      %v589 = vsel %vm445, %v553, 0.0
      %v590 = vadd.f32 %v588, %v589
      %v591 = vsel %vm445, %v554, 0.0
      %v592 = vadd.f32 %v590, %v591
      %v593 = vsel %vm445, %v555, 0.0
      %v594 = vadd.f32 %v592, %v593
      %v595 = vsel %vm445, %v556, 0.0
      %v596 = vadd.f32 %v594, %v595
      %v597 = vsel %vm445, %v557, 0.0
      %v598 = vadd.f32 %v596, %v597
      %v599 = vsel %vm445, %v558, 0.0
      %v600 = vadd.f32 %v598, %v599
      %v601 = vsel %vm445, %v559, 0.0
      %v602 = vadd.f32 %v600, %v601
      %v603 = vsel %vm445, %v560, 0.0
      %v604 = vadd.f32 %v602, %v603
      %v605 = vsel %vm445, %v561, 0.0
      %v606 = vadd.f32 %v604, %v605
      %v607 = vsel %vm445, %v562, 0.0
      %v608 = vadd.f32 %v606, %v607
      %v609 = vsel %vm445, %v563, 0.0
      %v610 = vadd.f32 %v608, %v609
      %v611 = vsel %vm445, %v564, 0.0
      %v612 = vadd.f32 %v610, %v611
      %v613 = vsel %vm445, %v565, 0.0
      %v614 = vadd.f32 %v612, %v613
      %v615 = vsel %vm445, %v566, 0.0
      %v616 = vadd.f32 %v614, %v615
      %v617 = vsel %vm445, %v567, 0.0
      %v618 = vadd.f32 %v616, %v617
      %v619 = vsel %vm445, %v568, 0.0
      %v620 = vadd.f32 %v618, %v619
      %v621 = vsel %vm445, %v569, 0.0
      %v622 = vadd.f32 %v620, %v621
      %v623 = vsel %vm445, %v570, 0.0
      %v624 = vadd.f32 %v622, %v623
      %v625 = vsel %vm445, %v571, 0.0
      %v626 = vadd.f32 %v624, %v625
      %v627 = vsel %vm445, %v572, 0.0
      %v628 = vadd.f32 %v626, %v627
      %v629 = vsel %vm445, %v573, 0.0
      %v630 = vadd.f32 %v628, %v629
      %v631 = vsel %vm445, %v574, 0.0
      %v632 = vadd.f32 %v630, %v631
      %v633 = vsel %vm445, %v575, 0.0
      %v634 = vadd.f32 %v632, %v633
      %v635 = vsel %vm445, %v576, 0.0
      %v636 = vadd.f32 %v634, %v635
      %v637 = vsel %vm445, %v577, 0.0
      %v638 = vadd.f32 %v636, %v637
      %v639 = vsel %vm445, %v578, 0.0
      %v640 = vadd.f32 %v638, %v639
      %v641 = vsel %vm445, %v579, 0.0
      %v642 = vadd.f32 %v640, %v641
      %v643 = vrot.slane %v642, 4
      %v644 = vadd.f32 %v642, %v643
      %v645 = vrot.slane %v644, 2
      %v646 = vadd.f32 %v644, %v645
      %v647 = vrot.slane %v646, 1
      %v648 = vadd.f32 %v646, %v647
      %vm649 = vcmask 1040384
      %v650 = vsel %vm649, %v547, %v648
      %v651 = vadd.f32 %v478, %v650
      %vm652 = vcmask 25600
      %653 = vst.msk [vmem:[%s3] sm:$0x3] %vm652, %v651
      %s654 = smul.u32 32, %s15
      %p655 = scmp.lt.s32.totalorder %s654, 63
      %s656 = scalar_select %p655, %s654, 63
      %s657 = smul.addr %s656, 8
      %s658 = scalar_lea.vmem %s2, %s657
      // Predicated region
      $region33: #{bottleneck_forward.3} parent=27 // pred_check
        %p659 = pneg %p80
      $region34: #{bottleneck_forward.3} parent=27 // pred_check_branch
        %661 = sbr.rel (%p659) target = $region36
      $region35: #{bottleneck_forward.3} parent=27 // pred_region
        %s662 = smul.u32 32, %s15
      $region36: #{bottleneck_forward.3} parent=27 // pred_fallthru
        _
      // Predicated region
      $region37: #{bottleneck_forward.3} parent=27 // pred_check
        %p663 = pneg %p101
      $region38: #{bottleneck_forward.3} parent=27 // pred_check_branch
        %665 = sbr.rel (%p663) target = $region40
      $region39: #{bottleneck_forward.3} parent=27 // pred_region
        _
      $region40: #{bottleneck_forward.3} parent=27 // pred_fallthru
        _
      // Predicated region
      $region41: #{bottleneck_forward.3} parent=27 // pred_check
        %p666 = pneg %p101
      $region42: #{bottleneck_forward.3} parent=27 // pred_check_branch
        %668 = sbr.rel (%p666) target = $region44
      $region43: #{bottleneck_forward.3} parent=27 // pred_region
        _
      $region44: #{bottleneck_forward.3} parent=27 // pred_fallthru
        _
    $region28: #{bottleneck_forward.3} parent=5 // pred_fallthru
      _
    %p669 = scmp.le.s32.totalorder 2, %s10
    // Predicated region
    $region45: #{bottleneck_forward.3} parent=5 // pred_check
      %p670 = pneg %p669
    $region46: #{bottleneck_forward.3} parent=5 // pred_check_branch
      %672 = sbr.rel (%p670) target = $region48
    $region47: #{bottleneck_forward.3} parent=5 // pred_region
      %s673 = ssub.s32 %s10, 2
      // Predicated region
      $region49: #{bottleneck_forward.3} parent=47 // pred_check
        %p674 = pneg %p86
      $region50: #{bottleneck_forward.3} parent=47 // pred_check_branch
        %676 = sbr.rel (%p674) target = $region52
      $region51: #{bottleneck_forward.3} parent=47 // pred_region
        %s677 = smul.u32 32, %s16
        %p678 = scmp.lt.s32.totalorder %s677, 63
        %s679 = scalar_select %p678, %s677, 63
        %s680 = smul.addr %s679, 8
        %s681 = scalar_lea.vmem %s2, %s680
      $region52: #{bottleneck_forward.3} parent=47 // pred_fallthru
        _
    $region48: #{bottleneck_forward.3} parent=5 // pred_fallthru
      _
  $region6: #{bottleneck_forward.3} parent=0 // loop_footer
    %s14 = sadd.s32 1, %s10
  $region7: #{bottleneck_forward.3} parent=0 // loop_footer_branch
    %9 = sbr.rel target = $region3
  $region8: #{bottleneck_forward.3} parent=0 // loop_exit
    _

// kernel: bottleneck_forward.5
$region0: #{bottleneck_forward.5}
  #allocation0 [shape = 'u32[]', space=smem, size = 0x4, offset = 0x4, fixed_abs, tag = 'smem constant byte address 0x4 - core index']
  #allocation1 [shape = 'u32[144,128]{1,0:T(1,128)}', space=vmem, size = 0x12000, scoped, tag = 'internal scratch']
  #allocation2 [shape = 'f32[2,16]{1,0:T(2,128)}', space=vmem, size = 0x400, scoped, tag = 'scratch operand']
  %s0 = inlined_call_operand.vmem [shape: f32[512,4], index: 0, kind: input, shape index: {}]
  %s1 = inlined_call_operand.vmem [shape: bf16[4,16], index: 1, kind: input, shape index: {}]
  %s2 = inlined_call_operand.vmem [shape: f32[2,4], index: 2, kind: input, shape index: {}]
  %s3 = inlined_call_operand.vmem [shape: f32[1,4], index: 3, kind: input, shape index: {}]
  %s4 = inlined_call_operand.vmem [shape: f32[1,4], index: 4, kind: input, shape index: {}]
  %s5 = inlined_call_operand.vmem [shape: f32[1,16], index: 5, kind: input, shape index: {}]
  %s6 = inlined_call_operand.vmem [shape: f32[1,16], index: 6, kind: input, shape index: {}]
  %s7 = inlined_call_operand.vmem [shape: f32[512,16], index: 7, kind: input, shape index: {}]
  %s8 = inlined_call_operand.vmem [shape: f32[512,16], index: 8, kind: output, shape index: {}]
  %s9 = sld [smem:[#allocation0]]
  $region77: #{bottleneck_forward.5} parent=0
    _
  %s11 = ssub.s32 1, %s9
  %s12 = scalar_select 0, %s11, %s9
  loop: start=0, step=1, limit=6
  $region2: #{bottleneck_forward.5} parent=0 // loop_pre_header
    _
  $region3: #{bottleneck_forward.5} parent=0 // loop_header
    %s14 = sphi 0, %s18
    %p15 = scmp.ge.s32.totalorder %s14, 6
    %s21 = sphi 0, %s33
    %s22 = sphi 0, %s29
    %s23 = sphi 0, %s21
    %s24 = sphi 0, %s22
    %s25 = sphi 0, %s23
    %s26 = sphi 0, %s24
    %s36 = sphi 0, %s38
    %s39 = sphi 0, %s36
    %s40 = sphi 0, %s39
    %s56 = sphi 0, %s40
    %s60 = sphi 0, %s60
    %s62 = sphi 0, %s60
    %s63 = sphi 0, %s62
    %s77 = sphi 0, %s63
    %s81 = sphi 0, %s81
    %s83 = sphi 0, %s81
    %s84 = sphi 0, %s83
    %s98 = sphi 0, %s84
    %s102 = sphi 0, %s102
    %s104 = sphi 0, %s102
    %s105 = sphi 0, %s104
    %s119 = sphi 0, %s105
    %s123 = sphi 0, %s123
    %s125 = sphi 0, %s123
    %s126 = sphi 0, %s125
    %s140 = sphi 0, %s126
    %s144 = sphi 0, %s144
    %s146 = sphi 0, %s144
    %s147 = sphi 0, %s146
    %s161 = sphi 0, %s147
    %s165 = sphi 0, %s165
    %s167 = sphi 0, %s165
    %s168 = sphi 0, %s167
    %s182 = sphi 0, %s168
    %s190 = sphi 0, %s192
    %s193 = sphi 0, %s190
    %s194 = sphi 0, %s193
    %s210 = sphi 0, %s194
    %s218 = sphi 0, %s220
    %s221 = sphi 0, %s218
    %s222 = sphi 0, %s221
    %s238 = sphi 0, %s222
  $region4: #{bottleneck_forward.5} parent=0 // loop_header_branch
    %17 = sbr.rel (%p15) target = $region8
  $region5: #{bottleneck_forward.5} parent=0 // loop_body
    %s19 = ssub.s32 %s14, 1
    %s20 = ssub.s32 %s14, 2
    %s27 = sadd.s32 1, %s22
    %p28 = scmp.ge.s32.totalorder %s27, 2
    %s29 = scalar_select %p28, 0, %s27
    %s30 = sadd.s32 1, %s21
    %s31 = scalar_select %p28, %s30, %s21
    %p32 = scmp.ge.s32.totalorder %s31, 2
    %s33 = scalar_select %p32, 0, %s31
    %s34 = ssub.s32 %s22, %s29
    %p35 = scmp.eq.s32.totalorder %s34, 0
    %s37 = sadd.s32 %s36, 1
    %s38 = scalar_select %p35, %s36, %s37
    %p41 = pneg %p35
    %p42 = scmp.eq.s32.totalorder %s14, 3
    %p43 = por %p41, %p42
    %p44 = scmp.ne.s32.totalorder %s36, %s39
    %p45 = scmp.eq.s32.totalorder %s14, 0
    %p46 = por %p44, %p45
    %p47 = scmp.ne.s32.totalorder %s36, %s39
    %p48 = scmp.eq.s32.totalorder %s19, 3
    %p49 = por %p47, %p48
    %p50 = scmp.ne.s32.totalorder %s39, %s40
    %p51 = scmp.eq.s32.totalorder %s19, 0
    %p52 = por %p50, %p51
    %p53 = scmp.ne.s32.totalorder %s39, %s40
    %p54 = scmp.eq.s32.totalorder %s20, 3
    %p55 = por %p53, %p54
    %p57 = scmp.ne.s32.totalorder %s40, %s56
    %p58 = scmp.eq.s32.totalorder %s20, 0
    %p59 = por %p57, %p58
    %s61 = sadd.s32 %s60, 1
    %p64 = scmp.eq.s32.totalorder %s14, 3
    %p65 = scmp.ne.s32.totalorder %s60, %s62
    %p66 = scmp.eq.s32.totalorder %s14, 0
    %p67 = por %p65, %p66
    %p68 = scmp.ne.s32.totalorder %s60, %s62
    %p69 = scmp.eq.s32.totalorder %s19, 3
    %p70 = por %p68, %p69
    %p71 = scmp.ne.s32.totalorder %s62, %s63
    %p72 = scmp.eq.s32.totalorder %s19, 0
    %p73 = por %p71, %p72
    %p74 = scmp.ne.s32.totalorder %s62, %s63
    %p75 = scmp.eq.s32.totalorder %s20, 3
    %p76 = por %p74, %p75
    %p78 = scmp.ne.s32.totalorder %s63, %s77
    %p79 = scmp.eq.s32.totalorder %s20, 0
    %p80 = por %p78, %p79
    %s82 = sadd.s32 %s81, 1
    %p85 = scmp.eq.s32.totalorder %s14, 3
    %p86 = scmp.ne.s32.totalorder %s81, %s83
    %p87 = scmp.eq.s32.totalorder %s14, 0
    %p88 = por %p86, %p87
    %p89 = scmp.ne.s32.totalorder %s81, %s83
    %p90 = scmp.eq.s32.totalorder %s19, 3
    %p91 = por %p89, %p90
    %p92 = scmp.ne.s32.totalorder %s83, %s84
    %p93 = scmp.eq.s32.totalorder %s19, 0
    %p94 = por %p92, %p93
    %p95 = scmp.ne.s32.totalorder %s83, %s84
    %p96 = scmp.eq.s32.totalorder %s20, 3
    %p97 = por %p95, %p96
    %p99 = scmp.ne.s32.totalorder %s84, %s98
    %p100 = scmp.eq.s32.totalorder %s20, 0
    %p101 = por %p99, %p100
    %s103 = sadd.s32 %s102, 1
    %p106 = scmp.eq.s32.totalorder %s14, 3
    %p107 = scmp.ne.s32.totalorder %s102, %s104
    %p108 = scmp.eq.s32.totalorder %s14, 0
    %p109 = por %p107, %p108
    %p110 = scmp.ne.s32.totalorder %s102, %s104
    %p111 = scmp.eq.s32.totalorder %s19, 3
    %p112 = por %p110, %p111
    %p113 = scmp.ne.s32.totalorder %s104, %s105
    %p114 = scmp.eq.s32.totalorder %s19, 0
    %p115 = por %p113, %p114
    %p116 = scmp.ne.s32.totalorder %s104, %s105
    %p117 = scmp.eq.s32.totalorder %s20, 3
    %p118 = por %p116, %p117
    %p120 = scmp.ne.s32.totalorder %s105, %s119
    %p121 = scmp.eq.s32.totalorder %s20, 0
    %p122 = por %p120, %p121
    %s124 = sadd.s32 %s123, 1
    %p127 = scmp.eq.s32.totalorder %s14, 3
    %p128 = scmp.ne.s32.totalorder %s123, %s125
    %p129 = scmp.eq.s32.totalorder %s14, 0
    %p130 = por %p128, %p129
    %p131 = scmp.ne.s32.totalorder %s123, %s125
    %p132 = scmp.eq.s32.totalorder %s19, 3
    %p133 = por %p131, %p132
    %p134 = scmp.ne.s32.totalorder %s125, %s126
    %p135 = scmp.eq.s32.totalorder %s19, 0
    %p136 = por %p134, %p135
    %p137 = scmp.ne.s32.totalorder %s125, %s126
    %p138 = scmp.eq.s32.totalorder %s20, 3
    %p139 = por %p137, %p138
    %p141 = scmp.ne.s32.totalorder %s126, %s140
    %p142 = scmp.eq.s32.totalorder %s20, 0
    %p143 = por %p141, %p142
    %s145 = sadd.s32 %s144, 1
    %p148 = scmp.eq.s32.totalorder %s14, 3
    %p149 = scmp.ne.s32.totalorder %s144, %s146
    %p150 = scmp.eq.s32.totalorder %s14, 0
    %p151 = por %p149, %p150
    %p152 = scmp.ne.s32.totalorder %s144, %s146
    %p153 = scmp.eq.s32.totalorder %s19, 3
    %p154 = por %p152, %p153
    %p155 = scmp.ne.s32.totalorder %s146, %s147
    %p156 = scmp.eq.s32.totalorder %s19, 0
    %p157 = por %p155, %p156
    %p158 = scmp.ne.s32.totalorder %s146, %s147
    %p159 = scmp.eq.s32.totalorder %s20, 3
    %p160 = por %p158, %p159
    %p162 = scmp.ne.s32.totalorder %s147, %s161
    %p163 = scmp.eq.s32.totalorder %s20, 0
    %p164 = por %p162, %p163
    %s166 = sadd.s32 %s165, 1
    %p169 = scmp.eq.s32.totalorder %s14, 3
    %p170 = scmp.ne.s32.totalorder %s165, %s167
    %p171 = scmp.eq.s32.totalorder %s14, 0
    %p172 = por %p170, %p171
    %p173 = scmp.ne.s32.totalorder %s165, %s167
    %p174 = scmp.eq.s32.totalorder %s19, 3
    %p175 = por %p173, %p174
    %p176 = scmp.ne.s32.totalorder %s167, %s168
    %p177 = scmp.eq.s32.totalorder %s19, 0
    %p178 = por %p176, %p177
    %p179 = scmp.ne.s32.totalorder %s167, %s168
    %p180 = scmp.eq.s32.totalorder %s20, 3
    %p181 = por %p179, %p180
    %p183 = scmp.ne.s32.totalorder %s168, %s182
    %p184 = scmp.eq.s32.totalorder %s20, 0
    %p185 = por %p183, %p184
    %s186 = smul.u32 %s21, %s22
    %s187 = smul.u32 %s33, %s29
    %s188 = ssub.s32 %s186, %s187
    %p189 = scmp.eq.s32.totalorder %s188, 0
    %s191 = sadd.s32 %s190, 1
    %s192 = scalar_select %p189, %s190, %s191
    %p195 = pneg %p189
    %p196 = scmp.eq.s32.totalorder %s14, 3
    %p197 = por %p195, %p196
    %p198 = scmp.ne.s32.totalorder %s190, %s193
    %p199 = scmp.eq.s32.totalorder %s14, 0
    %p200 = por %p198, %p199
    %p201 = scmp.ne.s32.totalorder %s190, %s193
    %p202 = scmp.eq.s32.totalorder %s19, 3
    %p203 = por %p201, %p202
    %p204 = scmp.ne.s32.totalorder %s193, %s194
    %p205 = scmp.eq.s32.totalorder %s19, 0
    %p206 = por %p204, %p205
    %p207 = scmp.ne.s32.totalorder %s193, %s194
    %p208 = scmp.eq.s32.totalorder %s20, 3
    %p209 = por %p207, %p208
    %p211 = scmp.ne.s32.totalorder %s194, %s210
    %p212 = scmp.eq.s32.totalorder %s20, 0
    %p213 = por %p211, %p212
    %s214 = smul.u32 %s21, %s22
    %s215 = smul.u32 %s33, %s29
    %s216 = ssub.s32 %s214, %s215
    %p217 = scmp.eq.s32.totalorder %s216, 0
    %s219 = sadd.s32 %s218, 1
    %s220 = scalar_select %p217, %s218, %s219
    %p223 = pneg %p217
    %p224 = scmp.eq.s32.totalorder %s14, 3
    %p225 = por %p223, %p224
    %p226 = scmp.ne.s32.totalorder %s218, %s221
    %p227 = scmp.eq.s32.totalorder %s14, 0
    %p228 = por %p226, %p227
    %p229 = scmp.ne.s32.totalorder %s218, %s221
    %p230 = scmp.eq.s32.totalorder %s19, 3
    %p231 = por %p229, %p230
    %p232 = scmp.ne.s32.totalorder %s221, %s222
    %p233 = scmp.eq.s32.totalorder %s19, 0
    %p234 = por %p232, %p233
    %p235 = scmp.ne.s32.totalorder %s221, %s222
    %p236 = scmp.eq.s32.totalorder %s20, 3
    %p237 = por %p235, %p236
    %p239 = scmp.ne.s32.totalorder %s222, %s238
    %p240 = scmp.eq.s32.totalorder %s20, 0
    %p241 = por %p239, %p240
    %p242 = scmp.le.s32.totalorder 1, %s14
    %p243 = scmp.lt.s32.totalorder %s14, 5
    %p244 = pnand %p242, %p243
    %p245 = pneg %p244
    // Predicated region
    $region9: #{bottleneck_forward.5} parent=5 // pred_check
      _
    $region10: #{bottleneck_forward.5} parent=5 // pred_check_branch
      %247 = sbr.rel (%p244) target = $region12
    $region11: #{bottleneck_forward.5} parent=5 // pred_region
      %s248 = ssub.s32 %s14, 1
      // Predicated region
      $region13: #{bottleneck_forward.5} parent=11 // pred_check
        %p249 = pneg %p73
      $region14: #{bottleneck_forward.5} parent=11 // pred_check_branch
        %251 = sbr.rel (%p249) target = $region16
      $region15: #{bottleneck_forward.5} parent=11 // pred_region
        _
      $region16: #{bottleneck_forward.5} parent=11 // pred_fallthru
        _
      // Predicated region
      $region17: #{bottleneck_forward.5} parent=11 // pred_check
        %p252 = pneg %p94
      $region18: #{bottleneck_forward.5} parent=11 // pred_check_branch
        %254 = sbr.rel (%p252) target = $region20
      $region19: #{bottleneck_forward.5} parent=11 // pred_region
        _
      $region20: #{bottleneck_forward.5} parent=11 // pred_fallthru
        _
      // Predicated region
      $region21: #{bottleneck_forward.5} parent=11 // pred_check
        %p255 = pneg %p115
      $region22: #{bottleneck_forward.5} parent=11 // pred_check_branch
        %257 = sbr.rel (%p255) target = $region24
      $region23: #{bottleneck_forward.5} parent=11 // pred_region
        _
      $region24: #{bottleneck_forward.5} parent=11 // pred_fallthru
        _
      // Predicated region
      $region25: #{bottleneck_forward.5} parent=11 // pred_check
        %p258 = pneg %p136
      $region26: #{bottleneck_forward.5} parent=11 // pred_check_branch
        %260 = sbr.rel (%p258) target = $region28
      $region27: #{bottleneck_forward.5} parent=11 // pred_region
        _
      $region28: #{bottleneck_forward.5} parent=11 // pred_fallthru
        _
      // Predicated region
      $region29: #{bottleneck_forward.5} parent=11 // pred_check
        %p261 = pneg %p157
      $region30: #{bottleneck_forward.5} parent=11 // pred_check_branch
        %263 = sbr.rel (%p261) target = $region32
      $region31: #{bottleneck_forward.5} parent=11 // pred_region
        _
      $region32: #{bottleneck_forward.5} parent=11 // pred_fallthru
        _
      // Predicated region
      $region33: #{bottleneck_forward.5} parent=11 // pred_check
        %p264 = pneg %p178
      $region34: #{bottleneck_forward.5} parent=11 // pred_check_branch
        %266 = sbr.rel (%p264) target = $region36
      $region35: #{bottleneck_forward.5} parent=11 // pred_region
        _
      $region36: #{bottleneck_forward.5} parent=11 // pred_fallthru
        _
    $region12: #{bottleneck_forward.5} parent=5 // pred_fallthru
      _
    %p267 = scmp.lt.s32.totalorder %s14, 4
    // Predicated region
    $region37: #{bottleneck_forward.5} parent=5 // pred_check
      %p268 = pneg %p267
    $region38: #{bottleneck_forward.5} parent=5 // pred_check_branch
      %270 = sbr.rel (%p268) target = $region40
    $region39: #{bottleneck_forward.5} parent=5 // pred_region
      // Predicated region
      $region41: #{bottleneck_forward.5} parent=39 // pred_check
        %p271 = pneg %p46
      $region42: #{bottleneck_forward.5} parent=39 // pred_check_branch
        %273 = sbr.rel (%p271) target = $region44
      $region43: #{bottleneck_forward.5} parent=39 // pred_region
        %s274 = smul.u32 32, %s22
        %p275 = scmp.lt.s32.totalorder %s274, 63
        %s276 = scalar_select %p275, %s274, 63
        %s277 = smul.addr %s276, 8
        %s278 = scalar_lea.vmem %s0, %s277
        %s279 = smul.u32 32, %s22
      $region44: #{bottleneck_forward.5} parent=39 // pred_fallthru
        _
      // Predicated region
      $region45: #{bottleneck_forward.5} parent=39 // pred_check
        %p280 = pneg %p200
      $region46: #{bottleneck_forward.5} parent=39 // pred_check_branch
        %282 = sbr.rel (%p280) target = $region48
      $region47: #{bottleneck_forward.5} parent=39 // pred_region
        %s283 = smul.u32 %s21, %s22
        %s284 = smul.u32 32, %s283
        %p285 = scmp.lt.s32.totalorder %s284, 63
        %s286 = scalar_select %p285, %s284, 63
        %s287 = smul.addr %s286, 8
        %s288 = scalar_lea.vmem %s7, %s287
        %s289 = smul.u32 %s21, %s22
        %s290 = smul.u32 32, %s289
      $region48: #{bottleneck_forward.5} parent=39 // pred_fallthru
        _
    $region40: #{bottleneck_forward.5} parent=5 // pred_fallthru
      _
    %p291 = scmp.le.s32.totalorder 1, %s14
    %p292 = scmp.lt.s32.totalorder %s14, 5
    %p293 = pnand %p291, %p292
    %p294 = pneg %p293
    // Predicated region
    $region49: #{bottleneck_forward.5} parent=5 // pred_check
      _
    $region50: #{bottleneck_forward.5} parent=5 // pred_check_branch
      %296 = sbr.rel (%p293) target = $region52
    $region51: #{bottleneck_forward.5} parent=5 // pred_region
      %s297 = ssub.s32 %s14, 1
      %s298 = smul.u32 32, %s24
      %p299 = scmp.lt.s32.totalorder %s298, 63
      %s300 = scalar_select %p299, %s298, 63
      %s301 = smul.addr %s300, 8
      %s302 = scalar_lea.vmem %s0, %s301
      %p303 = pneg %p52
      %p304 = pneg %p49
      %p305 = pneg %p73
      %p306 = pneg %p70
      %p307 = pneg %p94
      %p308 = pneg %p91
      %p309 = pneg %p115
      %p310 = pneg %p112
      %p311 = pneg %p136
      %p312 = pneg %p133
      %p313 = pneg %p157
      %p314 = pneg %p154
      %p315 = pneg %p178
      %p316 = pneg %p175
      %s317 = smul.u32 %s23, %s24
      %s318 = smul.u32 32, %s317
      %p319 = scmp.lt.s32.totalorder %s318, 63
      %s320 = scalar_select %p319, %s318, 63
      %s321 = smul.addr %s320, 8
      %s322 = scalar_lea.vmem %s7, %s321
      %p323 = pneg %p206
      %p324 = pneg %p203
      %p325 = pneg %p234
      %p326 = pneg %p231
      %s327 = smul.u32 %s23, %s24
      %s328 = smul.u32 32, %s327
      %p329 = scmp.lt.s32.totalorder %s328, 63
      %s330 = scalar_select %p329, %s328, 63
      %s331 = smul.addr %s330, 8
      %s332 = scalar_lea.vmem %s8, %s331
      %s333 = smul.u32 32, %s24
      %p334 = scmp.lt.s32.totalorder %s333, 63
      %s335 = scalar_select %p334, %s333, 63
      %s336 = smul.addr %s335, 8
      %s337 = scalar_lea.vmem %s0, %s336
      %s338 = smul.u32 32, %s24
      %s339 = smul.u32 %s23, %s24
      %s340 = smul.u32 32, %s339
      %p341 = scmp.lt.s32.totalorder %s340, 63
      %s342 = scalar_select %p341, %s340, 63
      %s343 = smul.addr %s342, 8
      %s344 = scalar_lea.vmem %s7, %s343
      %s345 = smul.u32 %s23, %s24
      %s346 = smul.u32 32, %s345
      %s347 = smul.u32 %s23, %s24
      %s348 = smul.u32 32, %s347
      %p349 = scmp.lt.s32.totalorder %s348, 63
      %s350 = scalar_select %p349, %s348, 63
      %s351 = smul.addr %s350, 8
      %s352 = scalar_lea.vmem %s8, %s351
      %s353 = smul.u32 %s23, %s24
      %s354 = smul.u32 32, %s353
      %v356 = vld [vmem:[%s2] sm:$0x3]
      %v357 = vld [vmem:[%s3] sm:$0x1]
      %v358 = vld [vmem:[%s4] sm:$0x1]
      %v359 = vmul.f32 %v356, 0.001953125
      %v360 = vmul.f32 %v359, %v359
      %v362 = vrot.slane %v360, 7
      %v364 = vsub.f32 %v359, %v362
      %v365 = vmax.f32 %v364, 0.0
      %v366 = vadd.f32 %v365, 1e-05
      %v367 = vrsqrt.pop %v366
      %v370 = vunpack.c.l.s4 1966171168
      %v371 = vunpack.c.0.s8 %v370
      %v372 = vlaneseq
      %v373 = vshrl.u32 %v372, 7
      %v374 = vsub.s32 %v371, %v373
      %v375 = vrot.slane %v367, %v374
      %v376 = vcombine.high %v375, %v375
      %v378 = vunpack.c.l.s4 1966171168
      %v379 = vunpack.c.0.s8 %v378
      %v380 = vlaneseq
      %v381 = vshrl.u32 %v380, 7
      %v382 = vsub.s32 %v379, %v381
      %v383 = vrot.slane %v376, %v382
      %v385 = vmul.f32 %v357, %v383
      %v386 = vmul.f32 %v359, %v385
      %v387 = vsub.f32 %v358, %v386
      %v388 = vld [vmem:[%s337] sm:$0xff]
      %v389 = vld [vmem:[%s337 + $0x8] sm:$0xff]
      %v390 = vld [vmem:[%s337 + $0x10] sm:$0xff]
      %v391 = vld [vmem:[%s337 + $0x18] sm:$0xff]
      %v392 = vld [vmem:[%s337 + $0x20] sm:$0xff]
      %v393 = vld [vmem:[%s337 + $0x28] sm:$0xff]
      %v394 = vld [vmem:[%s337 + $0x30] sm:$0xff]
      %v395 = vld [vmem:[%s337 + $0x38] sm:$0xff]
      %v396 = vld [vmem:[%s337 + $0x40] sm:$0xff]
      %v397 = vld [vmem:[%s337 + $0x48] sm:$0xff]
      %v398 = vld [vmem:[%s337 + $0x50] sm:$0xff]
      %v399 = vld [vmem:[%s337 + $0x58] sm:$0xff]
      %v400 = vld [vmem:[%s337 + $0x60] sm:$0xff]
      %v401 = vld [vmem:[%s337 + $0x68] sm:$0xff]
      %v402 = vld [vmem:[%s337 + $0x70] sm:$0xff]
      %v403 = vld [vmem:[%s337 + $0x78] sm:$0xff]
      %v404 = vld [vmem:[%s337 + $0x80] sm:$0xff]
      %v405 = vld [vmem:[%s337 + $0x88] sm:$0xff]
      %v406 = vld [vmem:[%s337 + $0x90] sm:$0xff]
      %v407 = vld [vmem:[%s337 + $0x98] sm:$0xff]
      %v408 = vld [vmem:[%s337 + $0xa0] sm:$0xff]
      %v409 = vld [vmem:[%s337 + $0xa8] sm:$0xff]
      %v410 = vld [vmem:[%s337 + $0xb0] sm:$0xff]
      %v411 = vld [vmem:[%s337 + $0xb8] sm:$0xff]
      %v412 = vld [vmem:[%s337 + $0xc0] sm:$0xff]
      %v413 = vld [vmem:[%s337 + $0xc8] sm:$0xff]
      %v414 = vld [vmem:[%s337 + $0xd0] sm:$0xff]
      %v415 = vld [vmem:[%s337 + $0xd8] sm:$0xff]
      %v416 = vld [vmem:[%s337 + $0xe0] sm:$0xff]
      %v417 = vld [vmem:[%s337 + $0xe8] sm:$0xff]
      %v418 = vld [vmem:[%s337 + $0xf0] sm:$0xff]
      %v419 = vld [vmem:[%s337 + $0xf8] sm:$0xff]
      %v421 = vlaneseq
      %v422 = vshrl.u32 %v421, 7
      %v423 = vsub.s32 0, %v422
      %v424 = vrot.slane %v385, %v423
      %v426 = vmul.f32 %v388, %v424
      %v427 = vmul.f32 %v389, %v424
      %v428 = vmul.f32 %v390, %v424
      %v429 = vmul.f32 %v391, %v424
      %v430 = vmul.f32 %v392, %v424
      %v431 = vmul.f32 %v393, %v424
      %v432 = vmul.f32 %v394, %v424
      %v433 = vmul.f32 %v395, %v424
      %v434 = vmul.f32 %v396, %v424
      %v435 = vmul.f32 %v397, %v424
      %v436 = vmul.f32 %v398, %v424
      %v437 = vmul.f32 %v399, %v424
      %v438 = vmul.f32 %v400, %v424
      %v439 = vmul.f32 %v401, %v424
      %v440 = vmul.f32 %v402, %v424
      %v441 = vmul.f32 %v403, %v424
      %v442 = vmul.f32 %v404, %v424
      %v443 = vmul.f32 %v405, %v424
      %v444 = vmul.f32 %v406, %v424
      %v445 = vmul.f32 %v407, %v424
      %v446 = vmul.f32 %v408, %v424
      %v447 = vmul.f32 %v409, %v424
      %v448 = vmul.f32 %v410, %v424
      %v449 = vmul.f32 %v411, %v424
      %v450 = vmul.f32 %v412, %v424
      %v451 = vmul.f32 %v413, %v424
      %v452 = vmul.f32 %v414, %v424
      %v453 = vmul.f32 %v415, %v424
      %v454 = vmul.f32 %v416, %v424
      %v455 = vmul.f32 %v417, %v424
      %v456 = vmul.f32 %v418, %v424
      %v457 = vmul.f32 %v419, %v424
      %v459 = vlaneseq
      %v460 = vshrl.u32 %v459, 7
      %v461 = vsub.s32 0, %v460
      %v462 = vrot.slane %v387, %v461
      %v464 = vadd.f32 %v426, %v462
      %v465 = vadd.f32 %v427, %v462
      %v466 = vadd.f32 %v428, %v462
      %v467 = vadd.f32 %v429, %v462
      %v468 = vadd.f32 %v430, %v462
      %v469 = vadd.f32 %v431, %v462
      %v470 = vadd.f32 %v432, %v462
      %v471 = vadd.f32 %v433, %v462
      %v472 = vadd.f32 %v434, %v462
      %v473 = vadd.f32 %v435, %v462
      %v474 = vadd.f32 %v436, %v462
      %v475 = vadd.f32 %v437, %v462
      %v476 = vadd.f32 %v438, %v462
      %v477 = vadd.f32 %v439, %v462
      %v478 = vadd.f32 %v440, %v462
      %v479 = vadd.f32 %v441, %v462
      %v480 = vadd.f32 %v442, %v462
      %v481 = vadd.f32 %v443, %v462
      %v482 = vadd.f32 %v444, %v462
      %v483 = vadd.f32 %v445, %v462
      %v484 = vadd.f32 %v446, %v462
      %v485 = vadd.f32 %v447, %v462
      %v486 = vadd.f32 %v448, %v462
      %v487 = vadd.f32 %v449, %v462
      %v488 = vadd.f32 %v450, %v462
      %v489 = vadd.f32 %v451, %v462
      %v490 = vadd.f32 %v452, %v462
      %v491 = vadd.f32 %v453, %v462
      %v492 = vadd.f32 %v454, %v462
      %v493 = vadd.f32 %v455, %v462
      %v494 = vadd.f32 %v456, %v462
      %v495 = vadd.f32 %v457, %v462
      %vm496 = vcmp.gt.f32.partialorder %v464, 0.0
      %vm497 = vcmp.gt.f32.partialorder %v465, 0.0
      %vm498 = vcmp.gt.f32.partialorder %v466, 0.0
      %vm499 = vcmp.gt.f32.partialorder %v467, 0.0
      %vm500 = vcmp.gt.f32.partialorder %v468, 0.0
      %vm501 = vcmp.gt.f32.partialorder %v469, 0.0
      %vm502 = vcmp.gt.f32.partialorder %v470, 0.0
      %vm503 = vcmp.gt.f32.partialorder %v471, 0.0
      %vm504 = vcmp.gt.f32.partialorder %v472, 0.0
      %vm505 = vcmp.gt.f32.partialorder %v473, 0.0
      %vm506 = vcmp.gt.f32.partialorder %v474, 0.0
      %vm507 = vcmp.gt.f32.partialorder %v475, 0.0
      %vm508 = vcmp.gt.f32.partialorder %v476, 0.0
      %vm509 = vcmp.gt.f32.partialorder %v477, 0.0
      %vm510 = vcmp.gt.f32.partialorder %v478, 0.0
      %vm511 = vcmp.gt.f32.partialorder %v479, 0.0
      %vm512 = vcmp.gt.f32.partialorder %v480, 0.0
      %vm513 = vcmp.gt.f32.partialorder %v481, 0.0
      %vm514 = vcmp.gt.f32.partialorder %v482, 0.0
      %vm515 = vcmp.gt.f32.partialorder %v483, 0.0
      %vm516 = vcmp.gt.f32.partialorder %v484, 0.0
      %vm517 = vcmp.gt.f32.partialorder %v485, 0.0
      %vm518 = vcmp.gt.f32.partialorder %v486, 0.0
      %vm519 = vcmp.gt.f32.partialorder %v487, 0.0
      %vm520 = vcmp.gt.f32.partialorder %v488, 0.0
      %vm521 = vcmp.gt.f32.partialorder %v489, 0.0
      %vm522 = vcmp.gt.f32.partialorder %v490, 0.0
      %vm523 = vcmp.gt.f32.partialorder %v491, 0.0
      %vm524 = vcmp.gt.f32.partialorder %v492, 0.0
      %vm525 = vcmp.gt.f32.partialorder %v493, 0.0
      %vm526 = vcmp.gt.f32.partialorder %v494, 0.0
      %vm527 = vcmp.gt.f32.partialorder %v495, 0.0
      %v528 = vmul.f32 %v464, 0.1
      %v529 = vmul.f32 %v465, 0.1
      %v530 = vmul.f32 %v466, 0.1
      %v531 = vmul.f32 %v467, 0.1
      %v532 = vmul.f32 %v468, 0.1
      %v533 = vmul.f32 %v469, 0.1
      %v534 = vmul.f32 %v470, 0.1
      %v535 = vmul.f32 %v471, 0.1
      %v536 = vmul.f32 %v472, 0.1
      %v537 = vmul.f32 %v473, 0.1
      %v538 = vmul.f32 %v474, 0.1
      %v539 = vmul.f32 %v475, 0.1
      %v540 = vmul.f32 %v476, 0.1
      %v541 = vmul.f32 %v477, 0.1
      %v542 = vmul.f32 %v478, 0.1
      %v543 = vmul.f32 %v479, 0.1
      %v544 = vmul.f32 %v480, 0.1
      %v545 = vmul.f32 %v481, 0.1
      %v546 = vmul.f32 %v482, 0.1
      %v547 = vmul.f32 %v483, 0.1
      %v548 = vmul.f32 %v484, 0.1
      %v549 = vmul.f32 %v485, 0.1
      %v550 = vmul.f32 %v486, 0.1
      %v551 = vmul.f32 %v487, 0.1
      %v552 = vmul.f32 %v488, 0.1
      %v553 = vmul.f32 %v489, 0.1
      %v554 = vmul.f32 %v490, 0.1
      %v555 = vmul.f32 %v491, 0.1
      %v556 = vmul.f32 %v492, 0.1
      %v557 = vmul.f32 %v493, 0.1
      %v558 = vmul.f32 %v494, 0.1
      %v559 = vmul.f32 %v495, 0.1
      %v560 = vsel %vm496, %v464, %v528
      %v561 = vsel %vm497, %v465, %v529
      %v562 = vsel %vm498, %v466, %v530
      %v563 = vsel %vm499, %v467, %v531
      %v564 = vsel %vm500, %v468, %v532
      %v565 = vsel %vm501, %v469, %v533
      %v566 = vsel %vm502, %v470, %v534
      %v567 = vsel %vm503, %v471, %v535
      %v568 = vsel %vm504, %v472, %v536
      %v569 = vsel %vm505, %v473, %v537
      %v570 = vsel %vm506, %v474, %v538
      %v571 = vsel %vm507, %v475, %v539
      %v572 = vsel %vm508, %v476, %v540
      %v573 = vsel %vm509, %v477, %v541
      %v574 = vsel %vm510, %v478, %v542
      %v575 = vsel %vm511, %v479, %v543
      %v576 = vsel %vm512, %v480, %v544
      %v577 = vsel %vm513, %v481, %v545
      %v578 = vsel %vm514, %v482, %v546
      %v579 = vsel %vm515, %v483, %v547
      %v580 = vsel %vm516, %v484, %v548
      %v581 = vsel %vm517, %v485, %v549
      %v582 = vsel %vm518, %v486, %v550
      %v583 = vsel %vm519, %v487, %v551
      %v584 = vsel %vm520, %v488, %v552
      %v585 = vsel %vm521, %v489, %v553
      %v586 = vsel %vm522, %v490, %v554
      %v587 = vsel %vm523, %v491, %v555
      %v588 = vsel %vm524, %v492, %v556
      %v589 = vsel %vm525, %v493, %v557
      %v590 = vsel %vm526, %v494, %v558
      %v591 = vsel %vm527, %v495, %v559
      %v592 = vpack.c.bf16 %v561, %v560
      %v593 = vpack.c.bf16 %v563, %v562
      %v594 = vpack.c.bf16 %v565, %v564
      %v595 = vpack.c.bf16 %v567, %v566
      %v596 = vpack.c.bf16 %v569, %v568
      %v597 = vpack.c.bf16 %v571, %v570
      %v598 = vpack.c.bf16 %v573, %v572
      %v599 = vpack.c.bf16 %v575, %v574
      %v600 = vpack.c.bf16 %v577, %v576
      %v601 = vpack.c.bf16 %v579, %v578
      %v602 = vpack.c.bf16 %v581, %v580
      %v603 = vpack.c.bf16 %v583, %v582
      %v604 = vpack.c.bf16 %v585, %v584
      %v605 = vpack.c.bf16 %v587, %v586
      %v606 = vpack.c.bf16 %v589, %v588
      %v607 = vpack.c.bf16 %v591, %v590
      %v608 = vld [vmem:[%s1] sm:$0x3]
      %vm609 = vcmask 31744
      %v611 = vsel %vm609, %v592, 0
      %v614 = vsel %vm609, %v593, 0
      %v617 = vsel %vm609, %v594, 0
      %v620 = vsel %vm609, %v595, 0
      %v623 = vsel %vm609, %v596, 0
      %v626 = vsel %vm609, %v597, 0
      %v629 = vsel %vm609, %v598, 0
      %v632 = vsel %vm609, %v599, 0
      %v635 = vsel %vm609, %v600, 0
      %v638 = vsel %vm609, %v601, 0
      %v641 = vsel %vm609, %v602, 0
      %v644 = vsel %vm609, %v603, 0
      %v647 = vsel %vm609, %v604, 0
      %v650 = vsel %vm609, %v605, 0
      %v653 = vsel %vm609, %v606, 0
      %v656 = vsel %vm609, %v607, 0
      %vm658 = vcmask 1041408
      %v660 = vsel %vm658, %v608, 0
      %662 = vmatprep.subr.bf16.mxu0 0
      %663 = vmatpush1.bf16.msra.mxu0 %v660
      %664 = vmatprep.subr.bf16.mxu0 0
      %665 = vmatpush1.bf16.msra.mxu0 0
      %666 = vmatprep.subr.bf16.mxu0 0
      %667 = vmatpush1.bf16.msra.mxu0 0
      %668 = vmatprep.subr.bf16.mxu0 0
      %669 = vmatpush1.bf16.msra.mxu0 0
      %670 = vmatprep.subr.bf16.mxu0 0
      %671 = vmatpush1.bf16.msra.mxu0 0
      %672 = vmatprep.subr.bf16.mxu0 0
      %673 = vmatpush1.bf16.msra.mxu0 0
      %674 = vmatprep.subr.bf16.mxu0 0
      %675 = vmatpush1.bf16.msra.mxu0 0
      %676 = vmatprep.subr.bf16.mxu0 0
      %677 = vmatpush1.bf16.msra.mxu0 0
      %678 = vmatprep.subr.bf16.mxu0 0
      %679 = vmatpush1.bf16.msra.mxu0 0
      %680 = vmatprep.subr.bf16.mxu0 0
      %681 = vmatpush1.bf16.msra.mxu0 0
      %682 = vmatprep.subr.bf16.mxu0 0
      %683 = vmatpush1.bf16.msra.mxu0 0
      %684 = vmatprep.subr.bf16.mxu0 0
      %685 = vmatpush1.bf16.msra.mxu0 0
      %686 = vmatprep.subr.bf16.mxu0 0
      %687 = vmatpush1.bf16.msra.mxu0 0
      %688 = vmatprep.subr.bf16.mxu0 0
      %689 = vmatpush1.bf16.msra.mxu0 0
      %690 = vmatprep.subr.bf16.mxu0 0
      %691 = vmatpush1.bf16.msra.mxu0 0
      %692 = vmatprep.subr.bf16.mxu0 0
      %693 = vmatpush1.bf16.msra.mxu0 0
      %694 = vmatprep.mubr.bf16.mxu0 0
      %695 = vmatmul.mubr.bf16.gmra.mrb[0].mxu0 %v611
      %v696 = vpop.f32.mrb[0].mxu0
      %v697 = vadd.f32 0.0, %v696
      %v698 = vpop.f32.mrb[0].mxu0
      %v699 = vpop.f32.mrb[0].mxu0
      %v700 = vadd.f32 0.0, %v699
      %v701 = vpop.f32.mrb[0].mxu0
      %702 = vmatprep.mubr.bf16.mxu0 0
      %703 = vmatmul.mubr.bf16.gmra.mrb[0].mxu0 %v614
      %v704 = vpop.f32.mrb[0].mxu0
      %v705 = vadd.f32 0.0, %v704
      %v706 = vpop.f32.mrb[0].mxu0
      %v707 = vpop.f32.mrb[0].mxu0
      %v708 = vadd.f32 0.0, %v707
      %v709 = vpop.f32.mrb[0].mxu0
      %710 = vmatprep.mubr.bf16.mxu0 0
      %711 = vmatmul.mubr.bf16.gmra.mrb[0].mxu0 %v617
      %v712 = vpop.f32.mrb[0].mxu0
      %v713 = vadd.f32 0.0, %v712
      %v714 = vpop.f32.mrb[0].mxu0
      %v715 = vpop.f32.mrb[0].mxu0
      %v716 = vadd.f32 0.0, %v715
      %v717 = vpop.f32.mrb[0].mxu0
      %718 = vmatprep.mubr.bf16.mxu0 0
      %719 = vmatmul.mubr.bf16.gmra.mrb[0].mxu0 %v620
      %v720 = vpop.f32.mrb[0].mxu0
      %v721 = vadd.f32 0.0, %v720
      %v722 = vpop.f32.mrb[0].mxu0
      %v723 = vpop.f32.mrb[0].mxu0
      %v724 = vadd.f32 0.0, %v723
      %v725 = vpop.f32.mrb[0].mxu0
      %726 = vmatprep.mubr.bf16.mxu0 0
      %727 = vmatmul.mubr.bf16.gmra.mrb[0].mxu0 %v623
      %v728 = vpop.f32.mrb[0].mxu0
      %v729 = vadd.f32 0.0, %v728
      %v730 = vpop.f32.mrb[0].mxu0
      %v731 = vpop.f32.mrb[0].mxu0
      %v732 = vadd.f32 0.0, %v731
      %v733 = vpop.f32.mrb[0].mxu0
      %734 = vmatprep.mubr.bf16.mxu0 0
      %735 = vmatmul.mubr.bf16.gmra.mrb[0].mxu0 %v626
      %v736 = vpop.f32.mrb[0].mxu0
      %v737 = vadd.f32 0.0, %v736
      %v738 = vpop.f32.mrb[0].mxu0
      %v739 = vpop.f32.mrb[0].mxu0
      %v740 = vadd.f32 0.0, %v739
      %v741 = vpop.f32.mrb[0].mxu0
      %742 = vmatprep.mubr.bf16.mxu0 0
      %743 = vmatmul.mubr.bf16.gmra.mrb[0].mxu0 %v629
      %v744 = vpop.f32.mrb[0].mxu0
      %v745 = vadd.f32 0.0, %v744
      %v746 = vpop.f32.mrb[0].mxu0
      %v747 = vpop.f32.mrb[0].mxu0
      %v748 = vadd.f32 0.0, %v747
      %v749 = vpop.f32.mrb[0].mxu0
      %750 = vmatprep.mubr.bf16.mxu0 0
      %751 = vmatmul.mubr.bf16.gmra.mrb[0].mxu0 %v632
      %v752 = vpop.f32.mrb[0].mxu0
      %v753 = vadd.f32 0.0, %v752
      %v754 = vpop.f32.mrb[0].mxu0
      %v755 = vpop.f32.mrb[0].mxu0
      %v756 = vadd.f32 0.0, %v755
      %v757 = vpop.f32.mrb[0].mxu0
      %758 = vmatprep.mubr.bf16.mxu0 0
      %759 = vmatmul.mubr.bf16.gmra.mrb[0].mxu0 %v635
      %v760 = vpop.f32.mrb[0].mxu0
      %v761 = vadd.f32 0.0, %v760
      %v762 = vpop.f32.mrb[0].mxu0
      %v763 = vpop.f32.mrb[0].mxu0
      %v764 = vadd.f32 0.0, %v763
      %v765 = vpop.f32.mrb[0].mxu0
      %766 = vmatprep.mubr.bf16.mxu0 0
      %767 = vmatmul.mubr.bf16.gmra.mrb[0].mxu0 %v638
      %v768 = vpop.f32.mrb[0].mxu0
      %v769 = vadd.f32 0.0, %v768
      %v770 = vpop.f32.mrb[0].mxu0
      %v771 = vpop.f32.mrb[0].mxu0
      %v772 = vadd.f32 0.0, %v771
      %v773 = vpop.f32.mrb[0].mxu0
      %774 = vmatprep.mubr.bf16.mxu0 0
      %775 = vmatmul.mubr.bf16.gmra.mrb[0].mxu0 %v641
      %v776 = vpop.f32.mrb[0].mxu0
      %v777 = vadd.f32 0.0, %v776
      %v778 = vpop.f32.mrb[0].mxu0
      %v779 = vpop.f32.mrb[0].mxu0
      %v780 = vadd.f32 0.0, %v779
      %v781 = vpop.f32.mrb[0].mxu0
      %782 = vmatprep.mubr.bf16.mxu0 0
      %783 = vmatmul.mubr.bf16.gmra.mrb[0].mxu0 %v644
      %v784 = vpop.f32.mrb[0].mxu0
      %v785 = vadd.f32 0.0, %v784
      %v786 = vpop.f32.mrb[0].mxu0
      %v787 = vpop.f32.mrb[0].mxu0
      %v788 = vadd.f32 0.0, %v787
      %v789 = vpop.f32.mrb[0].mxu0
      %790 = vmatprep.mubr.bf16.mxu0 0
      %791 = vmatmul.mubr.bf16.gmra.mrb[0].mxu0 %v647
      %v792 = vpop.f32.mrb[0].mxu0
      %v793 = vadd.f32 0.0, %v792
      %v794 = vpop.f32.mrb[0].mxu0
      %v795 = vpop.f32.mrb[0].mxu0
      %v796 = vadd.f32 0.0, %v795
      %v797 = vpop.f32.mrb[0].mxu0
      %798 = vmatprep.mubr.bf16.mxu0 0
      %799 = vmatmul.mubr.bf16.gmra.mrb[0].mxu0 %v650
      %v800 = vpop.f32.mrb[0].mxu0
      %v801 = vadd.f32 0.0, %v800
      %v802 = vpop.f32.mrb[0].mxu0
      %v803 = vpop.f32.mrb[0].mxu0
      %v804 = vadd.f32 0.0, %v803
      %v805 = vpop.f32.mrb[0].mxu0
      %806 = vmatprep.mubr.bf16.mxu0 0
      %807 = vmatmul.mubr.bf16.gmra.mrb[0].mxu0 %v653
      %v808 = vpop.f32.mrb[0].mxu0
      %v809 = vadd.f32 0.0, %v808
      %v810 = vpop.f32.mrb[0].mxu0
      %v811 = vpop.f32.mrb[0].mxu0
      %v812 = vadd.f32 0.0, %v811
      %v813 = vpop.f32.mrb[0].mxu0
      %814 = vmatprep.mubr.bf16.mxu0 0
      %815 = vmatmul.mubr.bf16.gmra.mrb[0].mxu0 %v656
      %v816 = vpop.f32.mrb[0].mxu0
      %v817 = vadd.f32 0.0, %v816
      %v818 = vpop.f32.mrb[0].mxu0
      %v819 = vpop.f32.mrb[0].mxu0
      %v820 = vadd.f32 0.0, %v819
      %v821 = vpop.f32.mrb[0].mxu0
      %822 = vdwg.mxu0
      %p823 = scmp.eq.s32.totalorder %s23, 0
      %p824 = scmp.eq.s32.totalorder %s24, 0
      %p825 = pnand %p823, %p824
      %p826 = pneg %p825
      // Predicated region
      $region53: #{bottleneck_forward.5} parent=51 // pred_check
        _
      $region54: #{bottleneck_forward.5} parent=51 // pred_check_branch
        %828 = sbr.rel (%p825) target = $region56
      $region55: #{bottleneck_forward.5} parent=51 // pred_region
        %vm829 = vcmask 123904
        %830 = vst.msk [vmem:[#allocation2] sm:$0x3] %vm829, 0.0
      $region56: #{bottleneck_forward.5} parent=51 // pred_fallthru
        _
      // Predicated region
      $region57: #{bottleneck_forward.5} parent=51 // pred_check
        %p831 = pneg %p823
      $region58: #{bottleneck_forward.5} parent=51 // pred_check_branch
        %833 = sbr.rel (%p831) target = $region60
      $region59: #{bottleneck_forward.5} parent=51 // pred_region
        %v834 = vld [vmem:[#allocation2] sm:$0x3]
        %vm835 = vcmask 130048
        %v836 = vsel %vm835, %v697, 0.0
        %v837 = vsel %vm835, %v700, 0.0
        %v838 = vadd.f32 %v836, %v837
        %v839 = vsel %vm835, %v705, 0.0
        %v840 = vadd.f32 %v838, %v839
        %v841 = vsel %vm835, %v708, 0.0
        %v842 = vadd.f32 %v840, %v841
        %v843 = vsel %vm835, %v713, 0.0
        %v844 = vadd.f32 %v842, %v843
        %v845 = vsel %vm835, %v716, 0.0
        %v846 = vadd.f32 %v844, %v845
        %v847 = vsel %vm835, %v721, 0.0
        %v848 = vadd.f32 %v846, %v847
        %v849 = vsel %vm835, %v724, 0.0
        %v850 = vadd.f32 %v848, %v849
        %v851 = vsel %vm835, %v729, 0.0
        %v852 = vadd.f32 %v850, %v851
        %v853 = vsel %vm835, %v732, 0.0
        %v854 = vadd.f32 %v852, %v853
        %v855 = vsel %vm835, %v737, 0.0
        %v856 = vadd.f32 %v854, %v855
        %v857 = vsel %vm835, %v740, 0.0
        %v858 = vadd.f32 %v856, %v857
        %v859 = vsel %vm835, %v745, 0.0
        %v860 = vadd.f32 %v858, %v859
        %v861 = vsel %vm835, %v748, 0.0
        %v862 = vadd.f32 %v860, %v861
        %v863 = vsel %vm835, %v753, 0.0
        %v864 = vadd.f32 %v862, %v863
        %v865 = vsel %vm835, %v756, 0.0
        %v866 = vadd.f32 %v864, %v865
        %v867 = vsel %vm835, %v761, 0.0
        %v868 = vadd.f32 %v866, %v867
        %v869 = vsel %vm835, %v764, 0.0
        %v870 = vadd.f32 %v868, %v869
        %v871 = vsel %vm835, %v769, 0.0
        %v872 = vadd.f32 %v870, %v871
        %v873 = vsel %vm835, %v772, 0.0
        %v874 = vadd.f32 %v872, %v873
        %v875 = vsel %vm835, %v777, 0.0
        %v876 = vadd.f32 %v874, %v875
        %v877 = vsel %vm835, %v780, 0.0
        %v878 = vadd.f32 %v876, %v877
        %v879 = vsel %vm835, %v785, 0.0
        %v880 = vadd.f32 %v878, %v879
        %v881 = vsel %vm835, %v788, 0.0
        %v882 = vadd.f32 %v880, %v881
        %v883 = vsel %vm835, %v793, 0.0
        %v884 = vadd.f32 %v882, %v883
        %v885 = vsel %vm835, %v796, 0.0
        %v886 = vadd.f32 %v884, %v885
        %v887 = vsel %vm835, %v801, 0.0
        %v888 = vadd.f32 %v886, %v887
        %v889 = vsel %vm835, %v804, 0.0
        %v890 = vadd.f32 %v888, %v889
        %v891 = vsel %vm835, %v809, 0.0
        %v892 = vadd.f32 %v890, %v891
        %v893 = vsel %vm835, %v812, 0.0
        %v894 = vadd.f32 %v892, %v893
        %v895 = vsel %vm835, %v817, 0.0
        %v896 = vadd.f32 %v894, %v895
        %v897 = vsel %vm835, %v820, 0.0
        %v898 = vadd.f32 %v896, %v897
        %v899 = vrot.slane %v898, 4
        %v900 = vadd.f32 %v898, %v899
        %v901 = vrot.slane %v900, 2
        %v902 = vadd.f32 %v900, %v901
        %v903 = vrot.slane %v902, 1
        %v904 = vadd.f32 %v902, %v903
        %v905 = vmul.f32 %v697, %v697
        %v906 = vmul.f32 %v700, %v700
        %v907 = vmul.f32 %v705, %v705
        %v908 = vmul.f32 %v708, %v708
        %v909 = vmul.f32 %v713, %v713
        %v910 = vmul.f32 %v716, %v716
        %v911 = vmul.f32 %v721, %v721
        %v912 = vmul.f32 %v724, %v724
        %v913 = vmul.f32 %v729, %v729
        %v914 = vmul.f32 %v732, %v732
        %v915 = vmul.f32 %v737, %v737
        %v916 = vmul.f32 %v740, %v740
        %v917 = vmul.f32 %v745, %v745
        %v918 = vmul.f32 %v748, %v748
        %v919 = vmul.f32 %v753, %v753
        %v920 = vmul.f32 %v756, %v756
        %v921 = vmul.f32 %v761, %v761
        %v922 = vmul.f32 %v764, %v764
        %v923 = vmul.f32 %v769, %v769
        %v924 = vmul.f32 %v772, %v772
        %v925 = vmul.f32 %v777, %v777
        %v926 = vmul.f32 %v780, %v780
        %v927 = vmul.f32 %v785, %v785
        %v928 = vmul.f32 %v788, %v788
        %v929 = vmul.f32 %v793, %v793
        %v930 = vmul.f32 %v796, %v796
        %v931 = vmul.f32 %v801, %v801
        %v932 = vmul.f32 %v804, %v804
        %v933 = vmul.f32 %v809, %v809
        %v934 = vmul.f32 %v812, %v812
        %v935 = vmul.f32 %v817, %v817
        %v936 = vmul.f32 %v820, %v820
        %v937 = vsel %vm835, %v905, 0.0
        %v938 = vsel %vm835, %v906, 0.0
        %v939 = vadd.f32 %v937, %v938
        %v940 = vsel %vm835, %v907, 0.0
        %v941 = vadd.f32 %v939, %v940
        %v942 = vsel %vm835, %v908, 0.0
        %v943 = vadd.f32 %v941, %v942
        %v944 = vsel %vm835, %v909, 0.0
        %v945 = vadd.f32 %v943, %v944
        %v946 = vsel %vm835, %v910, 0.0
        %v947 = vadd.f32 %v945, %v946
        %v948 = vsel %vm835, %v911, 0.0
        %v949 = vadd.f32 %v947, %v948
        %v950 = vsel %vm835, %v912, 0.0
        %v951 = vadd.f32 %v949, %v950
        %v952 = vsel %vm835, %v913, 0.0
        %v953 = vadd.f32 %v951, %v952
        %v954 = vsel %vm835, %v914, 0.0
        %v955 = vadd.f32 %v953, %v954
        %v956 = vsel %vm835, %v915, 0.0
        %v957 = vadd.f32 %v955, %v956
        %v958 = vsel %vm835, %v916, 0.0
        %v959 = vadd.f32 %v957, %v958
        %v960 = vsel %vm835, %v917, 0.0
        %v961 = vadd.f32 %v959, %v960
        %v962 = vsel %vm835, %v918, 0.0
        %v963 = vadd.f32 %v961, %v962
        %v964 = vsel %vm835, %v919, 0.0
        %v965 = vadd.f32 %v963, %v964
        %v966 = vsel %vm835, %v920, 0.0
        %v967 = vadd.f32 %v965, %v966
        %v968 = vsel %vm835, %v921, 0.0
        %v969 = vadd.f32 %v967, %v968
        %v970 = vsel %vm835, %v922, 0.0
        %v971 = vadd.f32 %v969, %v970
        %v972 = vsel %vm835, %v923, 0.0
        %v973 = vadd.f32 %v971, %v972
        %v974 = vsel %vm835, %v924, 0.0
        %v975 = vadd.f32 %v973, %v974
        %v976 = vsel %vm835, %v925, 0.0
        %v977 = vadd.f32 %v975, %v976
        %v978 = vsel %vm835, %v926, 0.0
        %v979 = vadd.f32 %v977, %v978
        %v980 = vsel %vm835, %v927, 0.0
        %v981 = vadd.f32 %v979, %v980
        %v982 = vsel %vm835, %v928, 0.0
        %v983 = vadd.f32 %v981, %v982
        %v984 = vsel %vm835, %v929, 0.0
        %v985 = vadd.f32 %v983, %v984
        %v986 = vsel %vm835, %v930, 0.0
        %v987 = vadd.f32 %v985, %v986
        %v988 = vsel %vm835, %v931, 0.0
        %v989 = vadd.f32 %v987, %v988
        %v990 = vsel %vm835, %v932, 0.0
        %v991 = vadd.f32 %v989, %v990
        %v992 = vsel %vm835, %v933, 0.0
        %v993 = vadd.f32 %v991, %v992
        %v994 = vsel %vm835, %v934, 0.0
        %v995 = vadd.f32 %v993, %v994
        %v996 = vsel %vm835, %v935, 0.0
        %v997 = vadd.f32 %v995, %v996
        %v998 = vsel %vm835, %v936, 0.0
        %v999 = vadd.f32 %v997, %v998
        %v1000 = vrot.slane %v999, 4
        %v1001 = vadd.f32 %v999, %v1000
        %v1002 = vrot.slane %v1001, 2
        %v1003 = vadd.f32 %v1001, %v1002
        %v1004 = vrot.slane %v1003, 1
        %v1005 = vadd.f32 %v1003, %v1004
        %vm1006 = vcmask 1040384
        %v1007 = vsel %vm1006, %v904, %v1005
        %v1008 = vadd.f32 %v834, %v1007
        %vm1009 = vcmask 123904
        %1010 = vst.msk [vmem:[#allocation2] sm:$0x3] %vm1009, %v1008
        %1011 = vst.msk [vmem:[%s352] sm:$0xff] %vm835, 0.0
        %1012 = vst.msk [vmem:[%s352 + $0x8] sm:$0xff] %vm835, 0.0
        %1013 = vst.msk [vmem:[%s352 + $0x10] sm:$0xff] %vm835, 0.0
        %1014 = vst.msk [vmem:[%s352 + $0x18] sm:$0xff] %vm835, 0.0
        %1015 = vst.msk [vmem:[%s352 + $0x20] sm:$0xff] %vm835, 0.0
        %1016 = vst.msk [vmem:[%s352 + $0x28] sm:$0xff] %vm835, 0.0
        %1017 = vst.msk [vmem:[%s352 + $0x30] sm:$0xff] %vm835, 0.0
        %1018 = vst.msk [vmem:[%s352 + $0x38] sm:$0xff] %vm835, 0.0
        %1019 = vst.msk [vmem:[%s352 + $0x40] sm:$0xff] %vm835, 0.0
        %1020 = vst.msk [vmem:[%s352 + $0x48] sm:$0xff] %vm835, 0.0
        %1021 = vst.msk [vmem:[%s352 + $0x50] sm:$0xff] %vm835, 0.0
        %1022 = vst.msk [vmem:[%s352 + $0x58] sm:$0xff] %vm835, 0.0
        %1023 = vst.msk [vmem:[%s352 + $0x60] sm:$0xff] %vm835, 0.0
        %1024 = vst.msk [vmem:[%s352 + $0x68] sm:$0xff] %vm835, 0.0
        %1025 = vst.msk [vmem:[%s352 + $0x70] sm:$0xff] %vm835, 0.0
        %1026 = vst.msk [vmem:[%s352 + $0x78] sm:$0xff] %vm835, 0.0
        %1027 = vst.msk [vmem:[%s352 + $0x80] sm:$0xff] %vm835, 0.0
        %1028 = vst.msk [vmem:[%s352 + $0x88] sm:$0xff] %vm835, 0.0
        %1029 = vst.msk [vmem:[%s352 + $0x90] sm:$0xff] %vm835, 0.0
        %1030 = vst.msk [vmem:[%s352 + $0x98] sm:$0xff] %vm835, 0.0
        %1031 = vst.msk [vmem:[%s352 + $0xa0] sm:$0xff] %vm835, 0.0
        %1032 = vst.msk [vmem:[%s352 + $0xa8] sm:$0xff] %vm835, 0.0
        %1033 = vst.msk [vmem:[%s352 + $0xb0] sm:$0xff] %vm835, 0.0
        %1034 = vst.msk [vmem:[%s352 + $0xb8] sm:$0xff] %vm835, 0.0
        %1035 = vst.msk [vmem:[%s352 + $0xc0] sm:$0xff] %vm835, 0.0
        %1036 = vst.msk [vmem:[%s352 + $0xc8] sm:$0xff] %vm835, 0.0
        %1037 = vst.msk [vmem:[%s352 + $0xd0] sm:$0xff] %vm835, 0.0
        %1038 = vst.msk [vmem:[%s352 + $0xd8] sm:$0xff] %vm835, 0.0
        %1039 = vst.msk [vmem:[%s352 + $0xe0] sm:$0xff] %vm835, 0.0
        %1040 = vst.msk [vmem:[%s352 + $0xe8] sm:$0xff] %vm835, 0.0
        %1041 = vst.msk [vmem:[%s352 + $0xf0] sm:$0xff] %vm835, 0.0
        %1042 = vst.msk [vmem:[%s352 + $0xf8] sm:$0xff] %vm835, 0.0
      $region60: #{bottleneck_forward.5} parent=51 // pred_fallthru
        _
      %p1043 = scmp.eq.s32.totalorder %s23, 1
      // Predicated region
      $region61: #{bottleneck_forward.5} parent=51 // pred_check
        %p1044 = pneg %p1043
      $region62: #{bottleneck_forward.5} parent=51 // pred_check_branch
        %1046 = sbr.rel (%p1044) target = $region64
      $region63: #{bottleneck_forward.5} parent=51 // pred_region
        %v1047 = vld [vmem:[#allocation2] sm:$0x3]
        %v1048 = vld [vmem:[%s5] sm:$0x1]
        %v1049 = vld [vmem:[%s6] sm:$0x1]
        %v1050 = vmul.f32 %v1047, 0.001953125
        %v1051 = vmul.f32 %v1050, %v1050
        %v1053 = vrot.slane %v1051, 7
        %v1055 = vsub.f32 %v1050, %v1053
        %v1056 = vmax.f32 %v1055, 0.0
        %v1057 = vadd.f32 %v1056, 1e-05
        %v1058 = vrsqrt.pop %v1057
        %v1061 = vunpack.c.l.s4 1966171168
        %v1062 = vunpack.c.0.s8 %v1061
        %v1063 = vlaneseq
        %v1064 = vshrl.u32 %v1063, 7
        %v1065 = vsub.s32 %v1062, %v1064
        %v1066 = vrot.slane %v1058, %v1065
        %v1067 = vcombine.high %v1066, %v1066
        %v1069 = vunpack.c.l.s4 1966171168
        %v1070 = vunpack.c.0.s8 %v1069
        %v1071 = vlaneseq
        %v1072 = vshrl.u32 %v1071, 7
        %v1073 = vsub.s32 %v1070, %v1072
        %v1074 = vrot.slane %v1067, %v1073
        %v1076 = vmul.f32 %v1048, %v1074
        %v1077 = vmul.f32 %v1050, %v1076
        %v1078 = vsub.f32 %v1049, %v1077
        %v1080 = vlaneseq
        %v1081 = vshrl.u32 %v1080, 7
        %v1082 = vsub.s32 0, %v1081
        %v1083 = vrot.slane %v1076, %v1082
        %v1085 = vmul.f32 %v697, %v1083
        %v1086 = vmul.f32 %v700, %v1083
        %v1087 = vmul.f32 %v705, %v1083
        %v1088 = vmul.f32 %v708, %v1083
        %v1089 = vmul.f32 %v713, %v1083
        %v1090 = vmul.f32 %v716, %v1083
        %v1091 = vmul.f32 %v721, %v1083
        %v1092 = vmul.f32 %v724, %v1083
        %v1093 = vmul.f32 %v729, %v1083
        %v1094 = vmul.f32 %v732, %v1083
        %v1095 = vmul.f32 %v737, %v1083
        %v1096 = vmul.f32 %v740, %v1083
        %v1097 = vmul.f32 %v745, %v1083
        %v1098 = vmul.f32 %v748, %v1083
        %v1099 = vmul.f32 %v753, %v1083
        %v1100 = vmul.f32 %v756, %v1083
        %v1101 = vmul.f32 %v761, %v1083
        %v1102 = vmul.f32 %v764, %v1083
        %v1103 = vmul.f32 %v769, %v1083
        %v1104 = vmul.f32 %v772, %v1083
        %v1105 = vmul.f32 %v777, %v1083
        %v1106 = vmul.f32 %v780, %v1083
        %v1107 = vmul.f32 %v785, %v1083
        %v1108 = vmul.f32 %v788, %v1083
        %v1109 = vmul.f32 %v793, %v1083
        %v1110 = vmul.f32 %v796, %v1083
        %v1111 = vmul.f32 %v801, %v1083
        %v1112 = vmul.f32 %v804, %v1083
        %v1113 = vmul.f32 %v809, %v1083
        %v1114 = vmul.f32 %v812, %v1083
        %v1115 = vmul.f32 %v817, %v1083
        %v1116 = vmul.f32 %v820, %v1083
        %v1118 = vlaneseq
        %v1119 = vshrl.u32 %v1118, 7
        %v1120 = vsub.s32 0, %v1119
        %v1121 = vrot.slane %v1078, %v1120
        %v1123 = vadd.f32 %v1085, %v1121
        %v1124 = vadd.f32 %v1086, %v1121
        %v1125 = vadd.f32 %v1087, %v1121
        %v1126 = vadd.f32 %v1088, %v1121
        %v1127 = vadd.f32 %v1089, %v1121
        %v1128 = vadd.f32 %v1090, %v1121
        %v1129 = vadd.f32 %v1091, %v1121
        %v1130 = vadd.f32 %v1092, %v1121
        %v1131 = vadd.f32 %v1093, %v1121
        %v1132 = vadd.f32 %v1094, %v1121
        %v1133 = vadd.f32 %v1095, %v1121
        %v1134 = vadd.f32 %v1096, %v1121
        %v1135 = vadd.f32 %v1097, %v1121
        %v1136 = vadd.f32 %v1098, %v1121
        %v1137 = vadd.f32 %v1099, %v1121
        %v1138 = vadd.f32 %v1100, %v1121
        %v1139 = vadd.f32 %v1101, %v1121
        %v1140 = vadd.f32 %v1102, %v1121
        %v1141 = vadd.f32 %v1103, %v1121
        %v1142 = vadd.f32 %v1104, %v1121
        %v1143 = vadd.f32 %v1105, %v1121
        %v1144 = vadd.f32 %v1106, %v1121
        %v1145 = vadd.f32 %v1107, %v1121
        %v1146 = vadd.f32 %v1108, %v1121
        %v1147 = vadd.f32 %v1109, %v1121
        %v1148 = vadd.f32 %v1110, %v1121
        %v1149 = vadd.f32 %v1111, %v1121
        %v1150 = vadd.f32 %v1112, %v1121
        %v1151 = vadd.f32 %v1113, %v1121
        %v1152 = vadd.f32 %v1114, %v1121
        %v1153 = vadd.f32 %v1115, %v1121
        %v1154 = vadd.f32 %v1116, %v1121
        %v1155 = vld [vmem:[%s344] sm:$0xff]
        %v1156 = vld [vmem:[%s344 + $0x8] sm:$0xff]
        %v1157 = vld [vmem:[%s344 + $0x10] sm:$0xff]
        %v1158 = vld [vmem:[%s344 + $0x18] sm:$0xff]
        %v1159 = vld [vmem:[%s344 + $0x20] sm:$0xff]
        %v1160 = vld [vmem:[%s344 + $0x28] sm:$0xff]
        %v1161 = vld [vmem:[%s344 + $0x30] sm:$0xff]
        %v1162 = vld [vmem:[%s344 + $0x38] sm:$0xff]
        %v1163 = vld [vmem:[%s344 + $0x40] sm:$0xff]
        %v1164 = vld [vmem:[%s344 + $0x48] sm:$0xff]
        %v1165 = vld [vmem:[%s344 + $0x50] sm:$0xff]
        %v1166 = vld [vmem:[%s344 + $0x58] sm:$0xff]
        %v1167 = vld [vmem:[%s344 + $0x60] sm:$0xff]
        %v1168 = vld [vmem:[%s344 + $0x68] sm:$0xff]
        %v1169 = vld [vmem:[%s344 + $0x70] sm:$0xff]
        %v1170 = vld [vmem:[%s344 + $0x78] sm:$0xff]
        %v1171 = vld [vmem:[%s344 + $0x80] sm:$0xff]
        %v1172 = vld [vmem:[%s344 + $0x88] sm:$0xff]
        %v1173 = vld [vmem:[%s344 + $0x90] sm:$0xff]
        %v1174 = vld [vmem:[%s344 + $0x98] sm:$0xff]
        %v1175 = vld [vmem:[%s344 + $0xa0] sm:$0xff]
        %v1176 = vld [vmem:[%s344 + $0xa8] sm:$0xff]
        %v1177 = vld [vmem:[%s344 + $0xb0] sm:$0xff]
        %v1178 = vld [vmem:[%s344 + $0xb8] sm:$0xff]
        %v1179 = vld [vmem:[%s344 + $0xc0] sm:$0xff]
        %v1180 = vld [vmem:[%s344 + $0xc8] sm:$0xff]
        %v1181 = vld [vmem:[%s344 + $0xd0] sm:$0xff]
        %v1182 = vld [vmem:[%s344 + $0xd8] sm:$0xff]
        %v1183 = vld [vmem:[%s344 + $0xe0] sm:$0xff]
        %v1184 = vld [vmem:[%s344 + $0xe8] sm:$0xff]
        %v1185 = vld [vmem:[%s344 + $0xf0] sm:$0xff]
        %v1186 = vld [vmem:[%s344 + $0xf8] sm:$0xff]
        %v1187 = vadd.f32 %v1123, %v1155
        %v1188 = vadd.f32 %v1124, %v1156
        %v1189 = vadd.f32 %v1125, %v1157
        %v1190 = vadd.f32 %v1126, %v1158
        %v1191 = vadd.f32 %v1127, %v1159
        %v1192 = vadd.f32 %v1128, %v1160
        %v1193 = vadd.f32 %v1129, %v1161
        %v1194 = vadd.f32 %v1130, %v1162
        %v1195 = vadd.f32 %v1131, %v1163
        %v1196 = vadd.f32 %v1132, %v1164
        %v1197 = vadd.f32 %v1133, %v1165
        %v1198 = vadd.f32 %v1134, %v1166
        %v1199 = vadd.f32 %v1135, %v1167
        %v1200 = vadd.f32 %v1136, %v1168
        %v1201 = vadd.f32 %v1137, %v1169
        %v1202 = vadd.f32 %v1138, %v1170
        %v1203 = vadd.f32 %v1139, %v1171
        %v1204 = vadd.f32 %v1140, %v1172
        %v1205 = vadd.f32 %v1141, %v1173
        %v1206 = vadd.f32 %v1142, %v1174
        %v1207 = vadd.f32 %v1143, %v1175
        %v1208 = vadd.f32 %v1144, %v1176
        %v1209 = vadd.f32 %v1145, %v1177
        %v1210 = vadd.f32 %v1146, %v1178
        %v1211 = vadd.f32 %v1147, %v1179
        %v1212 = vadd.f32 %v1148, %v1180
        %v1213 = vadd.f32 %v1149, %v1181
        %v1214 = vadd.f32 %v1150, %v1182
        %v1215 = vadd.f32 %v1151, %v1183
        %v1216 = vadd.f32 %v1152, %v1184
        %v1217 = vadd.f32 %v1153, %v1185
        %v1218 = vadd.f32 %v1154, %v1186
        %vm1219 = vcmp.gt.f32.partialorder %v1187, 0.0
        %vm1220 = vcmp.gt.f32.partialorder %v1188, 0.0
        %vm1221 = vcmp.gt.f32.partialorder %v1189, 0.0
        %vm1222 = vcmp.gt.f32.partialorder %v1190, 0.0
        %vm1223 = vcmp.gt.f32.partialorder %v1191, 0.0
        %vm1224 = vcmp.gt.f32.partialorder %v1192, 0.0
        %vm1225 = vcmp.gt.f32.partialorder %v1193, 0.0
        %vm1226 = vcmp.gt.f32.partialorder %v1194, 0.0
        %vm1227 = vcmp.gt.f32.partialorder %v1195, 0.0
        %vm1228 = vcmp.gt.f32.partialorder %v1196, 0.0
        %vm1229 = vcmp.gt.f32.partialorder %v1197, 0.0
        %vm1230 = vcmp.gt.f32.partialorder %v1198, 0.0
        %vm1231 = vcmp.gt.f32.partialorder %v1199, 0.0
        %vm1232 = vcmp.gt.f32.partialorder %v1200, 0.0
        %vm1233 = vcmp.gt.f32.partialorder %v1201, 0.0
        %vm1234 = vcmp.gt.f32.partialorder %v1202, 0.0
        %vm1235 = vcmp.gt.f32.partialorder %v1203, 0.0
        %vm1236 = vcmp.gt.f32.partialorder %v1204, 0.0
        %vm1237 = vcmp.gt.f32.partialorder %v1205, 0.0
        %vm1238 = vcmp.gt.f32.partialorder %v1206, 0.0
        %vm1239 = vcmp.gt.f32.partialorder %v1207, 0.0
        %vm1240 = vcmp.gt.f32.partialorder %v1208, 0.0
        %vm1241 = vcmp.gt.f32.partialorder %v1209, 0.0
        %vm1242 = vcmp.gt.f32.partialorder %v1210, 0.0
        %vm1243 = vcmp.gt.f32.partialorder %v1211, 0.0
        %vm1244 = vcmp.gt.f32.partialorder %v1212, 0.0
        %vm1245 = vcmp.gt.f32.partialorder %v1213, 0.0
        %vm1246 = vcmp.gt.f32.partialorder %v1214, 0.0
        %vm1247 = vcmp.gt.f32.partialorder %v1215, 0.0
        %vm1248 = vcmp.gt.f32.partialorder %v1216, 0.0
        %vm1249 = vcmp.gt.f32.partialorder %v1217, 0.0
        %vm1250 = vcmp.gt.f32.partialorder %v1218, 0.0
        %v1251 = vmul.f32 %v1187, 0.1
        %v1252 = vmul.f32 %v1188, 0.1
        %v1253 = vmul.f32 %v1189, 0.1
        %v1254 = vmul.f32 %v1190, 0.1
        %v1255 = vmul.f32 %v1191, 0.1
        %v1256 = vmul.f32 %v1192, 0.1
        %v1257 = vmul.f32 %v1193, 0.1
        %v1258 = vmul.f32 %v1194, 0.1
        %v1259 = vmul.f32 %v1195, 0.1
        %v1260 = vmul.f32 %v1196, 0.1
        %v1261 = vmul.f32 %v1197, 0.1
        %v1262 = vmul.f32 %v1198, 0.1
        %v1263 = vmul.f32 %v1199, 0.1
        %v1264 = vmul.f32 %v1200, 0.1
        %v1265 = vmul.f32 %v1201, 0.1
        %v1266 = vmul.f32 %v1202, 0.1
        %v1267 = vmul.f32 %v1203, 0.1
        %v1268 = vmul.f32 %v1204, 0.1
        %v1269 = vmul.f32 %v1205, 0.1
        %v1270 = vmul.f32 %v1206, 0.1
        %v1271 = vmul.f32 %v1207, 0.1
        %v1272 = vmul.f32 %v1208, 0.1
        %v1273 = vmul.f32 %v1209, 0.1
        %v1274 = vmul.f32 %v1210, 0.1
        %v1275 = vmul.f32 %v1211, 0.1
        %v1276 = vmul.f32 %v1212, 0.1
        %v1277 = vmul.f32 %v1213, 0.1
        %v1278 = vmul.f32 %v1214, 0.1
        %v1279 = vmul.f32 %v1215, 0.1
        %v1280 = vmul.f32 %v1216, 0.1
        %v1281 = vmul.f32 %v1217, 0.1
        %v1282 = vmul.f32 %v1218, 0.1
        %v1283 = vsel %vm1219, %v1187, %v1251
        %v1284 = vsel %vm1220, %v1188, %v1252
        %v1285 = vsel %vm1221, %v1189, %v1253
        %v1286 = vsel %vm1222, %v1190, %v1254
        %v1287 = vsel %vm1223, %v1191, %v1255
        %v1288 = vsel %vm1224, %v1192, %v1256
        %v1289 = vsel %vm1225, %v1193, %v1257
        %v1290 = vsel %vm1226, %v1194, %v1258
        %v1291 = vsel %vm1227, %v1195, %v1259
        %v1292 = vsel %vm1228, %v1196, %v1260
        %v1293 = vsel %vm1229, %v1197, %v1261
        %v1294 = vsel %vm1230, %v1198, %v1262
        %v1295 = vsel %vm1231, %v1199, %v1263
        %v1296 = vsel %vm1232, %v1200, %v1264
        %v1297 = vsel %vm1233, %v1201, %v1265
        %v1298 = vsel %vm1234, %v1202, %v1266
        %v1299 = vsel %vm1235, %v1203, %v1267
        %v1300 = vsel %vm1236, %v1204, %v1268
        %v1301 = vsel %vm1237, %v1205, %v1269
        %v1302 = vsel %vm1238, %v1206, %v1270
        %v1303 = vsel %vm1239, %v1207, %v1271
        %v1304 = vsel %vm1240, %v1208, %v1272
        %v1305 = vsel %vm1241, %v1209, %v1273
        %v1306 = vsel %vm1242, %v1210, %v1274
        %v1307 = vsel %vm1243, %v1211, %v1275
        %v1308 = vsel %vm1244, %v1212, %v1276
        %v1309 = vsel %vm1245, %v1213, %v1277
        %v1310 = vsel %vm1246, %v1214, %v1278
        %v1311 = vsel %vm1247, %v1215, %v1279
        %v1312 = vsel %vm1248, %v1216, %v1280
        %v1313 = vsel %vm1249, %v1217, %v1281
        %v1314 = vsel %vm1250, %v1218, %v1282
        %vm1315 = vcmask 130048
        %1316 = vst.msk [vmem:[%s352] sm:$0xff] %vm1315, %v1283
        %1317 = vst.msk [vmem:[%s352 + $0x8] sm:$0xff] %vm1315, %v1284
        %1318 = vst.msk [vmem:[%s352 + $0x10] sm:$0xff] %vm1315, %v1285
        %1319 = vst.msk [vmem:[%s352 + $0x18] sm:$0xff] %vm1315, %v1286
        %1320 = vst.msk [vmem:[%s352 + $0x20] sm:$0xff] %vm1315, %v1287
        %1321 = vst.msk [vmem:[%s352 + $0x28] sm:$0xff] %vm1315, %v1288
        %1322 = vst.msk [vmem:[%s352 + $0x30] sm:$0xff] %vm1315, %v1289
        %1323 = vst.msk [vmem:[%s352 + $0x38] sm:$0xff] %vm1315, %v1290
        %1324 = vst.msk [vmem:[%s352 + $0x40] sm:$0xff] %vm1315, %v1291
        %1325 = vst.msk [vmem:[%s352 + $0x48] sm:$0xff] %vm1315, %v1292
        %1326 = vst.msk [vmem:[%s352 + $0x50] sm:$0xff] %vm1315, %v1293
        %1327 = vst.msk [vmem:[%s352 + $0x58] sm:$0xff] %vm1315, %v1294
        %1328 = vst.msk [vmem:[%s352 + $0x60] sm:$0xff] %vm1315, %v1295
        %1329 = vst.msk [vmem:[%s352 + $0x68] sm:$0xff] %vm1315, %v1296
        %1330 = vst.msk [vmem:[%s352 + $0x70] sm:$0xff] %vm1315, %v1297
        %1331 = vst.msk [vmem:[%s352 + $0x78] sm:$0xff] %vm1315, %v1298
        %1332 = vst.msk [vmem:[%s352 + $0x80] sm:$0xff] %vm1315, %v1299
        %1333 = vst.msk [vmem:[%s352 + $0x88] sm:$0xff] %vm1315, %v1300
        %1334 = vst.msk [vmem:[%s352 + $0x90] sm:$0xff] %vm1315, %v1301
        %1335 = vst.msk [vmem:[%s352 + $0x98] sm:$0xff] %vm1315, %v1302
        %1336 = vst.msk [vmem:[%s352 + $0xa0] sm:$0xff] %vm1315, %v1303
        %1337 = vst.msk [vmem:[%s352 + $0xa8] sm:$0xff] %vm1315, %v1304
        %1338 = vst.msk [vmem:[%s352 + $0xb0] sm:$0xff] %vm1315, %v1305
        %1339 = vst.msk [vmem:[%s352 + $0xb8] sm:$0xff] %vm1315, %v1306
        %1340 = vst.msk [vmem:[%s352 + $0xc0] sm:$0xff] %vm1315, %v1307
        %1341 = vst.msk [vmem:[%s352 + $0xc8] sm:$0xff] %vm1315, %v1308
        %1342 = vst.msk [vmem:[%s352 + $0xd0] sm:$0xff] %vm1315, %v1309
        %1343 = vst.msk [vmem:[%s352 + $0xd8] sm:$0xff] %vm1315, %v1310
        %1344 = vst.msk [vmem:[%s352 + $0xe0] sm:$0xff] %vm1315, %v1311
        %1345 = vst.msk [vmem:[%s352 + $0xe8] sm:$0xff] %vm1315, %v1312
        %1346 = vst.msk [vmem:[%s352 + $0xf0] sm:$0xff] %vm1315, %v1313
        %1347 = vst.msk [vmem:[%s352 + $0xf8] sm:$0xff] %vm1315, %v1314
      $region64: #{bottleneck_forward.5} parent=51 // pred_fallthru
        _
      %s1348 = smul.u32 %s23, %s24
      %s1349 = smul.u32 32, %s1348
      %p1350 = scmp.lt.s32.totalorder %s1349, 63
      %s1351 = scalar_select %p1350, %s1349, 63
      %s1352 = smul.addr %s1351, 8
      %s1353 = scalar_lea.vmem %s8, %s1352
      // Predicated region
      $region65: #{bottleneck_forward.5} parent=51 // pred_check
        %p1354 = pneg %p231
      $region66: #{bottleneck_forward.5} parent=51 // pred_check_branch
        %1356 = sbr.rel (%p1354) target = $region68
      $region67: #{bottleneck_forward.5} parent=51 // pred_region
        %s1357 = smul.u32 %s23, %s24
        %s1358 = smul.u32 32, %s1357
      $region68: #{bottleneck_forward.5} parent=51 // pred_fallthru
        _
    $region52: #{bottleneck_forward.5} parent=5 // pred_fallthru
      _
    %p1359 = scmp.le.s32.totalorder 2, %s14
    // Predicated region
    $region69: #{bottleneck_forward.5} parent=5 // pred_check
      %p1360 = pneg %p1359
    $region70: #{bottleneck_forward.5} parent=5 // pred_check_branch
      %1362 = sbr.rel (%p1360) target = $region72
    $region71: #{bottleneck_forward.5} parent=5 // pred_region
      %s1363 = ssub.s32 %s14, 2
      // Predicated region
      $region73: #{bottleneck_forward.5} parent=71 // pred_check
        %p1364 = pneg %p237
      $region74: #{bottleneck_forward.5} parent=71 // pred_check_branch
        %1366 = sbr.rel (%p1364) target = $region76
      $region75: #{bottleneck_forward.5} parent=71 // pred_region
        %s1367 = smul.u32 %s25, %s26
        %s1368 = smul.u32 32, %s1367
        %p1369 = scmp.lt.s32.totalorder %s1368, 63
        %s1370 = scalar_select %p1369, %s1368, 63
        %s1371 = smul.addr %s1370, 8
        %s1372 = scalar_lea.vmem %s8, %s1371
      $region76: #{bottleneck_forward.5} parent=71 // pred_fallthru
        _
    $region72: #{bottleneck_forward.5} parent=5 // pred_fallthru
      _
  $region6: #{bottleneck_forward.5} parent=0 // loop_footer
    %s18 = sadd.s32 1, %s14
  $region7: #{bottleneck_forward.5} parent=0 // loop_footer_branch
    %13 = sbr.rel target = $region3
  $region8: #{bottleneck_forward.5} parent=0 // loop_exit
    _

// kernel: bottleneck_forward.4
$region0: #{bottleneck_forward.4}
  #allocation0 [shape = 'u32[]', space=smem, size = 0x4, offset = 0x4, fixed_abs, tag = 'smem constant byte address 0x4 - core index']
  #allocation1 [shape = 'u32[144,128]{1,0:T(1,128)}', space=vmem, size = 0x12000, scoped, tag = 'internal scratch']
  %s0 = inlined_call_operand.vmem [shape: f32[32,16,4], index: 0, kind: input, shape index: {}, may-alias: {0,1,2}]
  %s1 = inlined_call_operand.vmem [shape: f32[32,16,4], index: 1, kind: input, shape index: {}, may-alias: {0,1,2}]
  %s2 = inlined_call_operand.vmem [shape: f32[32,16,4], index: 2, kind: input, shape index: {}, may-alias: {0,1,2}]
  %s3 = inlined_call_operand.vmem [shape: bf16[36,4], index: 3, kind: input, shape index: {}]
  %s4 = inlined_call_operand.vmem [shape: f32[2,4], index: 4, kind: input, shape index: {}]
  %s5 = inlined_call_operand.vmem [shape: f32[1,4], index: 5, kind: input, shape index: {}]
  %s6 = inlined_call_operand.vmem [shape: f32[1,4], index: 6, kind: input, shape index: {}]
  %s7 = inlined_call_operand.vmem [shape: f32[512,4], index: 7, kind: output, shape index: {0}]
  %s8 = inlined_call_operand.vmem [shape: f32[2,4], index: 8, kind: output, shape index: {1}]
  %9 = xla_tuple %s7, %s8
  %s10 = sld [smem:[#allocation0]]
  $region73: #{bottleneck_forward.4} parent=0
    _
  %s12 = ssub.s32 1, %s10
  %s13 = scalar_select 0, %s12, %s10
  loop: start=0, step=1, limit=4
  $region2: #{bottleneck_forward.4} parent=0 // loop_pre_header
    _
  $region3: #{bottleneck_forward.4} parent=0 // loop_header
    %s15 = sphi 0, %s19
    %p16 = scmp.ge.s32.totalorder %s15, 4
    %s25 = sphi 0, %s27
    %s28 = sphi 0, %s25
    %s29 = sphi 0, %s28
    %s45 = sphi 0, %s29
    %s59 = sphi 0, %s61
    %s62 = sphi 0, %s59
    %s63 = sphi 0, %s62
    %s79 = sphi 0, %s63
    %s93 = sphi 0, %s95
    %s96 = sphi 0, %s93
    %s97 = sphi 0, %s96
    %s113 = sphi 0, %s97
    %s117 = sphi 0, %s117
    %s119 = sphi 0, %s117
    %s120 = sphi 0, %s119
    %s134 = sphi 0, %s120
    %s138 = sphi 0, %s138
    %s140 = sphi 0, %s138
    %s141 = sphi 0, %s140
    %s155 = sphi 0, %s141
    %s159 = sphi 0, %s159
    %s161 = sphi 0, %s159
    %s162 = sphi 0, %s161
    %s176 = sphi 0, %s162
    %s180 = sphi 0, %s180
    %s182 = sphi 0, %s180
    %s183 = sphi 0, %s182
    %s197 = sphi 0, %s183
    %s203 = sphi 0, %s205
    %s206 = sphi 0, %s203
    %s207 = sphi 0, %s206
    %s223 = sphi 0, %s207
    %s227 = sphi 0, %s227
    %s229 = sphi 0, %s227
    %s230 = sphi 0, %s229
    %s244 = sphi 0, %s230
  $region4: #{bottleneck_forward.4} parent=0 // loop_header_branch
    %18 = sbr.rel (%p16) target = $region8
  $region5: #{bottleneck_forward.4} parent=0 // loop_body
    %s20 = ssub.s32 %s15, 1
    %s21 = ssub.s32 %s15, 2
    %s22 = sadd.s32 %s15, 1
    %s23 = ssub.s32 %s15, %s22
    %p24 = scmp.eq.s32.totalorder %s23, 0
    %s26 = sadd.s32 %s25, 1
    %s27 = scalar_select %p24, %s25, %s26
    %p30 = pneg %p24
    %p31 = scmp.eq.s32.totalorder %s15, 1
    %p32 = por %p30, %p31
    %p33 = scmp.ne.s32.totalorder %s25, %s28
    %p34 = scmp.eq.s32.totalorder %s15, 0
    %p35 = por %p33, %p34
    %p36 = scmp.ne.s32.totalorder %s25, %s28
    %p37 = scmp.eq.s32.totalorder %s20, 1
    %p38 = por %p36, %p37
    %p39 = scmp.ne.s32.totalorder %s28, %s29
    %p40 = scmp.eq.s32.totalorder %s20, 0
    %p41 = por %p39, %p40
    %p42 = scmp.ne.s32.totalorder %s28, %s29
    %p43 = scmp.eq.s32.totalorder %s21, 1
    %p44 = por %p42, %p43
    %p46 = scmp.ne.s32.totalorder %s29, %s45
    %p47 = scmp.eq.s32.totalorder %s21, 0
    %p48 = por %p46, %p47
    %s49 = smul.u32 %s15, 16
    %s50 = ssub.s32 %s49, 1
    %p51 = scmp.gt.s32.totalorder %s50, 0
    %s52 = scalar_select %p51, %s50, 0
    %s53 = smul.u32 %s22, 16
    %s54 = ssub.s32 %s53, 1
    %p55 = scmp.gt.s32.totalorder %s54, 0
    %s56 = scalar_select %p55, %s54, 0
    %s57 = ssub.s32 %s52, %s56
    %p58 = scmp.eq.s32.totalorder %s57, 0
    %s60 = sadd.s32 %s59, 1
    %s61 = scalar_select %p58, %s59, %s60
    %p64 = pneg %p58
    %p65 = scmp.eq.s32.totalorder %s15, 1
    %p66 = por %p64, %p65
    %p67 = scmp.ne.s32.totalorder %s59, %s62
    %p68 = scmp.eq.s32.totalorder %s15, 0
    %p69 = por %p67, %p68
    %p70 = scmp.ne.s32.totalorder %s59, %s62
    %p71 = scmp.eq.s32.totalorder %s20, 1
    %p72 = por %p70, %p71
    %p73 = scmp.ne.s32.totalorder %s62, %s63
    %p74 = scmp.eq.s32.totalorder %s20, 0
    %p75 = por %p73, %p74
    %p76 = scmp.ne.s32.totalorder %s62, %s63
    %p77 = scmp.eq.s32.totalorder %s21, 1
    %p78 = por %p76, %p77
    %p80 = scmp.ne.s32.totalorder %s63, %s79
    %p81 = scmp.eq.s32.totalorder %s21, 0
    %p82 = por %p80, %p81
    %s83 = smul.u32 %s15, 16
    %s84 = sadd.s32 %s83, 16
    %p85 = scmp.lt.s32.totalorder %s84, 31
    %s86 = scalar_select %p85, %s84, 31
    %s87 = smul.u32 %s22, 16
    %s88 = sadd.s32 %s87, 16
    %p89 = scmp.lt.s32.totalorder %s88, 31
    %s90 = scalar_select %p89, %s88, 31
    %s91 = ssub.s32 %s86, %s90
    %p92 = scmp.eq.s32.totalorder %s91, 0
    %s94 = sadd.s32 %s93, 1
    %s95 = scalar_select %p92, %s93, %s94
    %p98 = pneg %p92
    %p99 = scmp.eq.s32.totalorder %s15, 1
    %p100 = por %p98, %p99
    %p101 = scmp.ne.s32.totalorder %s93, %s96
    %p102 = scmp.eq.s32.totalorder %s15, 0
    %p103 = por %p101, %p102
    %p104 = scmp.ne.s32.totalorder %s93, %s96
    %p105 = scmp.eq.s32.totalorder %s20, 1
    %p106 = por %p104, %p105
    %p107 = scmp.ne.s32.totalorder %s96, %s97
    %p108 = scmp.eq.s32.totalorder %s20, 0
    %p109 = por %p107, %p108
    %p110 = scmp.ne.s32.totalorder %s96, %s97
    %p111 = scmp.eq.s32.totalorder %s21, 1
    %p112 = por %p110, %p111
    %p114 = scmp.ne.s32.totalorder %s97, %s113
    %p115 = scmp.eq.s32.totalorder %s21, 0
    %p116 = por %p114, %p115
    %s118 = sadd.s32 %s117, 1
    %p121 = scmp.eq.s32.totalorder %s15, 1
    %p122 = scmp.ne.s32.totalorder %s117, %s119
    %p123 = scmp.eq.s32.totalorder %s15, 0
    %p124 = por %p122, %p123
    %p125 = scmp.ne.s32.totalorder %s117, %s119
    %p126 = scmp.eq.s32.totalorder %s20, 1
    %p127 = por %p125, %p126
    %p128 = scmp.ne.s32.totalorder %s119, %s120
    %p129 = scmp.eq.s32.totalorder %s20, 0
    %p130 = por %p128, %p129
    %p131 = scmp.ne.s32.totalorder %s119, %s120
    %p132 = scmp.eq.s32.totalorder %s21, 1
    %p133 = por %p131, %p132
    %p135 = scmp.ne.s32.totalorder %s120, %s134
    %p136 = scmp.eq.s32.totalorder %s21, 0
    %p137 = por %p135, %p136
    %s139 = sadd.s32 %s138, 1
    %p142 = scmp.eq.s32.totalorder %s15, 1
    %p143 = scmp.ne.s32.totalorder %s138, %s140
    %p144 = scmp.eq.s32.totalorder %s15, 0
    %p145 = por %p143, %p144
    %p146 = scmp.ne.s32.totalorder %s138, %s140
    %p147 = scmp.eq.s32.totalorder %s20, 1
    %p148 = por %p146, %p147
    %p149 = scmp.ne.s32.totalorder %s140, %s141
    %p150 = scmp.eq.s32.totalorder %s20, 0
    %p151 = por %p149, %p150
    %p152 = scmp.ne.s32.totalorder %s140, %s141
    %p153 = scmp.eq.s32.totalorder %s21, 1
    %p154 = por %p152, %p153
    %p156 = scmp.ne.s32.totalorder %s141, %s155
    %p157 = scmp.eq.s32.totalorder %s21, 0
    %p158 = por %p156, %p157
    %s160 = sadd.s32 %s159, 1
    %p163 = scmp.eq.s32.totalorder %s15, 1
    %p164 = scmp.ne.s32.totalorder %s159, %s161
    %p165 = scmp.eq.s32.totalorder %s15, 0
    %p166 = por %p164, %p165
    %p167 = scmp.ne.s32.totalorder %s159, %s161
    %p168 = scmp.eq.s32.totalorder %s20, 1
    %p169 = por %p167, %p168
    %p170 = scmp.ne.s32.totalorder %s161, %s162
    %p171 = scmp.eq.s32.totalorder %s20, 0
    %p172 = por %p170, %p171
    %p173 = scmp.ne.s32.totalorder %s161, %s162
    %p174 = scmp.eq.s32.totalorder %s21, 1
    %p175 = por %p173, %p174
    %p177 = scmp.ne.s32.totalorder %s162, %s176
    %p178 = scmp.eq.s32.totalorder %s21, 0
    %p179 = por %p177, %p178
    %s181 = sadd.s32 %s180, 1
    %p184 = scmp.eq.s32.totalorder %s15, 1
    %p185 = scmp.ne.s32.totalorder %s180, %s182
    %p186 = scmp.eq.s32.totalorder %s15, 0
    %p187 = por %p185, %p186
    %p188 = scmp.ne.s32.totalorder %s180, %s182
    %p189 = scmp.eq.s32.totalorder %s20, 1
    %p190 = por %p188, %p189
    %p191 = scmp.ne.s32.totalorder %s182, %s183
    %p192 = scmp.eq.s32.totalorder %s20, 0
    %p193 = por %p191, %p192
    %p194 = scmp.ne.s32.totalorder %s182, %s183
    %p195 = scmp.eq.s32.totalorder %s21, 1
    %p196 = por %p194, %p195
    %p198 = scmp.ne.s32.totalorder %s183, %s197
    %p199 = scmp.eq.s32.totalorder %s21, 0
    %p200 = por %p198, %p199
    %s201 = ssub.s32 %s15, %s22
    %p202 = scmp.eq.s32.totalorder %s201, 0
    %s204 = sadd.s32 %s203, 1
    %s205 = scalar_select %p202, %s203, %s204
    %p208 = pneg %p202
    %p209 = scmp.eq.s32.totalorder %s15, 1
    %p210 = por %p208, %p209
    %p211 = scmp.ne.s32.totalorder %s203, %s206
    %p212 = scmp.eq.s32.totalorder %s15, 0
    %p213 = por %p211, %p212
    %p214 = scmp.ne.s32.totalorder %s203, %s206
    %p215 = scmp.eq.s32.totalorder %s20, 1
    %p216 = por %p214, %p215
    %p217 = scmp.ne.s32.totalorder %s206, %s207
    %p218 = scmp.eq.s32.totalorder %s20, 0
    %p219 = por %p217, %p218
    %p220 = scmp.ne.s32.totalorder %s206, %s207
    %p221 = scmp.eq.s32.totalorder %s21, 1
    %p222 = por %p220, %p221
    %p224 = scmp.ne.s32.totalorder %s207, %s223
    %p225 = scmp.eq.s32.totalorder %s21, 0
    %p226 = por %p224, %p225
    %s228 = sadd.s32 %s227, 1
    %p231 = scmp.eq.s32.totalorder %s15, 1
    %p232 = scmp.ne.s32.totalorder %s227, %s229
    %p233 = scmp.eq.s32.totalorder %s15, 0
    %p234 = por %p232, %p233
    %p235 = scmp.ne.s32.totalorder %s227, %s229
    %p236 = scmp.eq.s32.totalorder %s20, 1
    %p237 = por %p235, %p236
    %p238 = scmp.ne.s32.totalorder %s229, %s230
    %p239 = scmp.eq.s32.totalorder %s20, 0
    %p240 = por %p238, %p239
    %p241 = scmp.ne.s32.totalorder %s229, %s230
    %p242 = scmp.eq.s32.totalorder %s21, 1
    %p243 = por %p241, %p242
    %p245 = scmp.ne.s32.totalorder %s230, %s244
    %p246 = scmp.eq.s32.totalorder %s21, 0
    %p247 = por %p245, %p246
    %p248 = scmp.le.s32.totalorder 1, %s15
    %p249 = scmp.lt.s32.totalorder %s15, 3
    %p250 = pnand %p248, %p249
    %p251 = pneg %p250
    // Predicated region
    $region9: #{bottleneck_forward.4} parent=5 // pred_check
      _
    $region10: #{bottleneck_forward.4} parent=5 // pred_check_branch
      %253 = sbr.rel (%p250) target = $region12
    $region11: #{bottleneck_forward.4} parent=5 // pred_region
      %s254 = ssub.s32 %s15, 1
      // Predicated region
      $region13: #{bottleneck_forward.4} parent=11 // pred_check
        %p255 = pneg %p130
      $region14: #{bottleneck_forward.4} parent=11 // pred_check_branch
        %257 = sbr.rel (%p255) target = $region16
      $region15: #{bottleneck_forward.4} parent=11 // pred_region
        _
      $region16: #{bottleneck_forward.4} parent=11 // pred_fallthru
        _
      // Predicated region
      $region17: #{bottleneck_forward.4} parent=11 // pred_check
        %p258 = pneg %p151
      $region18: #{bottleneck_forward.4} parent=11 // pred_check_branch
        %260 = sbr.rel (%p258) target = $region20
      $region19: #{bottleneck_forward.4} parent=11 // pred_region
        _
      $region20: #{bottleneck_forward.4} parent=11 // pred_fallthru
        _
      // Predicated region
      $region21: #{bottleneck_forward.4} parent=11 // pred_check
        %p261 = pneg %p172
      $region22: #{bottleneck_forward.4} parent=11 // pred_check_branch
        %263 = sbr.rel (%p261) target = $region24
      $region23: #{bottleneck_forward.4} parent=11 // pred_region
        _
      $region24: #{bottleneck_forward.4} parent=11 // pred_fallthru
        _
      // Predicated region
      $region25: #{bottleneck_forward.4} parent=11 // pred_check
        %p264 = pneg %p193
      $region26: #{bottleneck_forward.4} parent=11 // pred_check_branch
        %266 = sbr.rel (%p264) target = $region28
      $region27: #{bottleneck_forward.4} parent=11 // pred_region
        _
      $region28: #{bottleneck_forward.4} parent=11 // pred_fallthru
        _
    $region12: #{bottleneck_forward.4} parent=5 // pred_fallthru
      _
    %p267 = scmp.lt.s32.totalorder %s15, 2
    // Predicated region
    $region29: #{bottleneck_forward.4} parent=5 // pred_check
      %p268 = pneg %p267
    $region30: #{bottleneck_forward.4} parent=5 // pred_check_branch
      %270 = sbr.rel (%p268) target = $region32
    $region31: #{bottleneck_forward.4} parent=5 // pred_region
      // Predicated region
      $region33: #{bottleneck_forward.4} parent=31 // pred_check
        %p271 = pneg %p35
      $region34: #{bottleneck_forward.4} parent=31 // pred_check_branch
        %273 = sbr.rel (%p271) target = $region36
      $region35: #{bottleneck_forward.4} parent=31 // pred_region
        %s274 = smul.u32 16, %s15
        %p275 = scmp.lt.s32.totalorder %s274, 31
        %s276 = scalar_select %p275, %s274, 31
        %s277 = smul.addr %s276, 2
        %s278 = smul.addr %s277, 8
        %s279 = scalar_lea.vmem %s0, %s278
        %s280 = smul.u32 16, %s15
      $region36: #{bottleneck_forward.4} parent=31 // pred_fallthru
        _
      // Predicated region
      $region37: #{bottleneck_forward.4} parent=31 // pred_check
        %p281 = pneg %p69
      $region38: #{bottleneck_forward.4} parent=31 // pred_check_branch
        %283 = sbr.rel (%p281) target = $region40
      $region39: #{bottleneck_forward.4} parent=31 // pred_region
        %s284 = smul.u32 %s15, 16
        %s285 = ssub.s32 %s284, 1
        %p286 = scmp.gt.s32.totalorder %s285, 0
        %s287 = scalar_select %p286, %s285, 0
        %p288 = scmp.lt.s32.totalorder %s287, 31
        %s289 = scalar_select %p288, %s287, 31
        %s290 = smul.addr %s289, 2
        %s291 = smul.addr %s290, 8
        %s292 = scalar_lea.vmem %s1, %s291
        %s293 = smul.u32 %s15, 16
        %s294 = ssub.s32 %s293, 1
        %p295 = scmp.gt.s32.totalorder %s294, 0
        %s296 = scalar_select %p295, %s294, 0
      $region40: #{bottleneck_forward.4} parent=31 // pred_fallthru
        _
      // Predicated region
      $region41: #{bottleneck_forward.4} parent=31 // pred_check
        %p297 = pneg %p103
      $region42: #{bottleneck_forward.4} parent=31 // pred_check_branch
        %299 = sbr.rel (%p297) target = $region44
      $region43: #{bottleneck_forward.4} parent=31 // pred_region
        %s300 = smul.u32 %s15, 16
        %s301 = sadd.s32 %s300, 16
        %p302 = scmp.lt.s32.totalorder %s301, 31
        %s303 = scalar_select %p302, %s301, 31
        %p304 = scmp.lt.s32.totalorder %s303, 31
        %s305 = scalar_select %p304, %s303, 31
        %s306 = smul.addr %s305, 2
        %s307 = smul.addr %s306, 8
        %s308 = scalar_lea.vmem %s2, %s307
        %s309 = smul.u32 %s15, 16
        %s310 = sadd.s32 %s309, 16
        %p311 = scmp.lt.s32.totalorder %s310, 31
        %s312 = scalar_select %p311, %s310, 31
      $region44: #{bottleneck_forward.4} parent=31 // pred_fallthru
        _
    $region32: #{bottleneck_forward.4} parent=5 // pred_fallthru
      _
    %p313 = scmp.le.s32.totalorder 1, %s15
    %p314 = scmp.lt.s32.totalorder %s15, 3
    %p315 = pnand %p313, %p314
    %p316 = pneg %p315
    // Predicated region
    $region45: #{bottleneck_forward.4} parent=5 // pred_check
      _
    $region46: #{bottleneck_forward.4} parent=5 // pred_check_branch
      %318 = sbr.rel (%p315) target = $region48
    $region47: #{bottleneck_forward.4} parent=5 // pred_region
      %s319 = ssub.s32 %s15, 1
      %s320 = smul.u32 16, %s20
      %p321 = scmp.lt.s32.totalorder %s320, 31
      %s322 = scalar_select %p321, %s320, 31
      %s323 = smul.addr %s322, 2
      %s324 = smul.addr %s323, 8
      %s325 = scalar_lea.vmem %s0, %s324
      %p326 = pneg %p41
      %p327 = pneg %p38
      %s328 = smul.u32 %s20, 16
      %s329 = ssub.s32 %s328, 1
      %p330 = scmp.gt.s32.totalorder %s329, 0
      %s331 = scalar_select %p330, %s329, 0
      %p332 = scmp.lt.s32.totalorder %s331, 31
      %s333 = scalar_select %p332, %s331, 31
      %s334 = smul.addr %s333, 2
      %s335 = smul.addr %s334, 8
      %s336 = scalar_lea.vmem %s1, %s335
      %p337 = pneg %p75
      %p338 = pneg %p72
      %s339 = smul.u32 %s20, 16
      %s340 = sadd.s32 %s339, 16
      %p341 = scmp.lt.s32.totalorder %s340, 31
      %s342 = scalar_select %p341, %s340, 31
      %p343 = scmp.lt.s32.totalorder %s342, 31
      %s344 = scalar_select %p343, %s342, 31
      %s345 = smul.addr %s344, 2
      %s346 = smul.addr %s345, 8
      %s347 = scalar_lea.vmem %s2, %s346
      %p348 = pneg %p109
      %p349 = pneg %p106
      %p350 = pneg %p130
      %p351 = pneg %p127
      %p352 = pneg %p151
      %p353 = pneg %p148
      %p354 = pneg %p172
      %p355 = pneg %p169
      %p356 = pneg %p193
      %p357 = pneg %p190
      %p358 = pneg %p219
      %p359 = pneg %p216
      %s360 = smul.u32 32, %s20
      %p361 = scmp.lt.s32.totalorder %s360, 63
      %s362 = scalar_select %p361, %s360, 63
      %s363 = smul.addr %s362, 8
      %s364 = scalar_lea.vmem %s7, %s363
      %p365 = pneg %p240
      %p366 = pneg %p237
      %s367 = smul.u32 16, %s20
      %p368 = scmp.lt.s32.totalorder %s367, 31
      %s369 = scalar_select %p368, %s367, 31
      %s370 = smul.addr %s369, 2
      %s371 = smul.addr %s370, 8
      %s372 = scalar_lea.vmem %s0, %s371
      %s373 = smul.u32 16, %s20
      %s374 = smul.u32 %s20, 16
      %s375 = ssub.s32 %s374, 1
      %p376 = scmp.gt.s32.totalorder %s375, 0
      %s377 = scalar_select %p376, %s375, 0
      %p378 = scmp.lt.s32.totalorder %s377, 31
      %s379 = scalar_select %p378, %s377, 31
      %s380 = smul.addr %s379, 2
      %s381 = smul.addr %s380, 8
      %s382 = scalar_lea.vmem %s1, %s381
      %s383 = smul.u32 %s20, 16
      %s384 = ssub.s32 %s383, 1
      %p385 = scmp.gt.s32.totalorder %s384, 0
      %s386 = scalar_select %p385, %s384, 0
      %s387 = smul.u32 %s20, 16
      %s388 = sadd.s32 %s387, 16
      %p389 = scmp.lt.s32.totalorder %s388, 31
      %s390 = scalar_select %p389, %s388, 31
      %p391 = scmp.lt.s32.totalorder %s390, 31
      %s392 = scalar_select %p391, %s390, 31
      %s393 = smul.addr %s392, 2
      %s394 = smul.addr %s393, 8
      %s395 = scalar_lea.vmem %s2, %s394
      %s396 = smul.u32 %s20, 16
      %s397 = sadd.s32 %s396, 16
      %p398 = scmp.lt.s32.totalorder %s397, 31
      %s399 = scalar_select %p398, %s397, 31
      %s400 = smul.u32 32, %s20
      %p401 = scmp.lt.s32.totalorder %s400, 63
      %s402 = scalar_select %p401, %s400, 63
      %s403 = smul.addr %s402, 8
      %s404 = scalar_lea.vmem %s7, %s403
      %s405 = smul.u32 32, %s20
      %p407 = scmp.eq.s32.totalorder %s20, 0
      // Predicated region
      $region49: #{bottleneck_forward.4} parent=47 // pred_check
        %p408 = pneg %p407
      $region50: #{bottleneck_forward.4} parent=47 // pred_check_branch
        %410 = sbr.rel (%p408) target = $region52
      $region51: #{bottleneck_forward.4} parent=47 // pred_region
        %vm411 = vcmask 25600
        %412 = vst.msk [vmem:[%s8] sm:$0x3] %vm411, 0.0
      $region52: #{bottleneck_forward.4} parent=47 // pred_fallthru
        _
      %v413 = vld [vmem:[%s4] sm:$0x3]
      %v414 = vld [vmem:[%s5] sm:$0x1]
      %v415 = vld [vmem:[%s6] sm:$0x1]
      %v416 = vmul.f32 %v413, 0.001953125
      %v417 = vmul.f32 %v416, %v416
      %v419 = vrot.slane %v417, 7
      %v421 = vsub.f32 %v416, %v419
      %v422 = vmax.f32 %v421, 0.0
      %v423 = vadd.f32 %v422, 1e-05
      %v424 = vrsqrt.pop %v423
      %v427 = vunpack.c.l.s4 1966171168
      %v428 = vunpack.c.0.s8 %v427
      %v429 = vlaneseq
      %v430 = vshrl.u32 %v429, 7
      %v431 = vsub.s32 %v428, %v430
      %v432 = vrot.slane %v424, %v431
      %v433 = vcombine.high %v432, %v432
      %v435 = vunpack.c.l.s4 1966171168
      %v436 = vunpack.c.0.s8 %v435
      %v437 = vlaneseq
      %v438 = vshrl.u32 %v437, 7
      %v439 = vsub.s32 %v436, %v438
      %v440 = vrot.slane %v433, %v439
      %v442 = vmul.f32 %v414, %v440
      %v443 = vmul.f32 %v416, %v442
      %v444 = vsub.f32 %v415, %v443
      %v445 = vld [vmem:[%s382] sm:$0xff]
      %v446 = vld [vmem:[%s382 + $0x8] sm:$0xff]
      %v447 = vld [vmem:[%s372] sm:$0xff]
      %v448 = vld [vmem:[%s372 + $0x8] sm:$0xff]
      %v449 = vld [vmem:[%s372 + $0x10] sm:$0xff]
      %v450 = vld [vmem:[%s372 + $0x18] sm:$0xff]
      %v451 = vld [vmem:[%s372 + $0x20] sm:$0xff]
      %v452 = vld [vmem:[%s372 + $0x28] sm:$0xff]
      %v453 = vld [vmem:[%s372 + $0x30] sm:$0xff]
      %v454 = vld [vmem:[%s372 + $0x38] sm:$0xff]
      %v455 = vld [vmem:[%s372 + $0x40] sm:$0xff]
      %v456 = vld [vmem:[%s372 + $0x48] sm:$0xff]
      %v457 = vld [vmem:[%s372 + $0x50] sm:$0xff]
      %v458 = vld [vmem:[%s372 + $0x58] sm:$0xff]
      %v459 = vld [vmem:[%s372 + $0x60] sm:$0xff]
      %v460 = vld [vmem:[%s372 + $0x68] sm:$0xff]
      %v461 = vld [vmem:[%s372 + $0x70] sm:$0xff]
      %v462 = vld [vmem:[%s372 + $0x78] sm:$0xff]
      %v463 = vld [vmem:[%s372 + $0x80] sm:$0xff]
      %v464 = vld [vmem:[%s372 + $0x88] sm:$0xff]
      %v465 = vld [vmem:[%s372 + $0x90] sm:$0xff]
      %v466 = vld [vmem:[%s372 + $0x98] sm:$0xff]
      %v467 = vld [vmem:[%s372 + $0xa0] sm:$0xff]
      %v468 = vld [vmem:[%s372 + $0xa8] sm:$0xff]
      %v469 = vld [vmem:[%s372 + $0xb0] sm:$0xff]
      %v470 = vld [vmem:[%s372 + $0xb8] sm:$0xff]
      %v471 = vld [vmem:[%s372 + $0xc0] sm:$0xff]
      %v472 = vld [vmem:[%s372 + $0xc8] sm:$0xff]
      %v473 = vld [vmem:[%s372 + $0xd0] sm:$0xff]
      %v474 = vld [vmem:[%s372 + $0xd8] sm:$0xff]
      %v475 = vld [vmem:[%s372 + $0xe0] sm:$0xff]
      %v476 = vld [vmem:[%s372 + $0xe8] sm:$0xff]
      %v477 = vld [vmem:[%s372 + $0xf0] sm:$0xff]
      %v478 = vld [vmem:[%s372 + $0xf8] sm:$0xff]
      %v479 = vld [vmem:[%s395] sm:$0xff]
      %v480 = vld [vmem:[%s395 + $0x8] sm:$0xff]
      %v482 = vlaneseq
      %v483 = vshrl.u32 %v482, 7
      %v484 = vsub.s32 0, %v483
      %v485 = vrot.slane %v442, %v484
      %v487 = vmul.f32 %v445, %v485
      %v488 = vmul.f32 %v446, %v485
      %v489 = vmul.f32 %v447, %v485
      %v490 = vmul.f32 %v448, %v485
      %v491 = vmul.f32 %v449, %v485
      %v492 = vmul.f32 %v450, %v485
      %v493 = vmul.f32 %v451, %v485
      %v494 = vmul.f32 %v452, %v485
      %v495 = vmul.f32 %v453, %v485
      %v496 = vmul.f32 %v454, %v485
      %v497 = vmul.f32 %v455, %v485
      %v498 = vmul.f32 %v456, %v485
      %v499 = vmul.f32 %v457, %v485
      %v500 = vmul.f32 %v458, %v485
      %v501 = vmul.f32 %v459, %v485
      %v502 = vmul.f32 %v460, %v485
      %v503 = vmul.f32 %v461, %v485
      %v504 = vmul.f32 %v462, %v485
      %v505 = vmul.f32 %v463, %v485
      %v506 = vmul.f32 %v464, %v485
      %v507 = vmul.f32 %v465, %v485
      %v508 = vmul.f32 %v466, %v485
      %v509 = vmul.f32 %v467, %v485
      %v510 = vmul.f32 %v468, %v485
      %v511 = vmul.f32 %v469, %v485
      %v512 = vmul.f32 %v470, %v485
      %v513 = vmul.f32 %v471, %v485
      %v514 = vmul.f32 %v472, %v485
      %v515 = vmul.f32 %v473, %v485
      %v516 = vmul.f32 %v474, %v485
      %v517 = vmul.f32 %v475, %v485
      %v518 = vmul.f32 %v476, %v485
      %v519 = vmul.f32 %v477, %v485
      %v520 = vmul.f32 %v478, %v485
      %v521 = vmul.f32 %v479, %v485
      %v522 = vmul.f32 %v480, %v485
      %v524 = vlaneseq
      %v525 = vshrl.u32 %v524, 7
      %v526 = vsub.s32 0, %v525
      %v527 = vrot.slane %v444, %v526
      %v529 = vadd.f32 %v487, %v527
      %v530 = vadd.f32 %v488, %v527
      %v531 = vadd.f32 %v489, %v527
      %v532 = vadd.f32 %v490, %v527
      %v533 = vadd.f32 %v491, %v527
      %v534 = vadd.f32 %v492, %v527
      %v535 = vadd.f32 %v493, %v527
      %v536 = vadd.f32 %v494, %v527
      %v537 = vadd.f32 %v495, %v527
      %v538 = vadd.f32 %v496, %v527
      %v539 = vadd.f32 %v497, %v527
      %v540 = vadd.f32 %v498, %v527
      %v541 = vadd.f32 %v499, %v527
      %v542 = vadd.f32 %v500, %v527
      %v543 = vadd.f32 %v501, %v527
      %v544 = vadd.f32 %v502, %v527
      %v545 = vadd.f32 %v503, %v527
      %v546 = vadd.f32 %v504, %v527
      %v547 = vadd.f32 %v505, %v527
      %v548 = vadd.f32 %v506, %v527
      %v549 = vadd.f32 %v507, %v527
      %v550 = vadd.f32 %v508, %v527
      %v551 = vadd.f32 %v509, %v527
      %v552 = vadd.f32 %v510, %v527
      %v553 = vadd.f32 %v511, %v527
      %v554 = vadd.f32 %v512, %v527
      %v555 = vadd.f32 %v513, %v527
      %v556 = vadd.f32 %v514, %v527
      %v557 = vadd.f32 %v515, %v527
      %v558 = vadd.f32 %v516, %v527
      %v559 = vadd.f32 %v517, %v527
      %v560 = vadd.f32 %v518, %v527
      %v561 = vadd.f32 %v519, %v527
      %v562 = vadd.f32 %v520, %v527
      %v563 = vadd.f32 %v521, %v527
      %v564 = vadd.f32 %v522, %v527
      %vm565 = vcmp.gt.f32.partialorder %v529, 0.0
      %vm566 = vcmp.gt.f32.partialorder %v530, 0.0
      %vm567 = vcmp.gt.f32.partialorder %v531, 0.0
      %vm568 = vcmp.gt.f32.partialorder %v532, 0.0
      %vm569 = vcmp.gt.f32.partialorder %v533, 0.0
      %vm570 = vcmp.gt.f32.partialorder %v534, 0.0
      %vm571 = vcmp.gt.f32.partialorder %v535, 0.0
      %vm572 = vcmp.gt.f32.partialorder %v536, 0.0
      %vm573 = vcmp.gt.f32.partialorder %v537, 0.0
      %vm574 = vcmp.gt.f32.partialorder %v538, 0.0
      %vm575 = vcmp.gt.f32.partialorder %v539, 0.0
      %vm576 = vcmp.gt.f32.partialorder %v540, 0.0
      %vm577 = vcmp.gt.f32.partialorder %v541, 0.0
      %vm578 = vcmp.gt.f32.partialorder %v542, 0.0
      %vm579 = vcmp.gt.f32.partialorder %v543, 0.0
      %vm580 = vcmp.gt.f32.partialorder %v544, 0.0
      %vm581 = vcmp.gt.f32.partialorder %v545, 0.0
      %vm582 = vcmp.gt.f32.partialorder %v546, 0.0
      %vm583 = vcmp.gt.f32.partialorder %v547, 0.0
      %vm584 = vcmp.gt.f32.partialorder %v548, 0.0
      %vm585 = vcmp.gt.f32.partialorder %v549, 0.0
      %vm586 = vcmp.gt.f32.partialorder %v550, 0.0
      %vm587 = vcmp.gt.f32.partialorder %v551, 0.0
      %vm588 = vcmp.gt.f32.partialorder %v552, 0.0
      %vm589 = vcmp.gt.f32.partialorder %v553, 0.0
      %vm590 = vcmp.gt.f32.partialorder %v554, 0.0
      %vm591 = vcmp.gt.f32.partialorder %v555, 0.0
      %vm592 = vcmp.gt.f32.partialorder %v556, 0.0
      %vm593 = vcmp.gt.f32.partialorder %v557, 0.0
      %vm594 = vcmp.gt.f32.partialorder %v558, 0.0
      %vm595 = vcmp.gt.f32.partialorder %v559, 0.0
      %vm596 = vcmp.gt.f32.partialorder %v560, 0.0
      %vm597 = vcmp.gt.f32.partialorder %v561, 0.0
      %vm598 = vcmp.gt.f32.partialorder %v562, 0.0
      %vm599 = vcmp.gt.f32.partialorder %v563, 0.0
      %vm600 = vcmp.gt.f32.partialorder %v564, 0.0
      %v601 = vmul.f32 %v529, 0.1
      %v602 = vmul.f32 %v530, 0.1
      %v603 = vmul.f32 %v531, 0.1
      %v604 = vmul.f32 %v532, 0.1
      %v605 = vmul.f32 %v533, 0.1
      %v606 = vmul.f32 %v534, 0.1
      %v607 = vmul.f32 %v535, 0.1
      %v608 = vmul.f32 %v536, 0.1
      %v609 = vmul.f32 %v537, 0.1
      %v610 = vmul.f32 %v538, 0.1
      %v611 = vmul.f32 %v539, 0.1
      %v612 = vmul.f32 %v540, 0.1
      %v613 = vmul.f32 %v541, 0.1
      %v614 = vmul.f32 %v542, 0.1
      %v615 = vmul.f32 %v543, 0.1
      %v616 = vmul.f32 %v544, 0.1
      %v617 = vmul.f32 %v545, 0.1
      %v618 = vmul.f32 %v546, 0.1
      %v619 = vmul.f32 %v547, 0.1
      %v620 = vmul.f32 %v548, 0.1
      %v621 = vmul.f32 %v549, 0.1
      %v622 = vmul.f32 %v550, 0.1
      %v623 = vmul.f32 %v551, 0.1
      %v624 = vmul.f32 %v552, 0.1
      %v625 = vmul.f32 %v553, 0.1
      %v626 = vmul.f32 %v554, 0.1
      %v627 = vmul.f32 %v555, 0.1
      %v628 = vmul.f32 %v556, 0.1
      %v629 = vmul.f32 %v557, 0.1
      %v630 = vmul.f32 %v558, 0.1
      %v631 = vmul.f32 %v559, 0.1
      %v632 = vmul.f32 %v560, 0.1
      %v633 = vmul.f32 %v561, 0.1
      %v634 = vmul.f32 %v562, 0.1
      %v635 = vmul.f32 %v563, 0.1
      %v636 = vmul.f32 %v564, 0.1
      %v637 = vsel %vm565, %v529, %v601
      %v638 = vsel %vm566, %v530, %v602
      %v639 = vsel %vm567, %v531, %v603
      %v640 = vsel %vm568, %v532, %v604
      %v641 = vsel %vm569, %v533, %v605
      %v642 = vsel %vm570, %v534, %v606
      %v643 = vsel %vm571, %v535, %v607
      %v644 = vsel %vm572, %v536, %v608
      %v645 = vsel %vm573, %v537, %v609
      %v646 = vsel %vm574, %v538, %v610
      %v647 = vsel %vm575, %v539, %v611
      %v648 = vsel %vm576, %v540, %v612
      %v649 = vsel %vm577, %v541, %v613
      %v650 = vsel %vm578, %v542, %v614
      %v651 = vsel %vm579, %v543, %v615
      %v652 = vsel %vm580, %v544, %v616
      %v653 = vsel %vm581, %v545, %v617
      %v654 = vsel %vm582, %v546, %v618
      %v655 = vsel %vm583, %v547, %v619
      %v656 = vsel %vm584, %v548, %v620
      %v657 = vsel %vm585, %v549, %v621
      %v658 = vsel %vm586, %v550, %v622
      %v659 = vsel %vm587, %v551, %v623
      %v660 = vsel %vm588, %v552, %v624
      %v661 = vsel %vm589, %v553, %v625
      %v662 = vsel %vm590, %v554, %v626
      %v663 = vsel %vm591, %v555, %v627
      %v664 = vsel %vm592, %v556, %v628
      %v665 = vsel %vm593, %v557, %v629
      %v666 = vsel %vm594, %v558, %v630
      %v667 = vsel %vm595, %v559, %v631
      %v668 = vsel %vm596, %v560, %v632
      %v669 = vsel %vm597, %v561, %v633
      %v670 = vsel %vm598, %v562, %v634
      %v671 = vsel %vm599, %v563, %v635
      %v672 = vsel %vm600, %v564, %v636
      %v673 = vsel 0, %v637, 0.0
      %v674 = vsel 0, %v638, 0.0
      %v675 = vsel 1, %v639, 0.0
      %v676 = vsel 1, %v640, 0.0
      %v677 = vsel 1, %v641, 0.0
      %v678 = vsel 1, %v642, 0.0
      %v679 = vsel 1, %v643, 0.0
      %v680 = vsel 1, %v644, 0.0
      %v681 = vsel 1, %v645, 0.0
      %v682 = vsel 1, %v646, 0.0
      %v683 = vsel 1, %v647, 0.0
      %v684 = vsel 1, %v648, 0.0
      %v685 = vsel 1, %v649, 0.0
      %v686 = vsel 1, %v650, 0.0
      %v687 = vsel 1, %v651, 0.0
      %v688 = vsel 1, %v652, 0.0
      %v689 = vsel 1, %v653, 0.0
      %v690 = vsel 1, %v654, 0.0
      %v691 = vsel 1, %v655, 0.0
      %v692 = vsel 1, %v656, 0.0
      %v693 = vsel 1, %v657, 0.0
      %v694 = vsel 1, %v658, 0.0
      %v695 = vsel 1, %v659, 0.0
      %v696 = vsel 1, %v660, 0.0
      %v697 = vsel 1, %v661, 0.0
      %v698 = vsel 1, %v662, 0.0
      %v699 = vsel 1, %v663, 0.0
      %v700 = vsel 1, %v664, 0.0
      %v701 = vsel 1, %v665, 0.0
      %v702 = vsel 1, %v666, 0.0
      %v703 = vsel 1, %v667, 0.0
      %v704 = vsel 1, %v668, 0.0
      %v705 = vsel 1, %v669, 0.0
      %v706 = vsel 1, %v670, 0.0
      %v707 = vsel 0, %v671, 0.0
      %v708 = vsel 0, %v672, 0.0
      %vm745 = vcmask 1040384
      %v746 = vrot.slane %v673, 7
      %v747 = vrot.slane %v674, 7
      %v748 = vsel %vm745, %v746, %v747
      %v749 = vrot.slane %v675, 7
      %v750 = vrot.slane %v676, 7
      %v751 = vsel %vm745, %v749, %v750
      %v752 = vrot.slane %v677, 7
      %v753 = vrot.slane %v678, 7
      %v754 = vsel %vm745, %v752, %v753
      %v755 = vrot.slane %v679, 7
      %v756 = vrot.slane %v680, 7
      %v757 = vsel %vm745, %v755, %v756
      %v758 = vrot.slane %v681, 7
      %v759 = vrot.slane %v682, 7
      %v760 = vsel %vm745, %v758, %v759
      %v761 = vrot.slane %v683, 7
      %v762 = vrot.slane %v684, 7
      %v763 = vsel %vm745, %v761, %v762
      %v764 = vrot.slane %v685, 7
      %v765 = vrot.slane %v686, 7
      %v766 = vsel %vm745, %v764, %v765
      %v767 = vrot.slane %v687, 7
      %v768 = vrot.slane %v688, 7
      %v769 = vsel %vm745, %v767, %v768
      %v770 = vrot.slane %v689, 7
      %v771 = vrot.slane %v690, 7
      %v772 = vsel %vm745, %v770, %v771
      %v773 = vrot.slane %v691, 7
      %v774 = vrot.slane %v692, 7
      %v775 = vsel %vm745, %v773, %v774
      %v776 = vrot.slane %v693, 7
      %v777 = vrot.slane %v694, 7
      %v778 = vsel %vm745, %v776, %v777
      %v779 = vrot.slane %v695, 7
      %v780 = vrot.slane %v696, 7
      %v781 = vsel %vm745, %v779, %v780
      %v782 = vrot.slane %v697, 7
      %v783 = vrot.slane %v698, 7
      %v784 = vsel %vm745, %v782, %v783
      %v785 = vrot.slane %v699, 7
      %v786 = vrot.slane %v700, 7
      %v787 = vsel %vm745, %v785, %v786
      %v788 = vrot.slane %v701, 7
      %v789 = vrot.slane %v702, 7
      %v790 = vsel %vm745, %v788, %v789
      %v791 = vrot.slane %v703, 7
      %v792 = vrot.slane %v704, 7
      %v793 = vsel %vm745, %v791, %v792
      %v794 = vrot.slane %v705, 7
      %v795 = vrot.slane %v706, 7
      %v796 = vsel %vm745, %v794, %v795
      %v797 = vrot.slane %v707, 7
      %v798 = vrot.slane %v708, 7
      %v799 = vsel %vm745, %v797, %v798
      %v852 = vsel %vm745, 0.0, %v746
      %v853 = vsel %vm745, 0.0, %v749
      %v854 = vsel %vm745, 0.0, %v752
      %v855 = vsel %vm745, 0.0, %v755
      %v856 = vsel %vm745, 0.0, %v758
      %v857 = vsel %vm745, 0.0, %v761
      %v858 = vsel %vm745, 0.0, %v764
      %v859 = vsel %vm745, 0.0, %v767
      %v860 = vsel %vm745, 0.0, %v770
      %v861 = vsel %vm745, 0.0, %v773
      %v862 = vsel %vm745, 0.0, %v776
      %v863 = vsel %vm745, 0.0, %v779
      %v864 = vsel %vm745, 0.0, %v782
      %v865 = vsel %vm745, 0.0, %v785
      %v866 = vsel %vm745, 0.0, %v788
      %v867 = vsel %vm745, 0.0, %v791
      %v868 = vsel %vm745, 0.0, %v794
      %v869 = vsel %vm745, 0.0, %v797
      %v870 = vsel %vm745, %v747, 0.0
      %v871 = vsel %vm745, %v750, 0.0
      %v872 = vsel %vm745, %v753, 0.0
      %v873 = vsel %vm745, %v756, 0.0
      %v874 = vsel %vm745, %v759, 0.0
      %v875 = vsel %vm745, %v762, 0.0
      %v876 = vsel %vm745, %v765, 0.0
      %v877 = vsel %vm745, %v768, 0.0
      %v878 = vsel %vm745, %v771, 0.0
      %v879 = vsel %vm745, %v774, 0.0
      %v880 = vsel %vm745, %v777, 0.0
      %v881 = vsel %vm745, %v780, 0.0
      %v882 = vsel %vm745, %v783, 0.0
      %v883 = vsel %vm745, %v786, 0.0
      %v884 = vsel %vm745, %v789, 0.0
      %v885 = vsel %vm745, %v792, 0.0
      %v886 = vsel %vm745, %v795, 0.0
      %v887 = vsel %vm745, %v798, 0.0
      %vm920 = vcmask 1046528
      %v921 = vrot.slane %v852, 1
      %v922 = vrot.slane %v748, 1
      %v923 = vsel %vm920, %v921, %v922
      %v924 = vrot.slane %v870, 1
      %v925 = vsel %vm920, %v922, %v924
      %v926 = vrot.slane %v853, 1
      %v927 = vrot.slane %v751, 1
      %v928 = vsel %vm920, %v926, %v927
      %v929 = vrot.slane %v871, 1
      %v930 = vsel %vm920, %v927, %v929
      %v931 = vrot.slane %v854, 1
      %v932 = vrot.slane %v754, 1
      %v933 = vsel %vm920, %v931, %v932
      %v934 = vrot.slane %v872, 1
      %v935 = vsel %vm920, %v932, %v934
      %v936 = vrot.slane %v855, 1
      %v937 = vrot.slane %v757, 1
      %v938 = vsel %vm920, %v936, %v937
      %v939 = vrot.slane %v873, 1
      %v940 = vsel %vm920, %v937, %v939
      %v941 = vrot.slane %v856, 1
      %v942 = vrot.slane %v760, 1
      %v943 = vsel %vm920, %v941, %v942
      %v944 = vrot.slane %v874, 1
      %v945 = vsel %vm920, %v942, %v944
      %v946 = vrot.slane %v857, 1
      %v947 = vrot.slane %v763, 1
      %v948 = vsel %vm920, %v946, %v947
      %v949 = vrot.slane %v875, 1
      %v950 = vsel %vm920, %v947, %v949
      %v951 = vrot.slane %v858, 1
      %v952 = vrot.slane %v766, 1
      %v953 = vsel %vm920, %v951, %v952
      %v954 = vrot.slane %v876, 1
      %v955 = vsel %vm920, %v952, %v954
      %v956 = vrot.slane %v859, 1
      %v957 = vrot.slane %v769, 1
      %v958 = vsel %vm920, %v956, %v957
      %v959 = vrot.slane %v877, 1
      %v960 = vsel %vm920, %v957, %v959
      %v961 = vrot.slane %v860, 1
      %v962 = vrot.slane %v772, 1
      %v963 = vsel %vm920, %v961, %v962
      %v964 = vrot.slane %v878, 1
      %v965 = vsel %vm920, %v962, %v964
      %v966 = vrot.slane %v861, 1
      %v967 = vrot.slane %v775, 1
      %v968 = vsel %vm920, %v966, %v967
      %v969 = vrot.slane %v879, 1
      %v970 = vsel %vm920, %v967, %v969
      %v971 = vrot.slane %v862, 1
      %v972 = vrot.slane %v778, 1
      %v973 = vsel %vm920, %v971, %v972
      %v974 = vrot.slane %v880, 1
      %v975 = vsel %vm920, %v972, %v974
      %v976 = vrot.slane %v863, 1
      %v977 = vrot.slane %v781, 1
      %v978 = vsel %vm920, %v976, %v977
      %v979 = vrot.slane %v881, 1
      %v980 = vsel %vm920, %v977, %v979
      %v981 = vrot.slane %v864, 1
      %v982 = vrot.slane %v784, 1
      %v983 = vsel %vm920, %v981, %v982
      %v984 = vrot.slane %v882, 1
      %v985 = vsel %vm920, %v982, %v984
      %v986 = vrot.slane %v865, 1
      %v987 = vrot.slane %v787, 1
      %v988 = vsel %vm920, %v986, %v987
      %v989 = vrot.slane %v883, 1
      %v990 = vsel %vm920, %v987, %v989
      %v991 = vrot.slane %v866, 1
      %v992 = vrot.slane %v790, 1
      %v993 = vsel %vm920, %v991, %v992
      %v994 = vrot.slane %v884, 1
      %v995 = vsel %vm920, %v992, %v994
      %v996 = vrot.slane %v867, 1
      %v997 = vrot.slane %v793, 1
      %v998 = vsel %vm920, %v996, %v997
      %v999 = vrot.slane %v885, 1
      %v1000 = vsel %vm920, %v997, %v999
      %1001 = vrot.lane.b32.xlu0 %v923, 4
      %v1002 = vpop.permute.xlu0 %1001
      %1003 = vrot.lane.b32.xlu0 %v925, 4
      %v1004 = vpop.permute.xlu0 %1003
      %1005 = vrot.lane.b32.xlu0 %v928, 4
      %v1006 = vpop.permute.xlu0 %1005
      %1007 = vrot.lane.b32.xlu0 %v930, 4
      %v1008 = vpop.permute.xlu0 %1007
      %1009 = vrot.lane.b32.xlu0 %v933, 4
      %v1010 = vpop.permute.xlu0 %1009
      %1011 = vrot.lane.b32.xlu0 %v935, 4
      %v1012 = vpop.permute.xlu0 %1011
      %1013 = vrot.lane.b32.xlu0 %v938, 4
      %v1014 = vpop.permute.xlu0 %1013
      %1015 = vrot.lane.b32.xlu0 %v940, 4
      %v1016 = vpop.permute.xlu0 %1015
      %1017 = vrot.lane.b32.xlu0 %v943, 4
      %v1018 = vpop.permute.xlu0 %1017
      %1019 = vrot.lane.b32.xlu0 %v945, 4
      %v1020 = vpop.permute.xlu0 %1019
      %1021 = vrot.lane.b32.xlu0 %v948, 4
      %v1022 = vpop.permute.xlu0 %1021
      %1023 = vrot.lane.b32.xlu0 %v950, 4
      %v1024 = vpop.permute.xlu0 %1023
      %1025 = vrot.lane.b32.xlu0 %v953, 4
      %v1026 = vpop.permute.xlu0 %1025
      %1027 = vrot.lane.b32.xlu0 %v955, 4
      %v1028 = vpop.permute.xlu0 %1027
      %1029 = vrot.lane.b32.xlu0 %v958, 4
      %v1030 = vpop.permute.xlu0 %1029
      %1031 = vrot.lane.b32.xlu0 %v960, 4
      %v1032 = vpop.permute.xlu0 %1031
      %1033 = vrot.lane.b32.xlu0 %v963, 4
      %v1034 = vpop.permute.xlu0 %1033
      %1035 = vrot.lane.b32.xlu0 %v965, 4
      %v1036 = vpop.permute.xlu0 %1035
      %1037 = vrot.lane.b32.xlu0 %v968, 4
      %v1038 = vpop.permute.xlu0 %1037
      %1039 = vrot.lane.b32.xlu0 %v970, 4
      %v1040 = vpop.permute.xlu0 %1039
      %1041 = vrot.lane.b32.xlu0 %v973, 4
      %v1042 = vpop.permute.xlu0 %1041
      %1043 = vrot.lane.b32.xlu0 %v975, 4
      %v1044 = vpop.permute.xlu0 %1043
      %1045 = vrot.lane.b32.xlu0 %v978, 4
      %v1046 = vpop.permute.xlu0 %1045
      %1047 = vrot.lane.b32.xlu0 %v980, 4
      %v1048 = vpop.permute.xlu0 %1047
      %1049 = vrot.lane.b32.xlu0 %v983, 4
      %v1050 = vpop.permute.xlu0 %1049
      %1051 = vrot.lane.b32.xlu0 %v985, 4
      %v1052 = vpop.permute.xlu0 %1051
      %1053 = vrot.lane.b32.xlu0 %v988, 4
      %v1054 = vpop.permute.xlu0 %1053
      %1055 = vrot.lane.b32.xlu0 %v990, 4
      %v1056 = vpop.permute.xlu0 %1055
      %1057 = vrot.lane.b32.xlu0 %v993, 4
      %v1058 = vpop.permute.xlu0 %1057
      %1059 = vrot.lane.b32.xlu0 %v995, 4
      %v1060 = vpop.permute.xlu0 %1059
      %1061 = vrot.lane.b32.xlu0 %v998, 4
      %v1062 = vpop.permute.xlu0 %1061
      %1063 = vrot.lane.b32.xlu0 %v1000, 4
      %v1064 = vpop.permute.xlu0 %1063
      %vm1097 = vcmask 1045504
      %v1098 = vrot.slane %v852, 2
      %v1099 = vrot.slane %v748, 2
      %v1100 = vsel %vm1097, %v1098, %v1099
      %v1101 = vrot.slane %v870, 2
      %v1102 = vsel %vm1097, %v1099, %v1101
      %v1103 = vrot.slane %v853, 2
      %v1104 = vrot.slane %v751, 2
      %v1105 = vsel %vm1097, %v1103, %v1104
      %v1106 = vrot.slane %v871, 2
      %v1107 = vsel %vm1097, %v1104, %v1106
      %v1108 = vrot.slane %v854, 2
      %v1109 = vrot.slane %v754, 2
      %v1110 = vsel %vm1097, %v1108, %v1109
      %v1111 = vrot.slane %v872, 2
      %v1112 = vsel %vm1097, %v1109, %v1111
      %v1113 = vrot.slane %v855, 2
      %v1114 = vrot.slane %v757, 2
      %v1115 = vsel %vm1097, %v1113, %v1114
      %v1116 = vrot.slane %v873, 2
      %v1117 = vsel %vm1097, %v1114, %v1116
      %v1118 = vrot.slane %v856, 2
      %v1119 = vrot.slane %v760, 2
      %v1120 = vsel %vm1097, %v1118, %v1119
      %v1121 = vrot.slane %v874, 2
      %v1122 = vsel %vm1097, %v1119, %v1121
      %v1123 = vrot.slane %v857, 2
      %v1124 = vrot.slane %v763, 2
      %v1125 = vsel %vm1097, %v1123, %v1124
      %v1126 = vrot.slane %v875, 2
      %v1127 = vsel %vm1097, %v1124, %v1126
      %v1128 = vrot.slane %v858, 2
      %v1129 = vrot.slane %v766, 2
      %v1130 = vsel %vm1097, %v1128, %v1129
      %v1131 = vrot.slane %v876, 2
      %v1132 = vsel %vm1097, %v1129, %v1131
      %v1133 = vrot.slane %v859, 2
      %v1134 = vrot.slane %v769, 2
      %v1135 = vsel %vm1097, %v1133, %v1134
      %v1136 = vrot.slane %v877, 2
      %v1137 = vsel %vm1097, %v1134, %v1136
      %v1138 = vrot.slane %v860, 2
      %v1139 = vrot.slane %v772, 2
      %v1140 = vsel %vm1097, %v1138, %v1139
      %v1141 = vrot.slane %v878, 2
      %v1142 = vsel %vm1097, %v1139, %v1141
      %v1143 = vrot.slane %v861, 2
      %v1144 = vrot.slane %v775, 2
      %v1145 = vsel %vm1097, %v1143, %v1144
      %v1146 = vrot.slane %v879, 2
      %v1147 = vsel %vm1097, %v1144, %v1146
      %v1148 = vrot.slane %v862, 2
      %v1149 = vrot.slane %v778, 2
      %v1150 = vsel %vm1097, %v1148, %v1149
      %v1151 = vrot.slane %v880, 2
      %v1152 = vsel %vm1097, %v1149, %v1151
      %v1153 = vrot.slane %v863, 2
      %v1154 = vrot.slane %v781, 2
      %v1155 = vsel %vm1097, %v1153, %v1154
      %v1156 = vrot.slane %v881, 2
      %v1157 = vsel %vm1097, %v1154, %v1156
      %v1158 = vrot.slane %v864, 2
      %v1159 = vrot.slane %v784, 2
      %v1160 = vsel %vm1097, %v1158, %v1159
      %v1161 = vrot.slane %v882, 2
      %v1162 = vsel %vm1097, %v1159, %v1161
      %v1163 = vrot.slane %v865, 2
      %v1164 = vrot.slane %v787, 2
      %v1165 = vsel %vm1097, %v1163, %v1164
      %v1166 = vrot.slane %v883, 2
      %v1167 = vsel %vm1097, %v1164, %v1166
      %v1168 = vrot.slane %v866, 2
      %v1169 = vrot.slane %v790, 2
      %v1170 = vsel %vm1097, %v1168, %v1169
      %v1171 = vrot.slane %v884, 2
      %v1172 = vsel %vm1097, %v1169, %v1171
      %v1173 = vrot.slane %v867, 2
      %v1174 = vrot.slane %v793, 2
      %v1175 = vsel %vm1097, %v1173, %v1174
      %v1176 = vrot.slane %v885, 2
      %v1177 = vsel %vm1097, %v1174, %v1176
      %1178 = vrot.lane.b32.xlu0 %v1100, 8
      %v1179 = vpop.permute.xlu0 %1178
      %1180 = vrot.lane.b32.xlu0 %v1102, 8
      %v1181 = vpop.permute.xlu0 %1180
      %1182 = vrot.lane.b32.xlu0 %v1105, 8
      %v1183 = vpop.permute.xlu0 %1182
      %1184 = vrot.lane.b32.xlu0 %v1107, 8
      %v1185 = vpop.permute.xlu0 %1184
      %1186 = vrot.lane.b32.xlu0 %v1110, 8
      %v1187 = vpop.permute.xlu0 %1186
      %1188 = vrot.lane.b32.xlu0 %v1112, 8
      %v1189 = vpop.permute.xlu0 %1188
      %1190 = vrot.lane.b32.xlu0 %v1115, 8
      %v1191 = vpop.permute.xlu0 %1190
      %1192 = vrot.lane.b32.xlu0 %v1117, 8
      %v1193 = vpop.permute.xlu0 %1192
      %1194 = vrot.lane.b32.xlu0 %v1120, 8
      %v1195 = vpop.permute.xlu0 %1194
      %1196 = vrot.lane.b32.xlu0 %v1122, 8
      %v1197 = vpop.permute.xlu0 %1196
      %1198 = vrot.lane.b32.xlu0 %v1125, 8
      %v1199 = vpop.permute.xlu0 %1198
      %1200 = vrot.lane.b32.xlu0 %v1127, 8
      %v1201 = vpop.permute.xlu0 %1200
      %1202 = vrot.lane.b32.xlu0 %v1130, 8
      %v1203 = vpop.permute.xlu0 %1202
      %1204 = vrot.lane.b32.xlu0 %v1132, 8
      %v1205 = vpop.permute.xlu0 %1204
      %1206 = vrot.lane.b32.xlu0 %v1135, 8
      %v1207 = vpop.permute.xlu0 %1206
      %1208 = vrot.lane.b32.xlu0 %v1137, 8
      %v1209 = vpop.permute.xlu0 %1208
      %1210 = vrot.lane.b32.xlu0 %v1140, 8
      %v1211 = vpop.permute.xlu0 %1210
      %1212 = vrot.lane.b32.xlu0 %v1142, 8
      %v1213 = vpop.permute.xlu0 %1212
      %1214 = vrot.lane.b32.xlu0 %v1145, 8
      %v1215 = vpop.permute.xlu0 %1214
      %1216 = vrot.lane.b32.xlu0 %v1147, 8
      %v1217 = vpop.permute.xlu0 %1216
      %1218 = vrot.lane.b32.xlu0 %v1150, 8
      %v1219 = vpop.permute.xlu0 %1218
      %1220 = vrot.lane.b32.xlu0 %v1152, 8
      %v1221 = vpop.permute.xlu0 %1220
      %1222 = vrot.lane.b32.xlu0 %v1155, 8
      %v1223 = vpop.permute.xlu0 %1222
      %1224 = vrot.lane.b32.xlu0 %v1157, 8
      %v1225 = vpop.permute.xlu0 %1224
      %1226 = vrot.lane.b32.xlu0 %v1160, 8
      %v1227 = vpop.permute.xlu0 %1226
      %1228 = vrot.lane.b32.xlu0 %v1162, 8
      %v1229 = vpop.permute.xlu0 %1228
      %1230 = vrot.lane.b32.xlu0 %v1165, 8
      %v1231 = vpop.permute.xlu0 %1230
      %1232 = vrot.lane.b32.xlu0 %v1167, 8
      %v1233 = vpop.permute.xlu0 %1232
      %1234 = vrot.lane.b32.xlu0 %v1170, 8
      %v1235 = vpop.permute.xlu0 %1234
      %1236 = vrot.lane.b32.xlu0 %v1172, 8
      %v1237 = vpop.permute.xlu0 %1236
      %1238 = vrot.lane.b32.xlu0 %v1175, 8
      %v1239 = vpop.permute.xlu0 %1238
      %1240 = vrot.lane.b32.xlu0 %v1177, 8
      %v1241 = vpop.permute.xlu0 %1240
      %1275 = vrot.lane.b32.xlu0 %v853, 12
      %v1276 = vpop.permute.xlu0 %1275
      %1277 = vrot.lane.b32.xlu0 %v751, 12
      %v1278 = vpop.permute.xlu0 %1277
      %1279 = vrot.lane.b32.xlu0 %v854, 12
      %v1280 = vpop.permute.xlu0 %1279
      %1281 = vrot.lane.b32.xlu0 %v754, 12
      %v1282 = vpop.permute.xlu0 %1281
      %1283 = vrot.lane.b32.xlu0 %v855, 12
      %v1284 = vpop.permute.xlu0 %1283
      %1285 = vrot.lane.b32.xlu0 %v757, 12
      %v1286 = vpop.permute.xlu0 %1285
      %1287 = vrot.lane.b32.xlu0 %v856, 12
      %v1288 = vpop.permute.xlu0 %1287
      %1289 = vrot.lane.b32.xlu0 %v760, 12
      %v1290 = vpop.permute.xlu0 %1289
      %1291 = vrot.lane.b32.xlu0 %v857, 12
      %v1292 = vpop.permute.xlu0 %1291
      %1293 = vrot.lane.b32.xlu0 %v763, 12
      %v1294 = vpop.permute.xlu0 %1293
      %1295 = vrot.lane.b32.xlu0 %v858, 12
      %v1296 = vpop.permute.xlu0 %1295
      %1297 = vrot.lane.b32.xlu0 %v766, 12
      %v1298 = vpop.permute.xlu0 %1297
      %1299 = vrot.lane.b32.xlu0 %v859, 12
      %v1300 = vpop.permute.xlu0 %1299
      %1301 = vrot.lane.b32.xlu0 %v769, 12
      %v1302 = vpop.permute.xlu0 %1301
      %1303 = vrot.lane.b32.xlu0 %v860, 12
      %v1304 = vpop.permute.xlu0 %1303
      %1305 = vrot.lane.b32.xlu0 %v772, 12
      %v1306 = vpop.permute.xlu0 %1305
      %1307 = vrot.lane.b32.xlu0 %v861, 12
      %v1308 = vpop.permute.xlu0 %1307
      %1309 = vrot.lane.b32.xlu0 %v775, 12
      %v1310 = vpop.permute.xlu0 %1309
      %1311 = vrot.lane.b32.xlu0 %v862, 12
      %v1312 = vpop.permute.xlu0 %1311
      %1313 = vrot.lane.b32.xlu0 %v778, 12
      %v1314 = vpop.permute.xlu0 %1313
      %1315 = vrot.lane.b32.xlu0 %v863, 12
      %v1316 = vpop.permute.xlu0 %1315
      %1317 = vrot.lane.b32.xlu0 %v781, 12
      %v1318 = vpop.permute.xlu0 %1317
      %1319 = vrot.lane.b32.xlu0 %v864, 12
      %v1320 = vpop.permute.xlu0 %1319
      %1321 = vrot.lane.b32.xlu0 %v784, 12
      %v1322 = vpop.permute.xlu0 %1321
      %1323 = vrot.lane.b32.xlu0 %v865, 12
      %v1324 = vpop.permute.xlu0 %1323
      %1325 = vrot.lane.b32.xlu0 %v787, 12
      %v1326 = vpop.permute.xlu0 %1325
      %1327 = vrot.lane.b32.xlu0 %v866, 12
      %v1328 = vpop.permute.xlu0 %1327
      %1329 = vrot.lane.b32.xlu0 %v790, 12
      %v1330 = vpop.permute.xlu0 %1329
      %1331 = vrot.lane.b32.xlu0 %v867, 12
      %v1332 = vpop.permute.xlu0 %1331
      %1333 = vrot.lane.b32.xlu0 %v793, 12
      %v1334 = vpop.permute.xlu0 %1333
      %1335 = vrot.lane.b32.xlu0 %v868, 12
      %v1336 = vpop.permute.xlu0 %1335
      %1337 = vrot.lane.b32.xlu0 %v796, 12
      %v1338 = vpop.permute.xlu0 %1337
      %v1372 = vrot.slane %v868, 1
      %v1373 = vrot.slane %v796, 1
      %v1374 = vsel %vm920, %v1372, %v1373
      %v1375 = vrot.slane %v886, 1
      %v1376 = vsel %vm920, %v1373, %v1375
      %1377 = vrot.lane.b32.xlu0 %v928, 16
      %v1378 = vpop.permute.xlu0 %1377
      %1379 = vrot.lane.b32.xlu0 %v930, 16
      %v1380 = vpop.permute.xlu0 %1379
      %1381 = vrot.lane.b32.xlu0 %v933, 16
      %v1382 = vpop.permute.xlu0 %1381
      %1383 = vrot.lane.b32.xlu0 %v935, 16
      %v1384 = vpop.permute.xlu0 %1383
      %1385 = vrot.lane.b32.xlu0 %v938, 16
      %v1386 = vpop.permute.xlu0 %1385
      %1387 = vrot.lane.b32.xlu0 %v940, 16
      %v1388 = vpop.permute.xlu0 %1387
      %1389 = vrot.lane.b32.xlu0 %v943, 16
      %v1390 = vpop.permute.xlu0 %1389
      %1391 = vrot.lane.b32.xlu0 %v945, 16
      %v1392 = vpop.permute.xlu0 %1391
      %1393 = vrot.lane.b32.xlu0 %v948, 16
      %v1394 = vpop.permute.xlu0 %1393
      %1395 = vrot.lane.b32.xlu0 %v950, 16
      %v1396 = vpop.permute.xlu0 %1395
      %1397 = vrot.lane.b32.xlu0 %v953, 16
      %v1398 = vpop.permute.xlu0 %1397
      %1399 = vrot.lane.b32.xlu0 %v955, 16
      %v1400 = vpop.permute.xlu0 %1399
      %1401 = vrot.lane.b32.xlu0 %v958, 16
      %v1402 = vpop.permute.xlu0 %1401
      %1403 = vrot.lane.b32.xlu0 %v960, 16
      %v1404 = vpop.permute.xlu0 %1403
      %1405 = vrot.lane.b32.xlu0 %v963, 16
      %v1406 = vpop.permute.xlu0 %1405
      %1407 = vrot.lane.b32.xlu0 %v965, 16
      %v1408 = vpop.permute.xlu0 %1407
      %1409 = vrot.lane.b32.xlu0 %v968, 16
      %v1410 = vpop.permute.xlu0 %1409
      %1411 = vrot.lane.b32.xlu0 %v970, 16
      %v1412 = vpop.permute.xlu0 %1411
      %1413 = vrot.lane.b32.xlu0 %v973, 16
      %v1414 = vpop.permute.xlu0 %1413
      %1415 = vrot.lane.b32.xlu0 %v975, 16
      %v1416 = vpop.permute.xlu0 %1415
      %1417 = vrot.lane.b32.xlu0 %v978, 16
      %v1418 = vpop.permute.xlu0 %1417
      %1419 = vrot.lane.b32.xlu0 %v980, 16
      %v1420 = vpop.permute.xlu0 %1419
      %1421 = vrot.lane.b32.xlu0 %v983, 16
      %v1422 = vpop.permute.xlu0 %1421
      %1423 = vrot.lane.b32.xlu0 %v985, 16
      %v1424 = vpop.permute.xlu0 %1423
      %1425 = vrot.lane.b32.xlu0 %v988, 16
      %v1426 = vpop.permute.xlu0 %1425
      %1427 = vrot.lane.b32.xlu0 %v990, 16
      %v1428 = vpop.permute.xlu0 %1427
      %1429 = vrot.lane.b32.xlu0 %v993, 16
      %v1430 = vpop.permute.xlu0 %1429
      %1431 = vrot.lane.b32.xlu0 %v995, 16
      %v1432 = vpop.permute.xlu0 %1431
      %1433 = vrot.lane.b32.xlu0 %v998, 16
      %v1434 = vpop.permute.xlu0 %1433
      %1435 = vrot.lane.b32.xlu0 %v1000, 16
      %v1436 = vpop.permute.xlu0 %1435
      %1437 = vrot.lane.b32.xlu0 %v1374, 16
      %v1438 = vpop.permute.xlu0 %1437
      %1439 = vrot.lane.b32.xlu0 %v1376, 16
      %v1440 = vpop.permute.xlu0 %1439
      %v1473 = vrot.slane %v868, 2
      %v1474 = vrot.slane %v796, 2
      %v1475 = vsel %vm1097, %v1473, %v1474
      %v1476 = vrot.slane %v886, 2
      %v1477 = vsel %vm1097, %v1474, %v1476
      %1478 = vrot.lane.b32.xlu0 %v1105, 20
      %v1479 = vpop.permute.xlu0 %1478
      %1480 = vrot.lane.b32.xlu0 %v1107, 20
      %v1481 = vpop.permute.xlu0 %1480
      %1482 = vrot.lane.b32.xlu0 %v1110, 20
      %v1483 = vpop.permute.xlu0 %1482
      %1484 = vrot.lane.b32.xlu0 %v1112, 20
      %v1485 = vpop.permute.xlu0 %1484
      %1486 = vrot.lane.b32.xlu0 %v1115, 20
      %v1487 = vpop.permute.xlu0 %1486
      %1488 = vrot.lane.b32.xlu0 %v1117, 20
      %v1489 = vpop.permute.xlu0 %1488
      %1490 = vrot.lane.b32.xlu0 %v1120, 20
      %v1491 = vpop.permute.xlu0 %1490
      %1492 = vrot.lane.b32.xlu0 %v1122, 20
      %v1493 = vpop.permute.xlu0 %1492
      %1494 = vrot.lane.b32.xlu0 %v1125, 20
      %v1495 = vpop.permute.xlu0 %1494
      %1496 = vrot.lane.b32.xlu0 %v1127, 20
      %v1497 = vpop.permute.xlu0 %1496
      %1498 = vrot.lane.b32.xlu0 %v1130, 20
      %v1499 = vpop.permute.xlu0 %1498
      %1500 = vrot.lane.b32.xlu0 %v1132, 20
      %v1501 = vpop.permute.xlu0 %1500
      %1502 = vrot.lane.b32.xlu0 %v1135, 20
      %v1503 = vpop.permute.xlu0 %1502
      %1504 = vrot.lane.b32.xlu0 %v1137, 20
      %v1505 = vpop.permute.xlu0 %1504
      %1506 = vrot.lane.b32.xlu0 %v1140, 20
      %v1507 = vpop.permute.xlu0 %1506
      %1508 = vrot.lane.b32.xlu0 %v1142, 20
      %v1509 = vpop.permute.xlu0 %1508
      %1510 = vrot.lane.b32.xlu0 %v1145, 20
      %v1511 = vpop.permute.xlu0 %1510
      %1512 = vrot.lane.b32.xlu0 %v1147, 20
      %v1513 = vpop.permute.xlu0 %1512
      %1514 = vrot.lane.b32.xlu0 %v1150, 20
      %v1515 = vpop.permute.xlu0 %1514
      %1516 = vrot.lane.b32.xlu0 %v1152, 20
      %v1517 = vpop.permute.xlu0 %1516
      %1518 = vrot.lane.b32.xlu0 %v1155, 20
      %v1519 = vpop.permute.xlu0 %1518
      %1520 = vrot.lane.b32.xlu0 %v1157, 20
      %v1521 = vpop.permute.xlu0 %1520
      %1522 = vrot.lane.b32.xlu0 %v1160, 20
      %v1523 = vpop.permute.xlu0 %1522
      %1524 = vrot.lane.b32.xlu0 %v1162, 20
      %v1525 = vpop.permute.xlu0 %1524
      %1526 = vrot.lane.b32.xlu0 %v1165, 20
      %v1527 = vpop.permute.xlu0 %1526
      %1528 = vrot.lane.b32.xlu0 %v1167, 20
      %v1529 = vpop.permute.xlu0 %1528
      %1530 = vrot.lane.b32.xlu0 %v1170, 20
      %v1531 = vpop.permute.xlu0 %1530
      %1532 = vrot.lane.b32.xlu0 %v1172, 20
      %v1533 = vpop.permute.xlu0 %1532
      %1534 = vrot.lane.b32.xlu0 %v1175, 20
      %v1535 = vpop.permute.xlu0 %1534
      %1536 = vrot.lane.b32.xlu0 %v1177, 20
      %v1537 = vpop.permute.xlu0 %1536
      %1538 = vrot.lane.b32.xlu0 %v1475, 20
      %v1539 = vpop.permute.xlu0 %1538
      %1540 = vrot.lane.b32.xlu0 %v1477, 20
      %v1541 = vpop.permute.xlu0 %1540
      %1575 = vrot.lane.b32.xlu0 %v854, 24
      %v1576 = vpop.permute.xlu0 %1575
      %1577 = vrot.lane.b32.xlu0 %v754, 24
      %v1578 = vpop.permute.xlu0 %1577
      %1579 = vrot.lane.b32.xlu0 %v855, 24
      %v1580 = vpop.permute.xlu0 %1579
      %1581 = vrot.lane.b32.xlu0 %v757, 24
      %v1582 = vpop.permute.xlu0 %1581
      %1583 = vrot.lane.b32.xlu0 %v856, 24
      %v1584 = vpop.permute.xlu0 %1583
      %1585 = vrot.lane.b32.xlu0 %v760, 24
      %v1586 = vpop.permute.xlu0 %1585
      %1587 = vrot.lane.b32.xlu0 %v857, 24
      %v1588 = vpop.permute.xlu0 %1587
      %1589 = vrot.lane.b32.xlu0 %v763, 24
      %v1590 = vpop.permute.xlu0 %1589
      %1591 = vrot.lane.b32.xlu0 %v858, 24
      %v1592 = vpop.permute.xlu0 %1591
      %1593 = vrot.lane.b32.xlu0 %v766, 24
      %v1594 = vpop.permute.xlu0 %1593
      %1595 = vrot.lane.b32.xlu0 %v859, 24
      %v1596 = vpop.permute.xlu0 %1595
      %1597 = vrot.lane.b32.xlu0 %v769, 24
      %v1598 = vpop.permute.xlu0 %1597
      %1599 = vrot.lane.b32.xlu0 %v860, 24
      %v1600 = vpop.permute.xlu0 %1599
      %1601 = vrot.lane.b32.xlu0 %v772, 24
      %v1602 = vpop.permute.xlu0 %1601
      %1603 = vrot.lane.b32.xlu0 %v861, 24
      %v1604 = vpop.permute.xlu0 %1603
      %1605 = vrot.lane.b32.xlu0 %v775, 24
      %v1606 = vpop.permute.xlu0 %1605
      %1607 = vrot.lane.b32.xlu0 %v862, 24
      %v1608 = vpop.permute.xlu0 %1607
      %1609 = vrot.lane.b32.xlu0 %v778, 24
      %v1610 = vpop.permute.xlu0 %1609
      %1611 = vrot.lane.b32.xlu0 %v863, 24
      %v1612 = vpop.permute.xlu0 %1611
      %1613 = vrot.lane.b32.xlu0 %v781, 24
      %v1614 = vpop.permute.xlu0 %1613
      %1615 = vrot.lane.b32.xlu0 %v864, 24
      %v1616 = vpop.permute.xlu0 %1615
      %1617 = vrot.lane.b32.xlu0 %v784, 24
      %v1618 = vpop.permute.xlu0 %1617
      %1619 = vrot.lane.b32.xlu0 %v865, 24
      %v1620 = vpop.permute.xlu0 %1619
      %1621 = vrot.lane.b32.xlu0 %v787, 24
      %v1622 = vpop.permute.xlu0 %1621
      %1623 = vrot.lane.b32.xlu0 %v866, 24
      %v1624 = vpop.permute.xlu0 %1623
      %1625 = vrot.lane.b32.xlu0 %v790, 24
      %v1626 = vpop.permute.xlu0 %1625
      %1627 = vrot.lane.b32.xlu0 %v867, 24
      %v1628 = vpop.permute.xlu0 %1627
      %1629 = vrot.lane.b32.xlu0 %v793, 24
      %v1630 = vpop.permute.xlu0 %1629
      %1631 = vrot.lane.b32.xlu0 %v868, 24
      %v1632 = vpop.permute.xlu0 %1631
      %1633 = vrot.lane.b32.xlu0 %v796, 24
      %v1634 = vpop.permute.xlu0 %1633
      %1635 = vrot.lane.b32.xlu0 %v869, 24
      %v1636 = vpop.permute.xlu0 %1635
      %1637 = vrot.lane.b32.xlu0 %v799, 24
      %v1638 = vpop.permute.xlu0 %1637
      %v1672 = vrot.slane %v869, 1
      %v1673 = vrot.slane %v799, 1
      %v1674 = vsel %vm920, %v1672, %v1673
      %v1675 = vrot.slane %v887, 1
      %v1676 = vsel %vm920, %v1673, %v1675
      %1677 = vrot.lane.b32.xlu0 %v933, 28
      %v1678 = vpop.permute.xlu0 %1677
      %1679 = vrot.lane.b32.xlu0 %v935, 28
      %v1680 = vpop.permute.xlu0 %1679
      %1681 = vrot.lane.b32.xlu0 %v938, 28
      %v1682 = vpop.permute.xlu0 %1681
      %1683 = vrot.lane.b32.xlu0 %v940, 28
      %v1684 = vpop.permute.xlu0 %1683
      %1685 = vrot.lane.b32.xlu0 %v943, 28
      %v1686 = vpop.permute.xlu0 %1685
      %1687 = vrot.lane.b32.xlu0 %v945, 28
      %v1688 = vpop.permute.xlu0 %1687
      %1689 = vrot.lane.b32.xlu0 %v948, 28
      %v1690 = vpop.permute.xlu0 %1689
      %1691 = vrot.lane.b32.xlu0 %v950, 28
      %v1692 = vpop.permute.xlu0 %1691
      %1693 = vrot.lane.b32.xlu0 %v953, 28
      %v1694 = vpop.permute.xlu0 %1693
      %1695 = vrot.lane.b32.xlu0 %v955, 28
      %v1696 = vpop.permute.xlu0 %1695
      %1697 = vrot.lane.b32.xlu0 %v958, 28
      %v1698 = vpop.permute.xlu0 %1697
      %1699 = vrot.lane.b32.xlu0 %v960, 28
      %v1700 = vpop.permute.xlu0 %1699
      %1701 = vrot.lane.b32.xlu0 %v963, 28
      %v1702 = vpop.permute.xlu0 %1701
      %1703 = vrot.lane.b32.xlu0 %v965, 28
      %v1704 = vpop.permute.xlu0 %1703
      %1705 = vrot.lane.b32.xlu0 %v968, 28
      %v1706 = vpop.permute.xlu0 %1705
      %1707 = vrot.lane.b32.xlu0 %v970, 28
      %v1708 = vpop.permute.xlu0 %1707
      %1709 = vrot.lane.b32.xlu0 %v973, 28
      %v1710 = vpop.permute.xlu0 %1709
      %1711 = vrot.lane.b32.xlu0 %v975, 28
      %v1712 = vpop.permute.xlu0 %1711
      %1713 = vrot.lane.b32.xlu0 %v978, 28
      %v1714 = vpop.permute.xlu0 %1713
      %1715 = vrot.lane.b32.xlu0 %v980, 28
      %v1716 = vpop.permute.xlu0 %1715
      %1717 = vrot.lane.b32.xlu0 %v983, 28
      %v1718 = vpop.permute.xlu0 %1717
      %1719 = vrot.lane.b32.xlu0 %v985, 28
      %v1720 = vpop.permute.xlu0 %1719
      %1721 = vrot.lane.b32.xlu0 %v988, 28
      %v1722 = vpop.permute.xlu0 %1721
      %1723 = vrot.lane.b32.xlu0 %v990, 28
      %v1724 = vpop.permute.xlu0 %1723
      %1725 = vrot.lane.b32.xlu0 %v993, 28
      %v1726 = vpop.permute.xlu0 %1725
      %1727 = vrot.lane.b32.xlu0 %v995, 28
      %v1728 = vpop.permute.xlu0 %1727
      %1729 = vrot.lane.b32.xlu0 %v998, 28
      %v1730 = vpop.permute.xlu0 %1729
      %1731 = vrot.lane.b32.xlu0 %v1000, 28
      %v1732 = vpop.permute.xlu0 %1731
      %1733 = vrot.lane.b32.xlu0 %v1374, 28
      %v1734 = vpop.permute.xlu0 %1733
      %1735 = vrot.lane.b32.xlu0 %v1376, 28
      %v1736 = vpop.permute.xlu0 %1735
      %1737 = vrot.lane.b32.xlu0 %v1674, 28
      %v1738 = vpop.permute.xlu0 %1737
      %1739 = vrot.lane.b32.xlu0 %v1676, 28
      %v1740 = vpop.permute.xlu0 %1739
      %v1773 = vrot.slane %v869, 2
      %v1774 = vrot.slane %v799, 2
      %v1775 = vsel %vm1097, %v1773, %v1774
      %v1776 = vrot.slane %v887, 2
      %v1777 = vsel %vm1097, %v1774, %v1776
      %1778 = vrot.lane.b32.xlu0 %v1110, 32
      %v1779 = vpop.permute.xlu0 %1778
      %1780 = vrot.lane.b32.xlu0 %v1112, 32
      %v1781 = vpop.permute.xlu0 %1780
      %1782 = vrot.lane.b32.xlu0 %v1115, 32
      %v1783 = vpop.permute.xlu0 %1782
      %1784 = vrot.lane.b32.xlu0 %v1117, 32
      %v1785 = vpop.permute.xlu0 %1784
      %1786 = vrot.lane.b32.xlu0 %v1120, 32
      %v1787 = vpop.permute.xlu0 %1786
      %1788 = vrot.lane.b32.xlu0 %v1122, 32
      %v1789 = vpop.permute.xlu0 %1788
      %1790 = vrot.lane.b32.xlu0 %v1125, 32
      %v1791 = vpop.permute.xlu0 %1790
      %1792 = vrot.lane.b32.xlu0 %v1127, 32
      %v1793 = vpop.permute.xlu0 %1792
      %1794 = vrot.lane.b32.xlu0 %v1130, 32
      %v1795 = vpop.permute.xlu0 %1794
      %1796 = vrot.lane.b32.xlu0 %v1132, 32
      %v1797 = vpop.permute.xlu0 %1796
      %1798 = vrot.lane.b32.xlu0 %v1135, 32
      %v1799 = vpop.permute.xlu0 %1798
      %1800 = vrot.lane.b32.xlu0 %v1137, 32
      %v1801 = vpop.permute.xlu0 %1800
      %1802 = vrot.lane.b32.xlu0 %v1140, 32
      %v1803 = vpop.permute.xlu0 %1802
      %1804 = vrot.lane.b32.xlu0 %v1142, 32
      %v1805 = vpop.permute.xlu0 %1804
      %1806 = vrot.lane.b32.xlu0 %v1145, 32
      %v1807 = vpop.permute.xlu0 %1806
      %1808 = vrot.lane.b32.xlu0 %v1147, 32
      %v1809 = vpop.permute.xlu0 %1808
      %1810 = vrot.lane.b32.xlu0 %v1150, 32
      %v1811 = vpop.permute.xlu0 %1810
      %1812 = vrot.lane.b32.xlu0 %v1152, 32
      %v1813 = vpop.permute.xlu0 %1812
      %1814 = vrot.lane.b32.xlu0 %v1155, 32
      %v1815 = vpop.permute.xlu0 %1814
      %1816 = vrot.lane.b32.xlu0 %v1157, 32
      %v1817 = vpop.permute.xlu0 %1816
      %1818 = vrot.lane.b32.xlu0 %v1160, 32
      %v1819 = vpop.permute.xlu0 %1818
      %1820 = vrot.lane.b32.xlu0 %v1162, 32
      %v1821 = vpop.permute.xlu0 %1820
      %1822 = vrot.lane.b32.xlu0 %v1165, 32
      %v1823 = vpop.permute.xlu0 %1822
      %1824 = vrot.lane.b32.xlu0 %v1167, 32
      %v1825 = vpop.permute.xlu0 %1824
      %1826 = vrot.lane.b32.xlu0 %v1170, 32
      %v1827 = vpop.permute.xlu0 %1826
      %1828 = vrot.lane.b32.xlu0 %v1172, 32
      %v1829 = vpop.permute.xlu0 %1828
      %1830 = vrot.lane.b32.xlu0 %v1175, 32
      %v1831 = vpop.permute.xlu0 %1830
      %1832 = vrot.lane.b32.xlu0 %v1177, 32
      %v1833 = vpop.permute.xlu0 %1832
      %1834 = vrot.lane.b32.xlu0 %v1475, 32
      %v1835 = vpop.permute.xlu0 %1834
      %1836 = vrot.lane.b32.xlu0 %v1477, 32
      %v1837 = vpop.permute.xlu0 %1836
      %1838 = vrot.lane.b32.xlu0 %v1775, 32
      %v1839 = vpop.permute.xlu0 %1838
      %1840 = vrot.lane.b32.xlu0 %v1777, 32
      %v1841 = vpop.permute.xlu0 %1840
      %vm1874 = vcmask 31744
      %v1875 = vsel %vm1874, %v852, %v1002
      %v1876 = vsel %vm1874, %v748, %v1004
      %v1877 = vsel %vm1874, %v853, %v1006
      %v1878 = vsel %vm1874, %v751, %v1008
      %v1879 = vsel %vm1874, %v854, %v1010
      %v1880 = vsel %vm1874, %v754, %v1012
      %v1881 = vsel %vm1874, %v855, %v1014
      %v1882 = vsel %vm1874, %v757, %v1016
      %v1883 = vsel %vm1874, %v856, %v1018
      %v1884 = vsel %vm1874, %v760, %v1020
      %v1885 = vsel %vm1874, %v857, %v1022
      %v1886 = vsel %vm1874, %v763, %v1024
      %v1887 = vsel %vm1874, %v858, %v1026
      %v1888 = vsel %vm1874, %v766, %v1028
      %v1889 = vsel %vm1874, %v859, %v1030
      %v1890 = vsel %vm1874, %v769, %v1032
      %v1891 = vsel %vm1874, %v860, %v1034
      %v1892 = vsel %vm1874, %v772, %v1036
      %v1893 = vsel %vm1874, %v861, %v1038
      %v1894 = vsel %vm1874, %v775, %v1040
      %v1895 = vsel %vm1874, %v862, %v1042
      %v1896 = vsel %vm1874, %v778, %v1044
      %v1897 = vsel %vm1874, %v863, %v1046
      %v1898 = vsel %vm1874, %v781, %v1048
      %v1899 = vsel %vm1874, %v864, %v1050
      %v1900 = vsel %vm1874, %v784, %v1052
      %v1901 = vsel %vm1874, %v865, %v1054
      %v1902 = vsel %vm1874, %v787, %v1056
      %v1903 = vsel %vm1874, %v866, %v1058
      %v1904 = vsel %vm1874, %v790, %v1060
      %v1905 = vsel %vm1874, %v867, %v1062
      %v1906 = vsel %vm1874, %v793, %v1064
      %vm1907 = vcmask 64512
      %v1908 = vsel %vm1907, %v1875, %v1179
      %v1909 = vsel %vm1907, %v1876, %v1181
      %v1910 = vsel %vm1907, %v1877, %v1183
      %v1911 = vsel %vm1907, %v1878, %v1185
      %v1912 = vsel %vm1907, %v1879, %v1187
      %v1913 = vsel %vm1907, %v1880, %v1189
      %v1914 = vsel %vm1907, %v1881, %v1191
      %v1915 = vsel %vm1907, %v1882, %v1193
      %v1916 = vsel %vm1907, %v1883, %v1195
      %v1917 = vsel %vm1907, %v1884, %v1197
      %v1918 = vsel %vm1907, %v1885, %v1199
      %v1919 = vsel %vm1907, %v1886, %v1201
      %v1920 = vsel %vm1907, %v1887, %v1203
      %v1921 = vsel %vm1907, %v1888, %v1205
      %v1922 = vsel %vm1907, %v1889, %v1207
      %v1923 = vsel %vm1907, %v1890, %v1209
      %v1924 = vsel %vm1907, %v1891, %v1211
      %v1925 = vsel %vm1907, %v1892, %v1213
      %v1926 = vsel %vm1907, %v1893, %v1215
      %v1927 = vsel %vm1907, %v1894, %v1217
      %v1928 = vsel %vm1907, %v1895, %v1219
      %v1929 = vsel %vm1907, %v1896, %v1221
      %v1930 = vsel %vm1907, %v1897, %v1223
      %v1931 = vsel %vm1907, %v1898, %v1225
      %v1932 = vsel %vm1907, %v1899, %v1227
      %v1933 = vsel %vm1907, %v1900, %v1229
      %v1934 = vsel %vm1907, %v1901, %v1231
      %v1935 = vsel %vm1907, %v1902, %v1233
      %v1936 = vsel %vm1907, %v1903, %v1235
      %v1937 = vsel %vm1907, %v1904, %v1237
      %v1938 = vsel %vm1907, %v1905, %v1239
      %v1939 = vsel %vm1907, %v1906, %v1241
      %vm1940 = vcmask 97280
      %v1941 = vsel %vm1940, %v1908, %v1276
      %v1942 = vsel %vm1940, %v1909, %v1278
      %v1943 = vsel %vm1940, %v1910, %v1280
      %v1944 = vsel %vm1940, %v1911, %v1282
      %v1945 = vsel %vm1940, %v1912, %v1284
      %v1946 = vsel %vm1940, %v1913, %v1286
      %v1947 = vsel %vm1940, %v1914, %v1288
      %v1948 = vsel %vm1940, %v1915, %v1290
      %v1949 = vsel %vm1940, %v1916, %v1292
      %v1950 = vsel %vm1940, %v1917, %v1294
      %v1951 = vsel %vm1940, %v1918, %v1296
      %v1952 = vsel %vm1940, %v1919, %v1298
      %v1953 = vsel %vm1940, %v1920, %v1300
      %v1954 = vsel %vm1940, %v1921, %v1302
      %v1955 = vsel %vm1940, %v1922, %v1304
      %v1956 = vsel %vm1940, %v1923, %v1306
      %v1957 = vsel %vm1940, %v1924, %v1308
      %v1958 = vsel %vm1940, %v1925, %v1310
      %v1959 = vsel %vm1940, %v1926, %v1312
      %v1960 = vsel %vm1940, %v1927, %v1314
      %v1961 = vsel %vm1940, %v1928, %v1316
      %v1962 = vsel %vm1940, %v1929, %v1318
      %v1963 = vsel %vm1940, %v1930, %v1320
      %v1964 = vsel %vm1940, %v1931, %v1322
      %v1965 = vsel %vm1940, %v1932, %v1324
      %v1966 = vsel %vm1940, %v1933, %v1326
      %v1967 = vsel %vm1940, %v1934, %v1328
      %v1968 = vsel %vm1940, %v1935, %v1330
      %v1969 = vsel %vm1940, %v1936, %v1332
      %v1970 = vsel %vm1940, %v1937, %v1334
      %v1971 = vsel %vm1940, %v1938, %v1336
      %v1972 = vsel %vm1940, %v1939, %v1338
      %vm1973 = vcmask 130048
      %v1974 = vsel %vm1973, %v1941, %v1378
      %v1975 = vsel %vm1973, %v1942, %v1380
      %v1976 = vsel %vm1973, %v1943, %v1382
      %v1977 = vsel %vm1973, %v1944, %v1384
      %v1978 = vsel %vm1973, %v1945, %v1386
      %v1979 = vsel %vm1973, %v1946, %v1388
      %v1980 = vsel %vm1973, %v1947, %v1390
      %v1981 = vsel %vm1973, %v1948, %v1392
      %v1982 = vsel %vm1973, %v1949, %v1394
      %v1983 = vsel %vm1973, %v1950, %v1396
      %v1984 = vsel %vm1973, %v1951, %v1398
      %v1985 = vsel %vm1973, %v1952, %v1400
      %v1986 = vsel %vm1973, %v1953, %v1402
      %v1987 = vsel %vm1973, %v1954, %v1404
      %v1988 = vsel %vm1973, %v1955, %v1406
      %v1989 = vsel %vm1973, %v1956, %v1408
      %v1990 = vsel %vm1973, %v1957, %v1410
      %v1991 = vsel %vm1973, %v1958, %v1412
      %v1992 = vsel %vm1973, %v1959, %v1414
      %v1993 = vsel %vm1973, %v1960, %v1416
      %v1994 = vsel %vm1973, %v1961, %v1418
      %v1995 = vsel %vm1973, %v1962, %v1420
      %v1996 = vsel %vm1973, %v1963, %v1422
      %v1997 = vsel %vm1973, %v1964, %v1424
      %v1998 = vsel %vm1973, %v1965, %v1426
      %v1999 = vsel %vm1973, %v1966, %v1428
      %v2000 = vsel %vm1973, %v1967, %v1430
      %v2001 = vsel %vm1973, %v1968, %v1432
      %v2002 = vsel %vm1973, %v1969, %v1434
      %v2003 = vsel %vm1973, %v1970, %v1436
      %v2004 = vsel %vm1973, %v1971, %v1438
      %v2005 = vsel %vm1973, %v1972, %v1440
      %vm2006 = vcmask 162816
      %v2007 = vsel %vm2006, %v1974, %v1479
      %v2008 = vsel %vm2006, %v1975, %v1481
      %v2009 = vsel %vm2006, %v1976, %v1483
      %v2010 = vsel %vm2006, %v1977, %v1485
      %v2011 = vsel %vm2006, %v1978, %v1487
      %v2012 = vsel %vm2006, %v1979, %v1489
      %v2013 = vsel %vm2006, %v1980, %v1491
      %v2014 = vsel %vm2006, %v1981, %v1493
      %v2015 = vsel %vm2006, %v1982, %v1495
      %v2016 = vsel %vm2006, %v1983, %v1497
      %v2017 = vsel %vm2006, %v1984, %v1499
      %v2018 = vsel %vm2006, %v1985, %v1501
      %v2019 = vsel %vm2006, %v1986, %v1503
      %v2020 = vsel %vm2006, %v1987, %v1505
      %v2021 = vsel %vm2006, %v1988, %v1507
      %v2022 = vsel %vm2006, %v1989, %v1509
      %v2023 = vsel %vm2006, %v1990, %v1511
      %v2024 = vsel %vm2006, %v1991, %v1513
      %v2025 = vsel %vm2006, %v1992, %v1515
      %v2026 = vsel %vm2006, %v1993, %v1517
      %v2027 = vsel %vm2006, %v1994, %v1519
      %v2028 = vsel %vm2006, %v1995, %v1521
      %v2029 = vsel %vm2006, %v1996, %v1523
      %v2030 = vsel %vm2006, %v1997, %v1525
      %v2031 = vsel %vm2006, %v1998, %v1527
      %v2032 = vsel %vm2006, %v1999, %v1529
      %v2033 = vsel %vm2006, %v2000, %v1531
      %v2034 = vsel %vm2006, %v2001, %v1533
      %v2035 = vsel %vm2006, %v2002, %v1535
      %v2036 = vsel %vm2006, %v2003, %v1537
      %v2037 = vsel %vm2006, %v2004, %v1539
      %v2038 = vsel %vm2006, %v2005, %v1541
      %vm2039 = vcmask 195584
      %v2040 = vsel %vm2039, %v2007, %v1576
      %v2041 = vsel %vm2039, %v2008, %v1578
      %v2042 = vsel %vm2039, %v2009, %v1580
      %v2043 = vsel %vm2039, %v2010, %v1582
      %v2044 = vsel %vm2039, %v2011, %v1584
      %v2045 = vsel %vm2039, %v2012, %v1586
      %v2046 = vsel %vm2039, %v2013, %v1588
      %v2047 = vsel %vm2039, %v2014, %v1590
      %v2048 = vsel %vm2039, %v2015, %v1592
      %v2049 = vsel %vm2039, %v2016, %v1594
      %v2050 = vsel %vm2039, %v2017, %v1596
      %v2051 = vsel %vm2039, %v2018, %v1598
      %v2052 = vsel %vm2039, %v2019, %v1600
      %v2053 = vsel %vm2039, %v2020, %v1602
      %v2054 = vsel %vm2039, %v2021, %v1604
      %v2055 = vsel %vm2039, %v2022, %v1606
      %v2056 = vsel %vm2039, %v2023, %v1608
      %v2057 = vsel %vm2039, %v2024, %v1610
      %v2058 = vsel %vm2039, %v2025, %v1612
      %v2059 = vsel %vm2039, %v2026, %v1614
      %v2060 = vsel %vm2039, %v2027, %v1616
      %v2061 = vsel %vm2039, %v2028, %v1618
      %v2062 = vsel %vm2039, %v2029, %v1620
      %v2063 = vsel %vm2039, %v2030, %v1622
      %v2064 = vsel %vm2039, %v2031, %v1624
      %v2065 = vsel %vm2039, %v2032, %v1626
      %v2066 = vsel %vm2039, %v2033, %v1628
      %v2067 = vsel %vm2039, %v2034, %v1630
      %v2068 = vsel %vm2039, %v2035, %v1632
      %v2069 = vsel %vm2039, %v2036, %v1634
      %v2070 = vsel %vm2039, %v2037, %v1636
      %v2071 = vsel %vm2039, %v2038, %v1638
      %vm2072 = vcmask 228352
      %v2073 = vsel %vm2072, %v2040, %v1678
      %v2074 = vsel %vm2072, %v2041, %v1680
      %v2075 = vsel %vm2072, %v2042, %v1682
      %v2076 = vsel %vm2072, %v2043, %v1684
      %v2077 = vsel %vm2072, %v2044, %v1686
      %v2078 = vsel %vm2072, %v2045, %v1688
      %v2079 = vsel %vm2072, %v2046, %v1690
      %v2080 = vsel %vm2072, %v2047, %v1692
      %v2081 = vsel %vm2072, %v2048, %v1694
      %v2082 = vsel %vm2072, %v2049, %v1696
      %v2083 = vsel %vm2072, %v2050, %v1698
      %v2084 = vsel %vm2072, %v2051, %v1700
      %v2085 = vsel %vm2072, %v2052, %v1702
      %v2086 = vsel %vm2072, %v2053, %v1704
      %v2087 = vsel %vm2072, %v2054, %v1706
      %v2088 = vsel %vm2072, %v2055, %v1708
      %v2089 = vsel %vm2072, %v2056, %v1710
      %v2090 = vsel %vm2072, %v2057, %v1712
      %v2091 = vsel %vm2072, %v2058, %v1714
      %v2092 = vsel %vm2072, %v2059, %v1716
      %v2093 = vsel %vm2072, %v2060, %v1718
      %v2094 = vsel %vm2072, %v2061, %v1720
      %v2095 = vsel %vm2072, %v2062, %v1722
      %v2096 = vsel %vm2072, %v2063, %v1724
      %v2097 = vsel %vm2072, %v2064, %v1726
      %v2098 = vsel %vm2072, %v2065, %v1728
      %v2099 = vsel %vm2072, %v2066, %v1730
      %v2100 = vsel %vm2072, %v2067, %v1732
      %v2101 = vsel %vm2072, %v2068, %v1734
      %v2102 = vsel %vm2072, %v2069, %v1736
      %v2103 = vsel %vm2072, %v2070, %v1738
      %v2104 = vsel %vm2072, %v2071, %v1740
      %vm2105 = vcmask 261120
      %v2106 = vsel %vm2105, %v2073, %v1779
      %v2107 = vsel %vm2105, %v2074, %v1781
      %v2108 = vsel %vm2105, %v2075, %v1783
      %v2109 = vsel %vm2105, %v2076, %v1785
      %v2110 = vsel %vm2105, %v2077, %v1787
      %v2111 = vsel %vm2105, %v2078, %v1789
      %v2112 = vsel %vm2105, %v2079, %v1791
      %v2113 = vsel %vm2105, %v2080, %v1793
      %v2114 = vsel %vm2105, %v2081, %v1795
      %v2115 = vsel %vm2105, %v2082, %v1797
      %v2116 = vsel %vm2105, %v2083, %v1799
      %v2117 = vsel %vm2105, %v2084, %v1801
      %v2118 = vsel %vm2105, %v2085, %v1803
      %v2119 = vsel %vm2105, %v2086, %v1805
      %v2120 = vsel %vm2105, %v2087, %v1807
      %v2121 = vsel %vm2105, %v2088, %v1809
      %v2122 = vsel %vm2105, %v2089, %v1811
      %v2123 = vsel %vm2105, %v2090, %v1813
      %v2124 = vsel %vm2105, %v2091, %v1815
      %v2125 = vsel %vm2105, %v2092, %v1817
      %v2126 = vsel %vm2105, %v2093, %v1819
      %v2127 = vsel %vm2105, %v2094, %v1821
      %v2128 = vsel %vm2105, %v2095, %v1823
      %v2129 = vsel %vm2105, %v2096, %v1825
      %v2130 = vsel %vm2105, %v2097, %v1827
      %v2131 = vsel %vm2105, %v2098, %v1829
      %v2132 = vsel %vm2105, %v2099, %v1831
      %v2133 = vsel %vm2105, %v2100, %v1833
      %v2134 = vsel %vm2105, %v2101, %v1835
      %v2135 = vsel %vm2105, %v2102, %v1837
      %v2136 = vsel %vm2105, %v2103, %v1839
      %v2137 = vsel %vm2105, %v2104, %v1841
      %v2138 = vpack.c.bf16 %v2107, %v2106
      %v2139 = vpack.c.bf16 %v2109, %v2108
      %v2140 = vpack.c.bf16 %v2111, %v2110
      %v2141 = vpack.c.bf16 %v2113, %v2112
      %v2142 = vpack.c.bf16 %v2115, %v2114
      %v2143 = vpack.c.bf16 %v2117, %v2116
      %v2144 = vpack.c.bf16 %v2119, %v2118
      %v2145 = vpack.c.bf16 %v2121, %v2120
      %v2146 = vpack.c.bf16 %v2123, %v2122
      %v2147 = vpack.c.bf16 %v2125, %v2124
      %v2148 = vpack.c.bf16 %v2127, %v2126
      %v2149 = vpack.c.bf16 %v2129, %v2128
      %v2150 = vpack.c.bf16 %v2131, %v2130
      %v2151 = vpack.c.bf16 %v2133, %v2132
      %v2152 = vpack.c.bf16 %v2135, %v2134
      %v2153 = vpack.c.bf16 %v2137, %v2136
      %v2154 = vld [vmem:[%s3] sm:$0xf]
      %v2155 = vld [vmem:[%s3 + $0x4] sm:$0xf]
      %v2156 = vld [vmem:[%s3 + $0x8] sm:$0xf]
      %v2157 = vld [vmem:[%s3 + $0xc] sm:$0xf]
      %v2158 = vld [vmem:[%s3 + $0x10] sm:$0x3]
      %v2164 = vunpack.c.l.b16 %v2154
      %v2165 = vunpack.c.l.b16 %v2155
      %v2166 = vunpack.c.l.b16 %v2156
      %v2167 = vunpack.c.l.b16 %v2157
      %v2168 = vunpack.c.l.b16 %v2158
      %v2169 = vpack.c.b16 %v2165, %v2164
      %v2170 = vpack.c.b16 %v2167, %v2166
      %v2171 = vpack.c.b16 %v2168, %v2168
      %vm2174 = vcmask 293888
      %v2176 = vsel %vm2174, %v2138, 0
      %v2179 = vsel %vm2174, %v2139, 0
      %v2182 = vsel %vm2174, %v2140, 0
      %v2185 = vsel %vm2174, %v2141, 0
      %v2188 = vsel %vm2174, %v2142, 0
      %v2191 = vsel %vm2174, %v2143, 0
      %v2194 = vsel %vm2174, %v2144, 0
      %v2197 = vsel %vm2174, %v2145, 0
      %v2200 = vsel %vm2174, %v2146, 0
      %v2203 = vsel %vm2174, %v2147, 0
      %v2206 = vsel %vm2174, %v2148, 0
      %v2209 = vsel %vm2174, %v2149, 0
      %v2212 = vsel %vm2174, %v2150, 0
      %v2215 = vsel %vm2174, %v2151, 0
      %v2218 = vsel %vm2174, %v2152, 0
      %v2221 = vsel %vm2174, %v2153, 0
      %vm2223 = vcmask 1041408
      %v2225 = vsel %vm2223, %v2171, 0
      %2227 = vmatprep.subr.bf16.mxu0 0
      %2228 = vmatpush1.bf16.msra.mxu0 %v2169
      %2229 = vmatprep.subr.bf16.mxu0 0
      %2230 = vmatpush1.bf16.msra.mxu0 %v2170
      %2231 = vmatprep.subr.bf16.mxu0 0
      %2232 = vmatpush1.bf16.msra.mxu0 %v2225
      %2233 = vmatprep.subr.bf16.mxu0 0
      %2234 = vmatpush1.bf16.msra.mxu0 0
      %2235 = vmatprep.subr.bf16.mxu0 0
      %2236 = vmatpush1.bf16.msra.mxu0 0
      %2237 = vmatprep.subr.bf16.mxu0 0
      %2238 = vmatpush1.bf16.msra.mxu0 0
      %2239 = vmatprep.subr.bf16.mxu0 0
      %2240 = vmatpush1.bf16.msra.mxu0 0
      %2241 = vmatprep.subr.bf16.mxu0 0
      %2242 = vmatpush1.bf16.msra.mxu0 0
      %2243 = vmatprep.subr.bf16.mxu0 0
      %2244 = vmatpush1.bf16.msra.mxu0 0
      %2245 = vmatprep.subr.bf16.mxu0 0
      %2246 = vmatpush1.bf16.msra.mxu0 0
      %2247 = vmatprep.subr.bf16.mxu0 0
      %2248 = vmatpush1.bf16.msra.mxu0 0
      %2249 = vmatprep.subr.bf16.mxu0 0
      %2250 = vmatpush1.bf16.msra.mxu0 0
      %2251 = vmatprep.subr.bf16.mxu0 0
      %2252 = vmatpush1.bf16.msra.mxu0 0
      %2253 = vmatprep.subr.bf16.mxu0 0
      %2254 = vmatpush1.bf16.msra.mxu0 0
      %2255 = vmatprep.subr.bf16.mxu0 0
      %2256 = vmatpush1.bf16.msra.mxu0 0
      %2257 = vmatprep.subr.bf16.mxu0 0
      %2258 = vmatpush1.bf16.msra.mxu0 0
      %2259 = vmatprep.mubr.bf16.mxu0 0
      %2260 = vmatmul.mubr.bf16.gmra.mrb[0].mxu0 %v2176
      %v2261 = vpop.f32.mrb[0].mxu0
      %v2262 = vadd.f32 0.0, %v2261
      %v2263 = vpop.f32.mrb[0].mxu0
      %v2264 = vpop.f32.mrb[0].mxu0
      %v2265 = vadd.f32 0.0, %v2264
      %v2266 = vpop.f32.mrb[0].mxu0
      %2267 = vmatprep.mubr.bf16.mxu0 0
      %2268 = vmatmul.mubr.bf16.gmra.mrb[0].mxu0 %v2179
      %v2269 = vpop.f32.mrb[0].mxu0
      %v2270 = vadd.f32 0.0, %v2269
      %v2271 = vpop.f32.mrb[0].mxu0
      %v2272 = vpop.f32.mrb[0].mxu0
      %v2273 = vadd.f32 0.0, %v2272
      %v2274 = vpop.f32.mrb[0].mxu0
      %2275 = vmatprep.mubr.bf16.mxu0 0
      %2276 = vmatmul.mubr.bf16.gmra.mrb[0].mxu0 %v2182
      %v2277 = vpop.f32.mrb[0].mxu0
      %v2278 = vadd.f32 0.0, %v2277
      %v2279 = vpop.f32.mrb[0].mxu0
      %v2280 = vpop.f32.mrb[0].mxu0
      %v2281 = vadd.f32 0.0, %v2280
      %v2282 = vpop.f32.mrb[0].mxu0
      %2283 = vmatprep.mubr.bf16.mxu0 0
      %2284 = vmatmul.mubr.bf16.gmra.mrb[0].mxu0 %v2185
      %v2285 = vpop.f32.mrb[0].mxu0
      %v2286 = vadd.f32 0.0, %v2285
      %v2287 = vpop.f32.mrb[0].mxu0
      %v2288 = vpop.f32.mrb[0].mxu0
      %v2289 = vadd.f32 0.0, %v2288
      %v2290 = vpop.f32.mrb[0].mxu0
      %2291 = vmatprep.mubr.bf16.mxu0 0
      %2292 = vmatmul.mubr.bf16.gmra.mrb[0].mxu0 %v2188
      %v2293 = vpop.f32.mrb[0].mxu0
      %v2294 = vadd.f32 0.0, %v2293
      %v2295 = vpop.f32.mrb[0].mxu0
      %v2296 = vpop.f32.mrb[0].mxu0
      %v2297 = vadd.f32 0.0, %v2296
      %v2298 = vpop.f32.mrb[0].mxu0
      %2299 = vmatprep.mubr.bf16.mxu0 0
      %2300 = vmatmul.mubr.bf16.gmra.mrb[0].mxu0 %v2191
      %v2301 = vpop.f32.mrb[0].mxu0
      %v2302 = vadd.f32 0.0, %v2301
      %v2303 = vpop.f32.mrb[0].mxu0
      %v2304 = vpop.f32.mrb[0].mxu0
      %v2305 = vadd.f32 0.0, %v2304
      %v2306 = vpop.f32.mrb[0].mxu0
      %2307 = vmatprep.mubr.bf16.mxu0 0
      %2308 = vmatmul.mubr.bf16.gmra.mrb[0].mxu0 %v2194
      %v2309 = vpop.f32.mrb[0].mxu0
      %v2310 = vadd.f32 0.0, %v2309
      %v2311 = vpop.f32.mrb[0].mxu0
      %v2312 = vpop.f32.mrb[0].mxu0
      %v2313 = vadd.f32 0.0, %v2312
      %v2314 = vpop.f32.mrb[0].mxu0
      %2315 = vmatprep.mubr.bf16.mxu0 0
      %2316 = vmatmul.mubr.bf16.gmra.mrb[0].mxu0 %v2197
      %v2317 = vpop.f32.mrb[0].mxu0
      %v2318 = vadd.f32 0.0, %v2317
      %v2319 = vpop.f32.mrb[0].mxu0
      %v2320 = vpop.f32.mrb[0].mxu0
      %v2321 = vadd.f32 0.0, %v2320
      %v2322 = vpop.f32.mrb[0].mxu0
      %2323 = vmatprep.mubr.bf16.mxu0 0
      %2324 = vmatmul.mubr.bf16.gmra.mrb[0].mxu0 %v2200
      %v2325 = vpop.f32.mrb[0].mxu0
      %v2326 = vadd.f32 0.0, %v2325
      %v2327 = vpop.f32.mrb[0].mxu0
      %v2328 = vpop.f32.mrb[0].mxu0
      %v2329 = vadd.f32 0.0, %v2328
      %v2330 = vpop.f32.mrb[0].mxu0
      %2331 = vmatprep.mubr.bf16.mxu0 0
      %2332 = vmatmul.mubr.bf16.gmra.mrb[0].mxu0 %v2203
      %v2333 = vpop.f32.mrb[0].mxu0
      %v2334 = vadd.f32 0.0, %v2333
      %v2335 = vpop.f32.mrb[0].mxu0
      %v2336 = vpop.f32.mrb[0].mxu0
      %v2337 = vadd.f32 0.0, %v2336
      %v2338 = vpop.f32.mrb[0].mxu0
      %2339 = vmatprep.mubr.bf16.mxu0 0
      %2340 = vmatmul.mubr.bf16.gmra.mrb[0].mxu0 %v2206
      %v2341 = vpop.f32.mrb[0].mxu0
      %v2342 = vadd.f32 0.0, %v2341
      %v2343 = vpop.f32.mrb[0].mxu0
      %v2344 = vpop.f32.mrb[0].mxu0
      %v2345 = vadd.f32 0.0, %v2344
      %v2346 = vpop.f32.mrb[0].mxu0
      %2347 = vmatprep.mubr.bf16.mxu0 0
      %2348 = vmatmul.mubr.bf16.gmra.mrb[0].mxu0 %v2209
      %v2349 = vpop.f32.mrb[0].mxu0
      %v2350 = vadd.f32 0.0, %v2349
      %v2351 = vpop.f32.mrb[0].mxu0
      %v2352 = vpop.f32.mrb[0].mxu0
      %v2353 = vadd.f32 0.0, %v2352
      %v2354 = vpop.f32.mrb[0].mxu0
      %2355 = vmatprep.mubr.bf16.mxu0 0
      %2356 = vmatmul.mubr.bf16.gmra.mrb[0].mxu0 %v2212
      %v2357 = vpop.f32.mrb[0].mxu0
      %v2358 = vadd.f32 0.0, %v2357
      %v2359 = vpop.f32.mrb[0].mxu0
      %v2360 = vpop.f32.mrb[0].mxu0
      %v2361 = vadd.f32 0.0, %v2360
      %v2362 = vpop.f32.mrb[0].mxu0
      %2363 = vmatprep.mubr.bf16.mxu0 0
      %2364 = vmatmul.mubr.bf16.gmra.mrb[0].mxu0 %v2215
      %v2365 = vpop.f32.mrb[0].mxu0
      %v2366 = vadd.f32 0.0, %v2365
      %v2367 = vpop.f32.mrb[0].mxu0
      %v2368 = vpop.f32.mrb[0].mxu0
      %v2369 = vadd.f32 0.0, %v2368
      %v2370 = vpop.f32.mrb[0].mxu0
      %2371 = vmatprep.mubr.bf16.mxu0 0
      %2372 = vmatmul.mubr.bf16.gmra.mrb[0].mxu0 %v2218
      %v2373 = vpop.f32.mrb[0].mxu0
      %v2374 = vadd.f32 0.0, %v2373
      %v2375 = vpop.f32.mrb[0].mxu0
      %v2376 = vpop.f32.mrb[0].mxu0
      %v2377 = vadd.f32 0.0, %v2376
      %v2378 = vpop.f32.mrb[0].mxu0
      %2379 = vmatprep.mubr.bf16.mxu0 0
      %2380 = vmatmul.mubr.bf16.gmra.mrb[0].mxu0 %v2221
      %v2381 = vpop.f32.mrb[0].mxu0
      %v2382 = vadd.f32 0.0, %v2381
      %v2383 = vpop.f32.mrb[0].mxu0
      %v2384 = vpop.f32.mrb[0].mxu0
      %v2385 = vadd.f32 0.0, %v2384
      %v2386 = vpop.f32.mrb[0].mxu0
      %2387 = vdwg.mxu0
      %2388 = vst.msk [vmem:[%s404] sm:$0xff] %vm1874, %v2262
      %2389 = vst.msk [vmem:[%s404 + $0x8] sm:$0xff] %vm1874, %v2265
      %2390 = vst.msk [vmem:[%s404 + $0x10] sm:$0xff] %vm1874, %v2270
      %2391 = vst.msk [vmem:[%s404 + $0x18] sm:$0xff] %vm1874, %v2273
      %2392 = vst.msk [vmem:[%s404 + $0x20] sm:$0xff] %vm1874, %v2278
      %2393 = vst.msk [vmem:[%s404 + $0x28] sm:$0xff] %vm1874, %v2281
      %2394 = vst.msk [vmem:[%s404 + $0x30] sm:$0xff] %vm1874, %v2286
      %2395 = vst.msk [vmem:[%s404 + $0x38] sm:$0xff] %vm1874, %v2289
      %2396 = vst.msk [vmem:[%s404 + $0x40] sm:$0xff] %vm1874, %v2294
      %2397 = vst.msk [vmem:[%s404 + $0x48] sm:$0xff] %vm1874, %v2297
      %2398 = vst.msk [vmem:[%s404 + $0x50] sm:$0xff] %vm1874, %v2302
      %2399 = vst.msk [vmem:[%s404 + $0x58] sm:$0xff] %vm1874, %v2305
      %2400 = vst.msk [vmem:[%s404 + $0x60] sm:$0xff] %vm1874, %v2310
      %2401 = vst.msk [vmem:[%s404 + $0x68] sm:$0xff] %vm1874, %v2313
      %2402 = vst.msk [vmem:[%s404 + $0x70] sm:$0xff] %vm1874, %v2318
      %2403 = vst.msk [vmem:[%s404 + $0x78] sm:$0xff] %vm1874, %v2321
      %2404 = vst.msk [vmem:[%s404 + $0x80] sm:$0xff] %vm1874, %v2326
      %2405 = vst.msk [vmem:[%s404 + $0x88] sm:$0xff] %vm1874, %v2329
      %2406 = vst.msk [vmem:[%s404 + $0x90] sm:$0xff] %vm1874, %v2334
      %2407 = vst.msk [vmem:[%s404 + $0x98] sm:$0xff] %vm1874, %v2337
      %2408 = vst.msk [vmem:[%s404 + $0xa0] sm:$0xff] %vm1874, %v2342
      %2409 = vst.msk [vmem:[%s404 + $0xa8] sm:$0xff] %vm1874, %v2345
      %2410 = vst.msk [vmem:[%s404 + $0xb0] sm:$0xff] %vm1874, %v2350
      %2411 = vst.msk [vmem:[%s404 + $0xb8] sm:$0xff] %vm1874, %v2353
      %2412 = vst.msk [vmem:[%s404 + $0xc0] sm:$0xff] %vm1874, %v2358
      %2413 = vst.msk [vmem:[%s404 + $0xc8] sm:$0xff] %vm1874, %v2361
      %2414 = vst.msk [vmem:[%s404 + $0xd0] sm:$0xff] %vm1874, %v2366
      %2415 = vst.msk [vmem:[%s404 + $0xd8] sm:$0xff] %vm1874, %v2369
      %2416 = vst.msk [vmem:[%s404 + $0xe0] sm:$0xff] %vm1874, %v2374
      %2417 = vst.msk [vmem:[%s404 + $0xe8] sm:$0xff] %vm1874, %v2377
      %2418 = vst.msk [vmem:[%s404 + $0xf0] sm:$0xff] %vm1874, %v2382
      %2419 = vst.msk [vmem:[%s404 + $0xf8] sm:$0xff] %vm1874, %v2385
      %v2420 = vld [vmem:[%s8] sm:$0x3]
      %v2421 = vsel %vm1874, %v2262, 0.0
      %v2422 = vsel %vm1874, %v2265, 0.0
      %v2423 = vadd.f32 %v2421, %v2422
      %v2424 = vsel %vm1874, %v2270, 0.0
      %v2425 = vadd.f32 %v2423, %v2424
      %v2426 = vsel %vm1874, %v2273, 0.0
      %v2427 = vadd.f32 %v2425, %v2426
      %v2428 = vsel %vm1874, %v2278, 0.0
      %v2429 = vadd.f32 %v2427, %v2428
      %v2430 = vsel %vm1874, %v2281, 0.0
      %v2431 = vadd.f32 %v2429, %v2430
      %v2432 = vsel %vm1874, %v2286, 0.0
      %v2433 = vadd.f32 %v2431, %v2432
      %v2434 = vsel %vm1874, %v2289, 0.0
      %v2435 = vadd.f32 %v2433, %v2434
      %v2436 = vsel %vm1874, %v2294, 0.0
      %v2437 = vadd.f32 %v2435, %v2436
      %v2438 = vsel %vm1874, %v2297, 0.0
      %v2439 = vadd.f32 %v2437, %v2438
      %v2440 = vsel %vm1874, %v2302, 0.0
      %v2441 = vadd.f32 %v2439, %v2440
      %v2442 = vsel %vm1874, %v2305, 0.0
      %v2443 = vadd.f32 %v2441, %v2442
      %v2444 = vsel %vm1874, %v2310, 0.0
      %v2445 = vadd.f32 %v2443, %v2444
      %v2446 = vsel %vm1874, %v2313, 0.0
      %v2447 = vadd.f32 %v2445, %v2446
      %v2448 = vsel %vm1874, %v2318, 0.0
      %v2449 = vadd.f32 %v2447, %v2448
      %v2450 = vsel %vm1874, %v2321, 0.0
      %v2451 = vadd.f32 %v2449, %v2450
      %v2452 = vsel %vm1874, %v2326, 0.0
      %v2453 = vadd.f32 %v2451, %v2452
      %v2454 = vsel %vm1874, %v2329, 0.0
      %v2455 = vadd.f32 %v2453, %v2454
      %v2456 = vsel %vm1874, %v2334, 0.0
      %v2457 = vadd.f32 %v2455, %v2456
      %v2458 = vsel %vm1874, %v2337, 0.0
      %v2459 = vadd.f32 %v2457, %v2458
      %v2460 = vsel %vm1874, %v2342, 0.0
      %v2461 = vadd.f32 %v2459, %v2460
      %v2462 = vsel %vm1874, %v2345, 0.0
      %v2463 = vadd.f32 %v2461, %v2462
      %v2464 = vsel %vm1874, %v2350, 0.0
      %v2465 = vadd.f32 %v2463, %v2464
      %v2466 = vsel %vm1874, %v2353, 0.0
      %v2467 = vadd.f32 %v2465, %v2466
      %v2468 = vsel %vm1874, %v2358, 0.0
      %v2469 = vadd.f32 %v2467, %v2468
      %v2470 = vsel %vm1874, %v2361, 0.0
      %v2471 = vadd.f32 %v2469, %v2470
      %v2472 = vsel %vm1874, %v2366, 0.0
      %v2473 = vadd.f32 %v2471, %v2472
      %v2474 = vsel %vm1874, %v2369, 0.0
      %v2475 = vadd.f32 %v2473, %v2474
      %v2476 = vsel %vm1874, %v2374, 0.0
      %v2477 = vadd.f32 %v2475, %v2476
      %v2478 = vsel %vm1874, %v2377, 0.0
      %v2479 = vadd.f32 %v2477, %v2478
      %v2480 = vsel %vm1874, %v2382, 0.0
      %v2481 = vadd.f32 %v2479, %v2480
      %v2482 = vsel %vm1874, %v2385, 0.0
      %v2483 = vadd.f32 %v2481, %v2482
      %v2484 = vrot.slane %v2483, 4
      %v2485 = vadd.f32 %v2483, %v2484
      %v2486 = vrot.slane %v2485, 2
      %v2487 = vadd.f32 %v2485, %v2486
      %v2488 = vrot.slane %v2487, 1
      %v2489 = vadd.f32 %v2487, %v2488
      %v2490 = vmul.f32 %v2262, %v2262
      %v2491 = vmul.f32 %v2265, %v2265
      %v2492 = vmul.f32 %v2270, %v2270
      %v2493 = vmul.f32 %v2273, %v2273
      %v2494 = vmul.f32 %v2278, %v2278
      %v2495 = vmul.f32 %v2281, %v2281
      %v2496 = vmul.f32 %v2286, %v2286
      %v2497 = vmul.f32 %v2289, %v2289
      %v2498 = vmul.f32 %v2294, %v2294
      %v2499 = vmul.f32 %v2297, %v2297
      %v2500 = vmul.f32 %v2302, %v2302
      %v2501 = vmul.f32 %v2305, %v2305
      %v2502 = vmul.f32 %v2310, %v2310
      %v2503 = vmul.f32 %v2313, %v2313
      %v2504 = vmul.f32 %v2318, %v2318
      %v2505 = vmul.f32 %v2321, %v2321
      %v2506 = vmul.f32 %v2326, %v2326
      %v2507 = vmul.f32 %v2329, %v2329
      %v2508 = vmul.f32 %v2334, %v2334
      %v2509 = vmul.f32 %v2337, %v2337
      %v2510 = vmul.f32 %v2342, %v2342
      %v2511 = vmul.f32 %v2345, %v2345
      %v2512 = vmul.f32 %v2350, %v2350
      %v2513 = vmul.f32 %v2353, %v2353
      %v2514 = vmul.f32 %v2358, %v2358
      %v2515 = vmul.f32 %v2361, %v2361
      %v2516 = vmul.f32 %v2366, %v2366
      %v2517 = vmul.f32 %v2369, %v2369
      %v2518 = vmul.f32 %v2374, %v2374
      %v2519 = vmul.f32 %v2377, %v2377
      %v2520 = vmul.f32 %v2382, %v2382
      %v2521 = vmul.f32 %v2385, %v2385
      %v2522 = vsel %vm1874, %v2490, 0.0
      %v2523 = vsel %vm1874, %v2491, 0.0
      %v2524 = vadd.f32 %v2522, %v2523
      %v2525 = vsel %vm1874, %v2492, 0.0
      %v2526 = vadd.f32 %v2524, %v2525
      %v2527 = vsel %vm1874, %v2493, 0.0
      %v2528 = vadd.f32 %v2526, %v2527
      %v2529 = vsel %vm1874, %v2494, 0.0
      %v2530 = vadd.f32 %v2528, %v2529
      %v2531 = vsel %vm1874, %v2495, 0.0
      %v2532 = vadd.f32 %v2530, %v2531
      %v2533 = vsel %vm1874, %v2496, 0.0
      %v2534 = vadd.f32 %v2532, %v2533
      %v2535 = vsel %vm1874, %v2497, 0.0
      %v2536 = vadd.f32 %v2534, %v2535
      %v2537 = vsel %vm1874, %v2498, 0.0
      %v2538 = vadd.f32 %v2536, %v2537
      %v2539 = vsel %vm1874, %v2499, 0.0
      %v2540 = vadd.f32 %v2538, %v2539
      %v2541 = vsel %vm1874, %v2500, 0.0
      %v2542 = vadd.f32 %v2540, %v2541
      %v2543 = vsel %vm1874, %v2501, 0.0
      %v2544 = vadd.f32 %v2542, %v2543
      %v2545 = vsel %vm1874, %v2502, 0.0
      %v2546 = vadd.f32 %v2544, %v2545
      %v2547 = vsel %vm1874, %v2503, 0.0
      %v2548 = vadd.f32 %v2546, %v2547
      %v2549 = vsel %vm1874, %v2504, 0.0
      %v2550 = vadd.f32 %v2548, %v2549
      %v2551 = vsel %vm1874, %v2505, 0.0
      %v2552 = vadd.f32 %v2550, %v2551
      %v2553 = vsel %vm1874, %v2506, 0.0
      %v2554 = vadd.f32 %v2552, %v2553
      %v2555 = vsel %vm1874, %v2507, 0.0
      %v2556 = vadd.f32 %v2554, %v2555
      %v2557 = vsel %vm1874, %v2508, 0.0
      %v2558 = vadd.f32 %v2556, %v2557
      %v2559 = vsel %vm1874, %v2509, 0.0
      %v2560 = vadd.f32 %v2558, %v2559
      %v2561 = vsel %vm1874, %v2510, 0.0
      %v2562 = vadd.f32 %v2560, %v2561
      %v2563 = vsel %vm1874, %v2511, 0.0
      %v2564 = vadd.f32 %v2562, %v2563
      %v2565 = vsel %vm1874, %v2512, 0.0
      %v2566 = vadd.f32 %v2564, %v2565
      %v2567 = vsel %vm1874, %v2513, 0.0
      %v2568 = vadd.f32 %v2566, %v2567
      %v2569 = vsel %vm1874, %v2514, 0.0
      %v2570 = vadd.f32 %v2568, %v2569
      %v2571 = vsel %vm1874, %v2515, 0.0
      %v2572 = vadd.f32 %v2570, %v2571
      %v2573 = vsel %vm1874, %v2516, 0.0
      %v2574 = vadd.f32 %v2572, %v2573
      %v2575 = vsel %vm1874, %v2517, 0.0
      %v2576 = vadd.f32 %v2574, %v2575
      %v2577 = vsel %vm1874, %v2518, 0.0
      %v2578 = vadd.f32 %v2576, %v2577
      %v2579 = vsel %vm1874, %v2519, 0.0
      %v2580 = vadd.f32 %v2578, %v2579
      %v2581 = vsel %vm1874, %v2520, 0.0
      %v2582 = vadd.f32 %v2580, %v2581
      %v2583 = vsel %vm1874, %v2521, 0.0
      %v2584 = vadd.f32 %v2582, %v2583
      %v2585 = vrot.slane %v2584, 4
      %v2586 = vadd.f32 %v2584, %v2585
      %v2587 = vrot.slane %v2586, 2
      %v2588 = vadd.f32 %v2586, %v2587
      %v2589 = vrot.slane %v2588, 1
      %v2590 = vadd.f32 %v2588, %v2589
      %v2591 = vsel %vm745, %v2489, %v2590
      %v2592 = vadd.f32 %v2420, %v2591
      %vm2593 = vcmask 25600
      %2594 = vst.msk [vmem:[%s8] sm:$0x3] %vm2593, %v2592
      %s2595 = smul.u32 32, %s20
      %p2596 = scmp.lt.s32.totalorder %s2595, 63
      %s2597 = scalar_select %p2596, %s2595, 63
      %s2598 = smul.addr %s2597, 8
      %s2599 = scalar_lea.vmem %s7, %s2598
      // Predicated region
      $region53: #{bottleneck_forward.4} parent=47 // pred_check
        %p2600 = pneg %p216
      $region54: #{bottleneck_forward.4} parent=47 // pred_check_branch
        %2602 = sbr.rel (%p2600) target = $region56
      $region55: #{bottleneck_forward.4} parent=47 // pred_region
        %s2603 = smul.u32 32, %s20
      $region56: #{bottleneck_forward.4} parent=47 // pred_fallthru
        _
      // Predicated region
      $region57: #{bottleneck_forward.4} parent=47 // pred_check
        %p2604 = pneg %p237
      $region58: #{bottleneck_forward.4} parent=47 // pred_check_branch
        %2606 = sbr.rel (%p2604) target = $region60
      $region59: #{bottleneck_forward.4} parent=47 // pred_region
        _
      $region60: #{bottleneck_forward.4} parent=47 // pred_fallthru
        _
      // Predicated region
      $region61: #{bottleneck_forward.4} parent=47 // pred_check
        %p2607 = pneg %p237
      $region62: #{bottleneck_forward.4} parent=47 // pred_check_branch
        %2609 = sbr.rel (%p2607) target = $region64
      $region63: #{bottleneck_forward.4} parent=47 // pred_region
        _
      $region64: #{bottleneck_forward.4} parent=47 // pred_fallthru
        _
    $region48: #{bottleneck_forward.4} parent=5 // pred_fallthru
      _
    %p2610 = scmp.le.s32.totalorder 2, %s15
    // Predicated region
    $region65: #{bottleneck_forward.4} parent=5 // pred_check
      %p2611 = pneg %p2610
    $region66: #{bottleneck_forward.4} parent=5 // pred_check_branch
      %2613 = sbr.rel (%p2611) target = $region68
    $region67: #{bottleneck_forward.4} parent=5 // pred_region
      %s2614 = ssub.s32 %s15, 2
      // Predicated region
      $region69: #{bottleneck_forward.4} parent=67 // pred_check
        %p2615 = pneg %p222
      $region70: #{bottleneck_forward.4} parent=67 // pred_check_branch
        %2617 = sbr.rel (%p2615) target = $region72
      $region71: #{bottleneck_forward.4} parent=67 // pred_region
        %s2618 = smul.u32 32, %s21
        %p2619 = scmp.lt.s32.totalorder %s2618, 63
        %s2620 = scalar_select %p2619, %s2618, 63
        %s2621 = smul.addr %s2620, 8
        %s2622 = scalar_lea.vmem %s7, %s2621
      $region72: #{bottleneck_forward.4} parent=67 // pred_fallthru
        _
    $region68: #{bottleneck_forward.4} parent=5 // pred_fallthru
      _
  $region6: #{bottleneck_forward.4} parent=0 // loop_footer
    %s19 = sadd.s32 1, %s15
  $region7: #{bottleneck_forward.4} parent=0 // loop_footer_branch
    %14 = sbr.rel target = $region3
  $region8: #{bottleneck_forward.4} parent=0 // loop_exit
    _

</llo_original>
